<compile_context>
chip_gen: v5e
topology: v5e:2x2
jax: 0.10.0
libtpu: 0.0.40
codegen_flags: <defaults>
</compile_context>

<pallas_src>
import functools
import math

import numpy as np
import jax
import jax.numpy as jnp
from jax import lax
from jax.experimental import pallas as pl
from jax.experimental.pallas import tpu as pltpu


# Safe everywhere: raises v5e's 16 MiB default scoped VMEM; well under v7x's 64 MiB physical.
_VMEM_LIMIT = 32 * 1024 * 1024


# ----------------------------------------------------------------------------
# Tiling helper
# ----------------------------------------------------------------------------

def _pick_tile(dim, target, align):
    """Largest `align`-multiple tile <= target that divides dim; else the full dim."""
    if dim <= target:
        return dim
    t = target
    while t >= align:
        if dim % t == 0:
            return t
        t -= align
    return dim


# ----------------------------------------------------------------------------
# Tiled matmul kernels with fused epilogues (bf16 MXU operands, f32 accumulation)
# ----------------------------------------------------------------------------

def _mm_bias_kernel(x_ref, w_ref, b_ref, o_ref, acc_ref):
    @pl.when(pl.program_id(2) == 0)
    def _():
        acc_ref[...] = jnp.zeros_like(acc_ref)

    acc_ref[...] += jnp.dot(x_ref[...].astype(jnp.bfloat16),
                            w_ref[...].astype(jnp.bfloat16),
                            preferred_element_type=jnp.float32)

    @pl.when(pl.program_id(2) == pl.num_programs(2) - 1)
    def _():
        y = acc_ref[...] + b_ref[...].astype(jnp.float32)
        o_ref[...] = y.astype(o_ref.dtype)


def matmul_bias(x, w, b, *, tm=512, tn=512, tk=512):
    M, K = x.shape
    N = w.shape[1]
    tm = _pick_tile(M, tm, 8)
    tn = _pick_tile(N, tn, 128)
    tk = _pick_tile(K, tk, 128)
    grid = (M // tm, N // tn, K // tk)
    return pl.pallas_call(
        _mm_bias_kernel,
        out_shape=jax.ShapeDtypeStruct((M, N), x.dtype),
        grid=grid,
        in_specs=[
            pl.BlockSpec((tm, tk), lambda i, j, k: (i, k)),
            pl.BlockSpec((tk, tn), lambda i, j, k: (k, j)),
            pl.BlockSpec((1, tn), lambda i, j, k: (0, j)),
        ],
        out_specs=pl.BlockSpec((tm, tn), lambda i, j, k: (i, j)),
        scratch_shapes=[pltpu.VMEM((tm, tn), jnp.float32)],
        compiler_params=pltpu.CompilerParams(
            dimension_semantics=("parallel", "parallel", "arbitrary"),
            vmem_limit_bytes=_VMEM_LIMIT),
    )(x, w, b)


def _mm_bias_gate_kernel(x_ref, w_ref, b_ref, scale_ref, o_ref, acc_ref):
    @pl.when(pl.program_id(2) == 0)
    def _():
        acc_ref[...] = jnp.zeros_like(acc_ref)

    acc_ref[...] += jnp.dot(x_ref[...].astype(jnp.bfloat16),
                            w_ref[...].astype(jnp.bfloat16),
                            preferred_element_type=jnp.float32)

    @pl.when(pl.program_id(2) == pl.num_programs(2) - 1)
    def _():
        y = acc_ref[...] + b_ref[...].astype(jnp.float32)
        s = scale_ref[0, 0]
        # GeGeLU (as defined in the module): y * sigmoid(scale * y)
        o_ref[...] = (y * jax.nn.sigmoid(s * y)).astype(o_ref.dtype)


def matmul_bias_gate(x, w, b, scale, *, tm=512, tn=512, tk=512):
    M, K = x.shape
    N = w.shape[1]
    tm = _pick_tile(M, tm, 8)
    tn = _pick_tile(N, tn, 128)
    tk = _pick_tile(K, tk, 128)
    grid = (M // tm, N // tn, K // tk)
    return pl.pallas_call(
        _mm_bias_gate_kernel,
        out_shape=jax.ShapeDtypeStruct((M, N), x.dtype),
        grid=grid,
        in_specs=[
            pl.BlockSpec((tm, tk), lambda i, j, k: (i, k)),
            pl.BlockSpec((tk, tn), lambda i, j, k: (k, j)),
            pl.BlockSpec((1, tn), lambda i, j, k: (0, j)),
            pl.BlockSpec((1, 1), lambda i, j, k: (0, 0),
                         memory_space=pltpu.MemorySpace.SMEM),
        ],
        out_specs=pl.BlockSpec((tm, tn), lambda i, j, k: (i, j)),
        scratch_shapes=[pltpu.VMEM((tm, tn), jnp.float32)],
        compiler_params=pltpu.CompilerParams(
            dimension_semantics=("parallel", "parallel", "arbitrary"),
            vmem_limit_bytes=_VMEM_LIMIT),
    )(x, w, b, scale)


def _mm_bias_add_ln_kernel(x_ref, w_ref, b_ref, res_ref, g_ref, bln_ref,
                           o_ref, acc_ref, *, eps):
    @pl.when(pl.program_id(1) == 0)
    def _():
        acc_ref[...] = jnp.zeros_like(acc_ref)

    acc_ref[...] += jnp.dot(x_ref[...].astype(jnp.bfloat16),
                            w_ref[...].astype(jnp.bfloat16),
                            preferred_element_type=jnp.float32)

    @pl.when(pl.program_id(1) == pl.num_programs(1) - 1)
    def _():
        z = (acc_ref[...] + b_ref[...].astype(jnp.float32)
             + res_ref[...].astype(jnp.float32))
        mean = jnp.mean(z, axis=-1, keepdims=True)
        var = jnp.mean(jnp.square(z - mean), axis=-1, keepdims=True)
        zn = (z - mean) * lax.rsqrt(var + eps)
        o_ref[...] = (zn * g_ref[...].astype(jnp.float32)
                      + bln_ref[...].astype(jnp.float32)).astype(o_ref.dtype)


def matmul_bias_add_ln(x, w, b, res, gamma, beta, *, eps, tm=256, tk=512):
    # LayerNorm needs the full output row -> keep the N axis as one (lane-dense) block.
    M, K = x.shape
    N = w.shape[1]
    tm = _pick_tile(M, tm, 8)
    tk = _pick_tile(K, tk, 128)
    grid = (M // tm, K // tk)
    kernel = functools.partial(_mm_bias_add_ln_kernel, eps=eps)
    return pl.pallas_call(
        kernel,
        out_shape=jax.ShapeDtypeStruct((M, N), x.dtype),
        grid=grid,
        in_specs=[
            pl.BlockSpec((tm, tk), lambda i, k: (i, k)),
            pl.BlockSpec((tk, N), lambda i, k: (k, 0)),
            pl.BlockSpec((1, N), lambda i, k: (0, 0)),
            pl.BlockSpec((tm, N), lambda i, k: (i, 0)),
            pl.BlockSpec((1, N), lambda i, k: (0, 0)),
            pl.BlockSpec((1, N), lambda i, k: (0, 0)),
        ],
        out_specs=pl.BlockSpec((tm, N), lambda i, k: (i, 0)),
        scratch_shapes=[pltpu.VMEM((tm, N), jnp.float32)],
        compiler_params=pltpu.CompilerParams(
            dimension_semantics=("parallel", "arbitrary"),
            vmem_limit_bytes=_VMEM_LIMIT),
    )(x, w, b, res, gamma, beta)


# ----------------------------------------------------------------------------
# Flash attention kernel (online softmax, RoPE in-kernel, GQA batched per group)
# ----------------------------------------------------------------------------

def _flash_attn_kernel(q_ref, k_ref, v_ref, cq_ref, sq_ref, ck_ref, sk_ref,
                       o_ref, qrot_sc, m_sc, l_sc, acc_sc, *, nh, kvh, d):
    rep = nh // kvh
    tq = q_ref.shape[1]
    half = d // 2
    j = pl.program_id(2)

    def rotate(x):
        # rotate_half without the negate: the sign flip is baked into the sin table.
        return jnp.concatenate([x[:, half:], x[:, :half]], axis=-1)

    @pl.when(j == 0)
    def _():
        m_sc[...] = jnp.full_like(m_sc, -jnp.inf)
        l_sc[...] = jnp.zeros_like(l_sc)
        acc_sc[...] = jnp.zeros_like(acc_sc)
        # kv-invariant work hoisted out of the kv loop: RoPE + 1/sqrt(d) folded into Q once
        # per q tile; the `rep` query heads of each kv group are stacked along rows and
        # stored in bf16 so the per-group QK^T is one large MXU call.
        cq = cq_ref[...]
        sq = sq_ref[...]
        q_blk = q_ref[0]                               # (tq, nh*d)
        sm_scale = 1.0 / math.sqrt(d)
        for g in range(kvh):
            for r in range(rep):
                h = g * rep + r
                q_h = q_blk[:, h * d:(h + 1) * d].astype(jnp.float32)
                q_h = (q_h * cq + rotate(q_h) * sq) * sm_scale
                qrot_sc[g, r * tq:(r + 1) * tq, :] = q_h.astype(qrot_sc.dtype)

    ck = ck_ref[...]
    sk = sk_ref[...]
    k_blk = k_ref[0]                                   # (tkv, kvh*d)
    v_blk = v_ref[0]                                   # (tkv, kvh*d)

    for g in range(kvh):
        # RoPE each K head once per kv tile; shared by its `rep` query heads (GQA).
        k_g = k_blk[:, g * d:(g + 1) * d].astype(jnp.float32)
        k_g = (k_g * ck + rotate(k_g) * sk).astype(jnp.bfloat16)
        v_g = v_blk[:, g * d:(g + 1) * d].astype(jnp.bfloat16)
        q_g = qrot_sc[g]                               # (rep*tq, d) bf16

        # QK^T via dot_general with a transposed-RHS contraction (no materialized k.T).
        s = lax.dot_general(q_g, k_g, (((1,), (1,)), ((), ())),
                            preferred_element_type=jnp.float32)   # (rep*tq, tkv)
        m_prev = m_sc[g]                               # (rep*tq, 1)
        m_new = jnp.maximum(m_prev, jnp.max(s, axis=-1, keepdims=True))
        alpha = jnp.exp(m_prev - m_new)
        p = jnp.exp(s - m_new)                         # f32 softmax (v5e has no bf16 VPU/EUP)
        l_sc[g] = alpha * l_sc[g] + jnp.sum(p, axis=-1, keepdims=True)
        acc_sc[g] = alpha * acc_sc[g] + jnp.dot(
            p.astype(jnp.bfloat16), v_g, preferred_element_type=jnp.float32)
        m_sc[g] = m_new

    @pl.when(j == pl.num_programs(2) - 1)
    def _():
        outs = []
        for g in range(kvh):
            o_g = acc_sc[g] * pl.reciprocal(l_sc[g], approx=False)
            for r in range(rep):
                outs.append(o_g[r * tq:(r + 1) * tq, :])
        # single lane-dense (tq, nh*d) store
        o_ref[0] = jnp.concatenate(outs, axis=-1).astype(o_ref.dtype)


def flash_attention(qkv, cos, sin, *, batch, seq, nh, kvh, d, tq=256, tkv=512):
    """qkv: (B, S, (nh + 2*kvh)*d) fused-QKV slab; returns (B, S, nh*d)."""
    assert nh % kvh == 0, "fused-QKV column-window trick requires nh % kvh == 0"
    rep = nh // kvh
    tq = _pick_tile(seq, tq, 128)
    tkv = _pick_tile(seq, tkv, 128)    # 128-aligned kv tiles -> lane-dense score/P tiles
    nq = seq // tq
    nk = seq // tkv
    qw = nh * d
    kw = kvh * d
    kernel = functools.partial(_flash_attn_kernel, nh=nh, kvh=kvh, d=d)
    return pl.pallas_call(
        kernel,
        out_shape=jax.ShapeDtypeStruct((batch, seq, qw), qkv.dtype),
        grid=(batch, nq, nk),
        in_specs=[
            # Q / K / V are column windows of the same fused-QKV slab (no HBM split copies).
            pl.BlockSpec((1, tq, qw), lambda b, i, j: (b, i, 0)),
            pl.BlockSpec((1, tkv, kw), lambda b, i, j: (b, j, rep)),
            pl.BlockSpec((1, tkv, kw), lambda b, i, j: (b, j, rep + 1)),
            pl.BlockSpec((tq, d), lambda b, i, j: (i, 0)),       # cos for q positions
            pl.BlockSpec((tq, d), lambda b, i, j: (i, 0)),       # signed sin for q positions
            pl.BlockSpec((tkv, d), lambda b, i, j: (j, 0)),      # cos for k positions
            pl.BlockSpec((tkv, d), lambda b, i, j: (j, 0)),      # signed sin for k positions
        ],
        out_specs=pl.BlockSpec((1, tq, qw), lambda b, i, j: (b, i, 0)),
        scratch_shapes=[
            pltpu.VMEM((kvh, rep * tq, d), jnp.bfloat16),  # rotated+scaled Q (per kv group)
            pltpu.VMEM((kvh, rep * tq, 1), jnp.float32),   # running max
            pltpu.VMEM((kvh, rep * tq, 1), jnp.float32),   # running denom
            pltpu.VMEM((kvh, rep * tq, d), jnp.float32),   # output accumulator
        ],
        compiler_params=pltpu.CompilerParams(
            dimension_semantics=("parallel", "parallel", "arbitrary"),
            vmem_limit_bytes=_VMEM_LIMIT),
    )(qkv, qkv, qkv, cos, sin, cos, sin)


# ----------------------------------------------------------------------------
# RoPE tables (half-split rotary, theta = 10000, sign of rotate_half baked into sin)
# ----------------------------------------------------------------------------

def rope_tables(seq_len, dim, theta=10000.0):
    half = dim // 2
    inv = 1.0 / (theta ** (np.arange(half, dtype=np.float64) / half))
    t = np.arange(seq_len, dtype=np.float64)
    ang = np.outer(t, inv)                                   # (S, D/2)
    cos = np.concatenate([np.cos(ang), np.cos(ang)], axis=-1)
    sin = np.sin(ang)
    sin_signed = np.concatenate([-sin, sin], axis=-1)        # sign baked in: no negate in-kernel
    return (jnp.asarray(cos.astype(np.float32)),
            jnp.asarray(sin_signed.astype(np.float32)))


# ----------------------------------------------------------------------------
# Full layer wrapper (all hot paths run in the Pallas kernels above)
# ----------------------------------------------------------------------------

def flash_roberta_layer(params, hidden_states, cos, sin, *, num_heads, num_kv_heads, eps):
    B, S, H = hidden_states.shape
    D = H // num_heads
    x2 = hidden_states.reshape(B * S, H)

    # Fused QKV projection (weights pre-fused & pre-cast to bf16 outside the forward).
    qkv = matmul_bias(x2, params["wqkv"], params["bqkv"])        # (B*S, (NH+2*KVH)*D)
    qkv3 = qkv.reshape(B, S, qkv.shape[-1])                      # free reshape, no transpose

    attn = flash_attention(qkv3, cos, sin, batch=B, seq=S,
                           nh=num_heads, kvh=num_kv_heads, d=D)  # (B, S, H)
    attn2 = attn.reshape(B * S, H)                               # free reshape

    # o_proj + residual + LayerNorm fused (attention/hidden dropouts: inference no-ops).
    attn_out = matmul_bias_add_ln(attn2, params["wo"], params["bo"],
                                  x2, params["ln1_g"], params["ln1_b"], eps=eps)

    # FFN up-proj + GeGeLU gate fused.
    inter = matmul_bias_gate(attn_out, params["wi"], params["bi"],
                             params["gate_scale"])

    # FFN down-proj + residual + LayerNorm fused.
    out = matmul_bias_add_ln(inter, params["wf"], params["bf"],
                             attn_out, params["ln2_g"], params["ln2_b"], eps=eps)
    return out.reshape(B, S, H)


# ----------------------------------------------------------------------------
# Pure-JAX f32 reference (for correctness check)
# ----------------------------------------------------------------------------

def _rope_ref(x, cos, sin_signed):  # x: (..., S, D)
    h = x.shape[-1] // 2
    xr = jnp.concatenate([x[..., h:], x[..., :h]], axis=-1)
    return x * cos + xr * sin_signed


def _ln_ref(z, g, b, eps):
    m = jnp.mean(z, axis=-1, keepdims=True)
    v = jnp.mean((z - m) ** 2, axis=-1, keepdims=True)
    return (z - m) * lax.rsqrt(v + eps) * g + b


def reference(params, x, cos, sin, *, num_heads, num_kv_heads, eps):
    B, S, H = x.shape
    D = H // num_heads
    lin = lambda t, w, b: t @ w + b
    x2 = x.reshape(B * S, H)
    q = lin(x2, params["wq"], params["bq"]).reshape(B, S, num_heads, D).transpose(0, 2, 1, 3)
    k = lin(x2, params["wk"], params["bk"]).reshape(B, S, num_kv_heads, D).transpose(0, 2, 1, 3)
    v = lin(x2, params["wv"], params["bv"]).reshape(B, S, num_kv_heads, D).transpose(0, 2, 1, 3)
    q = _rope_ref(q, cos, sin)
    k = _rope_ref(k, cos, sin)
    rep = num_heads // num_kv_heads
    k = jnp.repeat(k, rep, axis=1)
    v = jnp.repeat(v, rep, axis=1)
    s = jnp.einsum("bhqd,bhkd->bhqk", q, k) / math.sqrt(D)
    p = jax.nn.softmax(s, axis=-1)
    o = jnp.einsum("bhqk,bhkd->bhqd", p, v).transpose(0, 2, 1, 3).reshape(B * S, H)
    a = lin(o, params["wo"], params["bo"])
    a = _ln_ref(a + x2, params["ln1_g"], params["ln1_b"], eps)
    i1 = lin(a, params["wi"], params["bi"])
    i1 = i1 * jax.nn.sigmoid(params["gate_scale"][0, 0] * i1)
    f = lin(i1, params["wf"], params["bf"])
    out = _ln_ref(f + a, params["ln2_g"], params["ln2_b"], eps)
    return out.reshape(B, S, H)


# ----------------------------------------------------------------------------
# Main
# ----------------------------------------------------------------------------

if __name__ == "__main__":
    # Small, TPU-tile-friendly shapes (minor block dims are 128-multiples / full dims).
    B, S = 2, 16
    NUM_HEADS, NUM_KV_HEADS = 4, 2
    D = 64
    H = NUM_HEADS * D          # 256
    INTER = 512
    EPS = 1e-5

    key = jax.random.PRNGKey(0)
    ks = jax.random.split(key, 16)

    def w(k, shape, scale=0.02):
        return scale * jax.random.normal(k, shape, jnp.float32)

    params = {
        "wq": w(ks[0], (H, NUM_HEADS * D)),        "bq": w(ks[1], (1, NUM_HEADS * D)),
        "wk": w(ks[2], (H, NUM_KV_HEADS * D)),     "bk": w(ks[3], (1, NUM_KV_HEADS * D)),
        "wv": w(ks[4], (H, NUM_KV_HEADS * D)),     "bv": w(ks[5], (1, NUM_KV_HEADS * D)),
        "wo": w(ks[6], (NUM_HEADS * D, H)),        "bo": w(ks[7], (1, H)),
        "ln1_g": 1.0 + w(ks[8], (1, H), 0.1),      "ln1_b": w(ks[9], (1, H), 0.1),
        "wi": w(ks[10], (H, INTER)),               "bi": w(ks[11], (1, INTER)),
        "gate_scale": jnp.ones((1, 1), jnp.float32),
        "wf": w(ks[12], (INTER, H)),               "bf": w(ks[13], (1, H)),
        "ln2_g": 1.0 + w(ks[14], (1, H), 0.1),     "ln2_b": w(ks[15], (1, H), 0.1),
    }

    # Kernel-side parameters: QKV weights/biases fused ONCE and weight slabs stored in bf16
    # in HBM (halves weight DMA; MXU is bf16-native).  Biases / LN params stay f32.
    kparams = {
        "wqkv": jnp.concatenate([params["wq"], params["wk"], params["wv"]],
                                axis=1).astype(jnp.bfloat16),
        "bqkv": jnp.concatenate([params["bq"], params["bk"], params["bv"]], axis=1),
        "wo": params["wo"].astype(jnp.bfloat16),   "bo": params["bo"],
        "ln1_g": params["ln1_g"],                  "ln1_b": params["ln1_b"],
        "wi": params["wi"].astype(jnp.bfloat16),   "bi": params["bi"],
        "gate_scale": params["gate_scale"],
        "wf": params["wf"].astype(jnp.bfloat16),   "bf": params["bf"],
        "ln2_g": params["ln2_g"],                  "ln2_b": params["ln2_b"],
    }

    # Rope tables built once (outside the per-step forward).
    cos, sin = rope_tables(S, D)

    x = jax.random.normal(jax.random.PRNGKey(42), (B, S, H), jnp.float32)

    layer_fn = jax.jit(functools.partial(
        flash_roberta_layer, num_heads=NUM_HEADS, num_kv_heads=NUM_KV_HEADS, eps=EPS))

    out = jax.block_until_ready(layer_fn(kparams, x, cos, sin))
    ref = reference(params, x, cos, sin,
                    num_heads=NUM_HEADS, num_kv_heads=NUM_KV_HEADS, eps=EPS)

    assert out.shape == (B, S, H), out.shape
    # Tolerance absorbs the deliberate bf16 MXU-operand / bf16-weight quantization
    # (the reference runs the same math in full f32).
    err = float(np.max(np.abs(np.asarray(out) - np.asarray(ref))))
    assert np.allclose(np.asarray(out), np.asarray(ref), atol=3e-2, rtol=3e-2), err
    print("KERNEL_OK")
</pallas_src>

<mosaic_0001>
module attributes {stable_mosaic.version = 11 : i64} {
  func.func @_mm_bias_gate_kernel(%arg0: i32, %arg1: i32, %arg2: i32, %arg3: memref<32x256xf32, #tpu.memory_space<vmem>>, %arg4: memref<256x512xbf16, #tpu.memory_space<vmem>>, %arg5: memref<1x512xf32, #tpu.memory_space<vmem>>, %arg6: memref<1x1xf32, #tpu.memory_space<smem>>, %arg7: memref<32x512xf32, #tpu.memory_space<vmem>>, %arg8: memref<32x512xf32, #tpu.memory_space<vmem>>) attributes {dimension_semantics = [#tpu.dimension_semantics<parallel>, #tpu.dimension_semantics<parallel>, #tpu.dimension_semantics<arbitrary>], iteration_bounds = array<i64: 1, 1, 1>, scalar_prefetch = 0 : i64, scratch_operands = 1 : i64, tpu.core_type = #tpu.core_type<tc>, window_params = [{transform_indices = @transform_0, window_bounds = array<i64: 32, 256>}, {transform_indices = @transform_1, window_bounds = array<i64: 256, 512>}, {transform_indices = @transform_2, window_bounds = array<i64: 1, 512>}, {transform_indices = @transform_3, window_bounds = array<i64: 1, 1>}, {transform_indices = @transform_4, window_bounds = array<i64: 32, 512>}]} {
    %c0_i32 = arith.constant 0 : i32
    %0 = arith.cmpi eq, %arg2, %c0_i32 : i32
    %1 = arith.extui %0 : i1 to i32
    %c0_i32_0 = arith.constant 0 : i32
    %2 = arith.cmpi ne, %1, %c0_i32_0 : i32
    scf.if %2 {
      %cst_10 = arith.constant 0.000000e+00 : f32
      %13 = vector.broadcast %cst_10 : f32 to vector<32x512xf32>
      %c0_11 = arith.constant 0 : index
      %c0_12 = arith.constant 0 : index
      %14 = vector.load %arg8[%c0_11, %c0_12] : memref<32x512xf32, #tpu.memory_space<vmem>>, vector<32x512xf32>
      tpu.vector_store %arg8[%c0_11, %c0_12], %13 {strides = array<i32>} : memref<32x512xf32, #tpu.memory_space<vmem>>, vector<32x512xf32>,
    } else {
    }
    %c0 = arith.constant 0 : index
    %c0_1 = arith.constant 0 : index
    %3 = vector.load %arg8[%c0, %c0_1] : memref<32x512xf32, #tpu.memory_space<vmem>>, vector<32x512xf32>
    %c0_2 = arith.constant 0 : index
    %c0_3 = arith.constant 0 : index
    %4 = vector.load %arg3[%c0_2, %c0_3] : memref<32x256xf32, #tpu.memory_space<vmem>>, vector<32x256xf32>
    %5 = arith.truncf %4 : vector<32x256xf32> to vector<32x256xbf16>
    %c0_4 = arith.constant 0 : index
    %c0_5 = arith.constant 0 : index
    %6 = vector.load %arg4[%c0_4, %c0_5] : memref<256x512xbf16, #tpu.memory_space<vmem>>, vector<256x512xbf16>
    %cst = arith.constant dense<0.000000e+00> : vector<32x512xf32>
    %7 = tpu.matmul %5, %6, %cst {dimension_numbers = #tpu.dot_dimension_numbers<[1], [0], [0], [1], [0, 0, 1, 1], [], []>} : vector<32x256xbf16>, vector<256x512xbf16>, vector<32x512xf32> -> vector<32x512xf32>
    %8 = arith.addf %3, %7 : vector<32x512xf32>
    %c0_6 = arith.constant 0 : index
    %c0_7 = arith.constant 0 : index
    %9 = vector.load %arg8[%c0_6, %c0_7] : memref<32x512xf32, #tpu.memory_space<vmem>>, vector<32x512xf32>
    tpu.vector_store %arg8[%c0_6, %c0_7], %8 {strides = array<i32>} : memref<32x512xf32, #tpu.memory_space<vmem>>, vector<32x512xf32>,
    %c0_i32_8 = arith.constant 0 : i32
    %10 = arith.cmpi eq, %arg2, %c0_i32_8 : i32
    %11 = arith.extui %10 : i1 to i32
    %c0_i32_9 = arith.constant 0 : i32
    %12 = arith.cmpi ne, %11, %c0_i32_9 : i32
    scf.if %12 {
      %c0_10 = arith.constant 0 : index
      %c0_11 = arith.constant 0 : index
      %13 = vector.load %arg8[%c0_10, %c0_11] : memref<32x512xf32, #tpu.memory_space<vmem>>, vector<32x512xf32>
      %c0_12 = arith.constant 0 : index
      %c0_13 = arith.constant 0 : index
      %14 = vector.load %arg5[%c0_12, %c0_13] : memref<1x512xf32, #tpu.memory_space<vmem>>, vector<1x512xf32>
      %15 = vector.broadcast %14 : vector<1x512xf32> to vector<32x512xf32>
      %16 = arith.addf %13, %15 : vector<32x512xf32>
      %c0_14 = arith.constant 0 : index
      %c0_15 = arith.constant 0 : index
      %17 = memref.load %arg6[%c0_14, %c0_15] : memref<1x1xf32, #tpu.memory_space<smem>>
      %18 = vector.broadcast %17 : f32 to vector<32x512xf32>
      %19 = arith.mulf %18, %16 : vector<32x512xf32>
      %20 = arith.negf %19 : vector<32x512xf32>
      %21 = math.exp %20 : vector<32x512xf32>
      %cst_16 = arith.constant 1.000000e+00 : f32
      %22 = vector.broadcast %cst_16 : f32 to vector<32x512xf32>
      %23 = arith.addf %22, %21 : vector<32x512xf32>
      %24 = arith.divf %22, %23 : vector<32x512xf32>
      %25 = arith.mulf %16, %24 : vector<32x512xf32>
      %c0_17 = arith.constant 0 : index
      %c0_18 = arith.constant 0 : index
      %26 = vector.load %arg7[%c0_17, %c0_18] : memref<32x512xf32, #tpu.memory_space<vmem>>, vector<32x512xf32>
      tpu.vector_store %arg7[%c0_17, %c0_18], %25 {strides = array<i32>} : memref<32x512xf32, #tpu.memory_space<vmem>>, vector<32x512xf32>,
    } else {
    }
    return
  }
  func.func @transform_0(%arg0: i32, %arg1: i32, %arg2: i32) -> (i32, i32) {
    %c0_i32 = arith.constant 0 : i32
    return %arg0, %arg2 : i32, i32
  }
  func.func @transform_1(%arg0: i32, %arg1: i32, %arg2: i32) -> (i32, i32) {
    %c0_i32 = arith.constant 0 : i32
    return %arg2, %arg1 : i32, i32
  }
  func.func @transform_2(%arg0: i32, %arg1: i32, %arg2: i32) -> (i32, i32) {
    %c0_i32 = arith.constant 0 : i32
    %c0_i32_0 = arith.constant 0 : i32
    return %c0_i32, %arg1 : i32, i32
  }
  func.func @transform_3(%arg0: i32, %arg1: i32, %arg2: i32) -> (i32, i32) {
    %c0_i32 = arith.constant 0 : i32
    %c0_i32_0 = arith.constant 0 : i32
    %c0_i32_1 = arith.constant 0 : i32
    return %c0_i32, %c0_i32_0 : i32, i32
  }
  func.func @transform_4(%arg0: i32, %arg1: i32, %arg2: i32) -> (i32, i32) {
    %c0_i32 = arith.constant 0 : i32
    return %arg0, %arg1 : i32, i32
  }
}

module attributes {stable_mosaic.version = 11 : i64} {
  func.func @_mm_bias_add_ln_kernel(%arg0: i32, %arg1: i32, %arg2: memref<32x256xf32, #tpu.memory_space<vmem>>, %arg3: memref<256x256xbf16, #tpu.memory_space<vmem>>, %arg4: memref<1x256xf32, #tpu.memory_space<vmem>>, %arg5: memref<32x256xf32, #tpu.memory_space<vmem>>, %arg6: memref<1x256xf32, #tpu.memory_space<vmem>>, %arg7: memref<1x256xf32, #tpu.memory_space<vmem>>, %arg8: memref<32x256xf32, #tpu.memory_space<vmem>>, %arg9: memref<32x256xf32, #tpu.memory_space<vmem>>) attributes {dimension_semantics = [#tpu.dimension_semantics<parallel>, #tpu.dimension_semantics<arbitrary>], iteration_bounds = array<i64: 1, 1>, scalar_prefetch = 0 : i64, scratch_operands = 1 : i64, tpu.core_type = #tpu.core_type<tc>, window_params = [{transform_indices = @transform_0, window_bounds = array<i64: 32, 256>}, {transform_indices = @transform_1, window_bounds = array<i64: 256, 256>}, {pipeline_mode = #tpu.pipeline_mode<synchronous>, transform_indices = @transform_2, window_bounds = array<i64: 1, 256>}, {transform_indices = @transform_3, window_bounds = array<i64: 32, 256>}, {pipeline_mode = #tpu.pipeline_mode<synchronous>, transform_indices = @transform_4, window_bounds = array<i64: 1, 256>}, {pipeline_mode = #tpu.pipeline_mode<synchronous>, transform_indices = @transform_5, window_bounds = array<i64: 1, 256>}, {transform_indices = @transform_6, window_bounds = array<i64: 32, 256>}]} {
    %c0_i32 = arith.constant 0 : i32
    %0 = arith.cmpi eq, %arg1, %c0_i32 : i32
    %1 = arith.extui %0 : i1 to i32
    %c0_i32_0 = arith.constant 0 : i32
    %2 = arith.cmpi ne, %1, %c0_i32_0 : i32
    scf.if %2 {
      %cst_10 = arith.constant 0.000000e+00 : f32
      %13 = vector.broadcast %cst_10 : f32 to vector<32x256xf32>
      %c0_11 = arith.constant 0 : index
      %c0_12 = arith.constant 0 : index
      %14 = vector.load %arg9[%c0_11, %c0_12] : memref<32x256xf32, #tpu.memory_space<vmem>>, vector<32x256xf32>
      tpu.vector_store %arg9[%c0_11, %c0_12], %13 {strides = array<i32>} : memref<32x256xf32, #tpu.memory_space<vmem>>, vector<32x256xf32>,
    } else {
    }
    %c0 = arith.constant 0 : index
    %c0_1 = arith.constant 0 : index
    %3 = vector.load %arg9[%c0, %c0_1] : memref<32x256xf32, #tpu.memory_space<vmem>>, vector<32x256xf32>
    %c0_2 = arith.constant 0 : index
    %c0_3 = arith.constant 0 : index
    %4 = vector.load %arg2[%c0_2, %c0_3] : memref<32x256xf32, #tpu.memory_space<vmem>>, vector<32x256xf32>
    %5 = arith.truncf %4 : vector<32x256xf32> to vector<32x256xbf16>
    %c0_4 = arith.constant 0 : index
    %c0_5 = arith.constant 0 : index
    %6 = vector.load %arg3[%c0_4, %c0_5] : memref<256x256xbf16, #tpu.memory_space<vmem>>, vector<256x256xbf16>
    %cst = arith.constant dense<0.000000e+00> : vector<32x256xf32>
    %7 = tpu.matmul %5, %6, %cst {dimension_numbers = #tpu.dot_dimension_numbers<[1], [0], [0], [1], [0, 0, 1, 1], [], []>} : vector<32x256xbf16>, vector<256x256xbf16>, vector<32x256xf32> -> vector<32x256xf32>
    %8 = arith.addf %3, %7 : vector<32x256xf32>
    %c0_6 = arith.constant 0 : index
    %c0_7 = arith.constant 0 : index
    %9 = vector.load %arg9[%c0_6, %c0_7] : memref<32x256xf32, #tpu.memory_space<vmem>>, vector<32x256xf32>
    tpu.vector_store %arg9[%c0_6, %c0_7], %8 {strides = array<i32>} : memref<32x256xf32, #tpu.memory_space<vmem>>, vector<32x256xf32>,
    %c0_i32_8 = arith.constant 0 : i32
    %10 = arith.cmpi eq, %arg1, %c0_i32_8 : i32
    %11 = arith.extui %10 : i1 to i32
    %c0_i32_9 = arith.constant 0 : i32
    %12 = arith.cmpi ne, %11, %c0_i32_9 : i32
    scf.if %12 {
      %c0_10 = arith.constant 0 : index
      %c0_11 = arith.constant 0 : index
      %13 = vector.load %arg9[%c0_10, %c0_11] : memref<32x256xf32, #tpu.memory_space<vmem>>, vector<32x256xf32>
      %c0_12 = arith.constant 0 : index
      %c0_13 = arith.constant 0 : index
      %14 = vector.load %arg4[%c0_12, %c0_13] : memref<1x256xf32, #tpu.memory_space<vmem>>, vector<1x256xf32>
      %15 = vector.broadcast %14 : vector<1x256xf32> to vector<32x256xf32>
      %16 = arith.addf %13, %15 : vector<32x256xf32>
      %c0_14 = arith.constant 0 : index
      %c0_15 = arith.constant 0 : index
      %17 = vector.load %arg5[%c0_14, %c0_15] : memref<32x256xf32, #tpu.memory_space<vmem>>, vector<32x256xf32>
      %18 = arith.addf %16, %17 : vector<32x256xf32>
      %cst_16 = arith.constant dense<0.000000e+00> : vector<32xf32>
      %19 = vector.multi_reduction <add>, %18, %cst_16 [1] : vector<32x256xf32> to vector<32xf32>
      %20 = vector.shape_cast %19 : vector<32xf32> to vector<32x1xf32>
      %cst_17 = arith.constant 2.560000e+02 : f32
      %21 = vector.broadcast %cst_17 : f32 to vector<32x1xf32>
      %22 = arith.divf %20, %21 : vector<32x1xf32>
      %23 = vector.broadcast %22 : vector<32x1xf32> to vector<32x256xf32>
      %24 = arith.subf %18, %23 : vector<32x256xf32>
      %25 = arith.mulf %24, %24 : vector<32x256xf32>
      %cst_18 = arith.constant dense<0.000000e+00> : vector<32xf32>
      %26 = vector.multi_reduction <add>, %25, %cst_18 [1] : vector<32x256xf32> to vector<32xf32>
      %27 = vector.shape_cast %26 : vector<32xf32> to vector<32x1xf32>
      %cst_19 = arith.constant 2.560000e+02 : f32
      %28 = vector.broadcast %cst_19 : f32 to vector<32x1xf32>
      %29 = arith.divf %27, %28 : vector<32x1xf32>
      %30 = vector.broadcast %22 : vector<32x1xf32> to vector<32x256xf32>
      %31 = arith.subf %18, %30 : vector<32x256xf32>
      %cst_20 = arith.constant 9.99999974E-6 : f32
      %32 = vector.broadcast %cst_20 : f32 to vector<32x1xf32>
      %33 = arith.addf %29, %32 : vector<32x1xf32>
      %34 = math.rsqrt %33 : vector<32x1xf32>
      %35 = vector.broadcast %34 : vector<32x1xf32> to vector<32x256xf32>
      %36 = arith.mulf %31, %35 : vector<32x256xf32>
      %c0_21 = arith.constant 0 : index
      %c0_22 = arith.constant 0 : index
      %37 = vector.load %arg6[%c0_21, %c0_22] : memref<1x256xf32, #tpu.memory_space<vmem>>, vector<1x256xf32>
      %38 = vector.broadcast %37 : vector<1x256xf32> to vector<32x256xf32>
      %39 = arith.mulf %36, %38 : vector<32x256xf32>
      %c0_23 = arith.constant 0 : index
      %c0_24 = arith.constant 0 : index
      %40 = vector.load %arg7[%c0_23, %c0_24] : memref<1x256xf32, #tpu.memory_space<vmem>>, vector<1x256xf32>
      %41 = vector.broadcast %40 : vector<1x256xf32> to vector<32x256xf32>
      %42 = arith.addf %39, %41 : vector<32x256xf32>
      %c0_25 = arith.constant 0 : index
      %c0_26 = arith.constant 0 : index
      %43 = vector.load %arg8[%c0_25, %c0_26] : memref<32x256xf32, #tpu.memory_space<vmem>>, vector<32x256xf32>
      tpu.vector_store %arg8[%c0_25, %c0_26], %42 {strides = array<i32>} : memref<32x256xf32, #tpu.memory_space<vmem>>, vector<32x256xf32>,
    } else {
    }
    return
  }
  func.func @transform_0(%arg0: i32, %arg1: i32) -> (i32, i32) {
    %c0_i32 = arith.constant 0 : i32
    return %arg0, %arg1 : i32, i32
  }
  func.func @transform_1(%arg0: i32, %arg1: i32) -> (i32, i32) {
    %c0_i32 = arith.constant 0 : i32
    %c0_i32_0 = arith.constant 0 : i32
    return %arg1, %c0_i32 : i32, i32
  }
  func.func @transform_2(%arg0: i32, %arg1: i32) -> (i32, i32) {
    %c0_i32 = arith.constant 0 : i32
    %c0_i32_0 = arith.constant 0 : i32
    %c0_i32_1 = arith.constant 0 : i32
    return %c0_i32, %c0_i32_0 : i32, i32
  }
  func.func @transform_3(%arg0: i32, %arg1: i32) -> (i32, i32) {
    %c0_i32 = arith.constant 0 : i32
    %c0_i32_0 = arith.constant 0 : i32
    return %arg0, %c0_i32 : i32, i32
  }
  func.func @transform_4(%arg0: i32, %arg1: i32) -> (i32, i32) {
    %c0_i32 = arith.constant 0 : i32
    %c0_i32_0 = arith.constant 0 : i32
    %c0_i32_1 = arith.constant 0 : i32
    return %c0_i32, %c0_i32_0 : i32, i32
  }
  func.func @transform_5(%arg0: i32, %arg1: i32) -> (i32, i32) {
    %c0_i32 = arith.constant 0 : i32
    %c0_i32_0 = arith.constant 0 : i32
    %c0_i32_1 = arith.constant 0 : i32
    return %c0_i32, %c0_i32_0 : i32, i32
  }
  func.func @transform_6(%arg0: i32, %arg1: i32) -> (i32, i32) {
    %c0_i32 = arith.constant 0 : i32
    %c0_i32_0 = arith.constant 0 : i32
    return %arg0, %c0_i32 : i32, i32
  }
}

module attributes {stable_mosaic.version = 11 : i64} {
  func.func @_flash_attn_kernel(%arg0: i32, %arg1: i32, %arg2: i32, %arg3: memref<1x16x256xf32, #tpu.memory_space<vmem>>, %arg4: memref<1x16x128xf32, #tpu.memory_space<vmem>>, %arg5: memref<1x16x128xf32, #tpu.memory_space<vmem>>, %arg6: memref<16x64xf32, #tpu.memory_space<vmem>>, %arg7: memref<16x64xf32, #tpu.memory_space<vmem>>, %arg8: memref<16x64xf32, #tpu.memory_space<vmem>>, %arg9: memref<16x64xf32, #tpu.memory_space<vmem>>, %arg10: memref<1x16x256xf32, #tpu.memory_space<vmem>>, %arg11: memref<2x32x64xbf16, #tpu.memory_space<vmem>>, %arg12: memref<2x32x1xf32, #tpu.memory_space<vmem>>, %arg13: memref<2x32x1xf32, #tpu.memory_space<vmem>>, %arg14: memref<2x32x64xf32, #tpu.memory_space<vmem>>) attributes {dimension_semantics = [#tpu.dimension_semantics<parallel>, #tpu.dimension_semantics<parallel>, #tpu.dimension_semantics<arbitrary>], iteration_bounds = array<i64: 2, 1, 1>, scalar_prefetch = 0 : i64, scratch_operands = 4 : i64, tpu.core_type = #tpu.core_type<tc>, window_params = [{transform_indices = @transform_0, window_bounds = array<i64: 1, 16, 256>}, {transform_indices = @transform_1, window_bounds = array<i64: 1, 16, 128>}, {transform_indices = @transform_2, window_bounds = array<i64: 1, 16, 128>}, {transform_indices = @transform_3, window_bounds = array<i64: 16, 64>}, {transform_indices = @transform_4, window_bounds = array<i64: 16, 64>}, {transform_indices = @transform_5, window_bounds = array<i64: 16, 64>}, {transform_indices = @transform_6, window_bounds = array<i64: 16, 64>}, {transform_indices = @transform_7, window_bounds = array<i64: 1, 16, 256>}]} {
    %c0_i32 = arith.constant 0 : i32
    %0 = arith.cmpi eq, %arg2, %c0_i32 : i32
    %1 = arith.extui %0 : i1 to i32
    %c0_i32_0 = arith.constant 0 : i32
    %2 = arith.cmpi ne, %1, %c0_i32_0 : i32
    scf.if %2 {
      %cst_60 = arith.constant 0xFF800000 : f32
      %102 = vector.broadcast %cst_60 : f32 to vector<2x32x1xf32>
      %c0_61 = arith.constant 0 : index
      %c0_62 = arith.constant 0 : index
      %c0_63 = arith.constant 0 : index
      %103 = vector.load %arg12[%c0_61, %c0_62, %c0_63] : memref<2x32x1xf32, #tpu.memory_space<vmem>>, vector<2x32x1xf32>
      tpu.vector_store %arg12[%c0_61, %c0_62, %c0_63], %102 {strides = array<i32>} : memref<2x32x1xf32, #tpu.memory_space<vmem>>, vector<2x32x1xf32>,
      %cst_64 = arith.constant 0.000000e+00 : f32
      %104 = vector.broadcast %cst_64 : f32 to vector<2x32x1xf32>
      %c0_65 = arith.constant 0 : index
      %c0_66 = arith.constant 0 : index
      %c0_67 = arith.constant 0 : index
      %105 = vector.load %arg13[%c0_65, %c0_66, %c0_67] : memref<2x32x1xf32, #tpu.memory_space<vmem>>, vector<2x32x1xf32>
      tpu.vector_store %arg13[%c0_65, %c0_66, %c0_67], %104 {strides = array<i32>} : memref<2x32x1xf32, #tpu.memory_space<vmem>>, vector<2x32x1xf32>,
      %cst_68 = arith.constant 0.000000e+00 : f32
      %106 = vector.broadcast %cst_68 : f32 to vector<2x32x64xf32>
      %c0_69 = arith.constant 0 : index
      %c0_70 = arith.constant 0 : index
      %c0_71 = arith.constant 0 : index
      %107 = vector.load %arg14[%c0_69, %c0_70, %c0_71] : memref<2x32x64xf32, #tpu.memory_space<vmem>>, vector<2x32x64xf32>
      tpu.vector_store %arg14[%c0_69, %c0_70, %c0_71], %106 {strides = array<i32>} : memref<2x32x64xf32, #tpu.memory_space<vmem>>, vector<2x32x64xf32>,
      %c0_72 = arith.constant 0 : index
      %c0_73 = arith.constant 0 : index
      %108 = vector.load %arg6[%c0_72, %c0_73] : memref<16x64xf32, #tpu.memory_space<vmem>>, vector<16x64xf32>
      %c0_74 = arith.constant 0 : index
      %c0_75 = arith.constant 0 : index
      %109 = vector.load %arg7[%c0_74, %c0_75] : memref<16x64xf32, #tpu.memory_space<vmem>>, vector<16x64xf32>
      %c0_76 = arith.constant 0 : index
      %c0_77 = arith.constant 0 : index
      %c0_78 = arith.constant 0 : index
      %110 = vector.load %arg3[%c0_76, %c0_77, %c0_78] : memref<1x16x256xf32, #tpu.memory_space<vmem>>, vector<1x16x256xf32>
      %111 = vector.shape_cast %110 : vector<1x16x256xf32> to vector<16x256xf32>
      %112 = vector.extract_strided_slice %111 {offsets = [0, 0], sizes = [16, 64], strides = [1, 1]} : vector<16x256xf32> to vector<16x64xf32>
      %113 = arith.mulf %112, %108 : vector<16x64xf32>
      %114 = vector.extract_strided_slice %112 {offsets = [0, 32], sizes = [16, 32], strides = [1, 1]} : vector<16x64xf32> to vector<16x32xf32>
      %115 = vector.extract_strided_slice %112 {offsets = [0, 0], sizes = [16, 32], strides = [1, 1]} : vector<16x64xf32> to vector<16x32xf32>
      %116 = tpu.concatenate %114, %115 in 1 : vector<16x32xf32>, vector<16x32xf32> -> vector<16x64xf32>
      %117 = arith.mulf %116, %109 : vector<16x64xf32>
      %118 = arith.addf %113, %117 : vector<16x64xf32>
      %cst_79 = arith.constant 1.250000e-01 : f32
      %119 = vector.broadcast %cst_79 : f32 to vector<16x64xf32>
      %120 = arith.mulf %118, %119 : vector<16x64xf32>
      %121 = arith.truncf %120 : vector<16x64xf32> to vector<16x64xbf16>
      %c0_80 = arith.constant 0 : index
      %c0_81 = arith.constant 0 : index
      %c0_82 = arith.constant 0 : index
      %122 = vector.load %arg11[%c0_80, %c0_81, %c0_82] : memref<2x32x64xbf16, #tpu.memory_space<vmem>>, vector<1x16x64xbf16>
      %123 = vector.shape_cast %122 : vector<1x16x64xbf16> to vector<16x64xbf16>
      %124 = vector.shape_cast %121 : vector<16x64xbf16> to vector<1x16x64xbf16>
      tpu.vector_store %arg11[%c0_80, %c0_81, %c0_82], %124 {strides = array<i32>} : memref<2x32x64xbf16, #tpu.memory_space<vmem>>, vector<1x16x64xbf16>,
      %125 = vector.extract_strided_slice %111 {offsets = [0, 64], sizes = [16, 64], strides = [1, 1]} : vector<16x256xf32> to vector<16x64xf32>
      %126 = arith.mulf %125, %108 : vector<16x64xf32>
      %127 = vector.extract_strided_slice %125 {offsets = [0, 32], sizes = [16, 32], strides = [1, 1]} : vector<16x64xf32> to vector<16x32xf32>
      %128 = vector.extract_strided_slice %125 {offsets = [0, 0], sizes = [16, 32], strides = [1, 1]} : vector<16x64xf32> to vector<16x32xf32>
      %129 = tpu.concatenate %127, %128 in 1 : vector<16x32xf32>, vector<16x32xf32> -> vector<16x64xf32>
      %130 = arith.mulf %129, %109 : vector<16x64xf32>
      %131 = arith.addf %126, %130 : vector<16x64xf32>
      %cst_83 = arith.constant 1.250000e-01 : f32
      %132 = vector.broadcast %cst_83 : f32 to vector<16x64xf32>
      %133 = arith.mulf %131, %132 : vector<16x64xf32>
      %134 = arith.truncf %133 : vector<16x64xf32> to vector<16x64xbf16>
      %c0_84 = arith.constant 0 : index
      %c16 = arith.constant 16 : index
      %c0_85 = arith.constant 0 : index
      %135 = vector.load %arg11[%c0_84, %c16, %c0_85] : memref<2x32x64xbf16, #tpu.memory_space<vmem>>, vector<1x16x64xbf16>
      %136 = vector.shape_cast %135 : vector<1x16x64xbf16> to vector<16x64xbf16>
      %137 = vector.shape_cast %134 : vector<16x64xbf16> to vector<1x16x64xbf16>
      tpu.vector_store %arg11[%c0_84, %c16, %c0_85], %137 {strides = array<i32>} : memref<2x32x64xbf16, #tpu.memory_space<vmem>>, vector<1x16x64xbf16>,
      %138 = vector.extract_strided_slice %111 {offsets = [0, 128], sizes = [16, 64], strides = [1, 1]} : vector<16x256xf32> to vector<16x64xf32>
      %139 = arith.mulf %138, %108 : vector<16x64xf32>
      %140 = vector.extract_strided_slice %138 {offsets = [0, 32], sizes = [16, 32], strides = [1, 1]} : vector<16x64xf32> to vector<16x32xf32>
      %141 = vector.extract_strided_slice %138 {offsets = [0, 0], sizes = [16, 32], strides = [1, 1]} : vector<16x64xf32> to vector<16x32xf32>
      %142 = tpu.concatenate %140, %141 in 1 : vector<16x32xf32>, vector<16x32xf32> -> vector<16x64xf32>
      %143 = arith.mulf %142, %109 : vector<16x64xf32>
      %144 = arith.addf %139, %143 : vector<16x64xf32>
      %cst_86 = arith.constant 1.250000e-01 : f32
      %145 = vector.broadcast %cst_86 : f32 to vector<16x64xf32>
      %146 = arith.mulf %144, %145 : vector<16x64xf32>
      %147 = arith.truncf %146 : vector<16x64xf32> to vector<16x64xbf16>
      %c1_87 = arith.constant 1 : index
      %c0_88 = arith.constant 0 : index
      %c0_89 = arith.constant 0 : index
      %148 = vector.load %arg11[%c1_87, %c0_88, %c0_89] : memref<2x32x64xbf16, #tpu.memory_space<vmem>>, vector<1x16x64xbf16>
      %149 = vector.shape_cast %148 : vector<1x16x64xbf16> to vector<16x64xbf16>
      %150 = vector.shape_cast %147 : vector<16x64xbf16> to vector<1x16x64xbf16>
      tpu.vector_store %arg11[%c1_87, %c0_88, %c0_89], %150 {strides = array<i32>} : memref<2x32x64xbf16, #tpu.memory_space<vmem>>, vector<1x16x64xbf16>,
      %151 = vector.extract_strided_slice %111 {offsets = [0, 192], sizes = [16, 64], strides = [1, 1]} : vector<16x256xf32> to vector<16x64xf32>
      %152 = arith.mulf %151, %108 : vector<16x64xf32>
      %153 = vector.extract_strided_slice %151 {offsets = [0, 32], sizes = [16, 32], strides = [1, 1]} : vector<16x64xf32> to vector<16x32xf32>
      %154 = vector.extract_strided_slice %151 {offsets = [0, 0], sizes = [16, 32], strides = [1, 1]} : vector<16x64xf32> to vector<16x32xf32>
      %155 = tpu.concatenate %153, %154 in 1 : vector<16x32xf32>, vector<16x32xf32> -> vector<16x64xf32>
      %156 = arith.mulf %155, %109 : vector<16x64xf32>
      %157 = arith.addf %152, %156 : vector<16x64xf32>
      %cst_90 = arith.constant 1.250000e-01 : f32
      %158 = vector.broadcast %cst_90 : f32 to vector<16x64xf32>
      %159 = arith.mulf %157, %158 : vector<16x64xf32>
      %160 = arith.truncf %159 : vector<16x64xf32> to vector<16x64xbf16>
      %c1_91 = arith.constant 1 : index
      %c16_92 = arith.constant 16 : index
      %c0_93 = arith.constant 0 : index
      %161 = vector.load %arg11[%c1_91, %c16_92, %c0_93] : memref<2x32x64xbf16, #tpu.memory_space<vmem>>, vector<1x16x64xbf16>
      %162 = vector.shape_cast %161 : vector<1x16x64xbf16> to vector<16x64xbf16>
      %163 = vector.shape_cast %160 : vector<16x64xbf16> to vector<1x16x64xbf16>
      tpu.vector_store %arg11[%c1_91, %c16_92, %c0_93], %163 {strides = array<i32>} : memref<2x32x64xbf16, #tpu.memory_space<vmem>>, vector<1x16x64xbf16>,
    } else {
    }
    %c0 = arith.constant 0 : index
    %c0_1 = arith.constant 0 : index
    %3 = vector.load %arg8[%c0, %c0_1] : memref<16x64xf32, #tpu.memory_space<vmem>>, vector<16x64xf32>
    %c0_2 = arith.constant 0 : index
    %c0_3 = arith.constant 0 : index
    %4 = vector.load %arg9[%c0_2, %c0_3] : memref<16x64xf32, #tpu.memory_space<vmem>>, vector<16x64xf32>
    %c0_4 = arith.constant 0 : index
    %c0_5 = arith.constant 0 : index
    %c0_6 = arith.constant 0 : index
    %5 = vector.load %arg4[%c0_4, %c0_5, %c0_6] : memref<1x16x128xf32, #tpu.memory_space<vmem>>, vector<1x16x128xf32>
    %6 = vector.shape_cast %5 : vector<1x16x128xf32> to vector<16x128xf32>
    %c0_7 = arith.constant 0 : index
    %c0_8 = arith.constant 0 : index
    %c0_9 = arith.constant 0 : index
    %7 = vector.load %arg5[%c0_7, %c0_8, %c0_9] : memref<1x16x128xf32, #tpu.memory_space<vmem>>, vector<1x16x128xf32>
    %8 = vector.shape_cast %7 : vector<1x16x128xf32> to vector<16x128xf32>
    %9 = vector.extract_strided_slice %6 {offsets = [0, 0], sizes = [16, 64], strides = [1, 1]} : vector<16x128xf32> to vector<16x64xf32>
    %10 = arith.mulf %9, %3 : vector<16x64xf32>
    %11 = vector.extract_strided_slice %9 {offsets = [0, 32], sizes = [16, 32], strides = [1, 1]} : vector<16x64xf32> to vector<16x32xf32>
    %12 = vector.extract_strided_slice %9 {offsets = [0, 0], sizes = [16, 32], strides = [1, 1]} : vector<16x64xf32> to vector<16x32xf32>
    %13 = tpu.concatenate %11, %12 in 1 : vector<16x32xf32>, vector<16x32xf32> -> vector<16x64xf32>
    %14 = arith.mulf %13, %4 : vector<16x64xf32>
    %15 = arith.addf %10, %14 : vector<16x64xf32>
    %16 = arith.truncf %15 : vector<16x64xf32> to vector<16x64xbf16>
    %17 = vector.extract_strided_slice %8 {offsets = [0, 0], sizes = [16, 64], strides = [1, 1]} : vector<16x128xf32> to vector<16x64xf32>
    %18 = arith.truncf %17 : vector<16x64xf32> to vector<16x64xbf16>
    %c0_10 = arith.constant 0 : index
    %c0_11 = arith.constant 0 : index
    %c0_12 = arith.constant 0 : index
    %19 = vector.load %arg11[%c0_10, %c0_11, %c0_12] : memref<2x32x64xbf16, #tpu.memory_space<vmem>>, vector<1x32x64xbf16>
    %20 = vector.shape_cast %19 : vector<1x32x64xbf16> to vector<32x64xbf16>
    %cst = arith.constant dense<0.000000e+00> : vector<32x16xf32>
    %21 = tpu.matmul %20, %16, %cst {dimension_numbers = #tpu.dot_dimension_numbers<[1], [1], [0], [0], [0, 0, 1, 0], [], []>} : vector<32x64xbf16>, vector<16x64xbf16>, vector<32x16xf32> -> vector<32x16xf32>
    %c0_13 = arith.constant 0 : index
    %c0_14 = arith.constant 0 : index
    %c0_15 = arith.constant 0 : index
    %22 = vector.load %arg12[%c0_13, %c0_14, %c0_15] : memref<2x32x1xf32, #tpu.memory_space<vmem>>, vector<1x32x1xf32>
    %23 = vector.shape_cast %22 : vector<1x32x1xf32> to vector<32x1xf32>
    %cst_16 = arith.constant dense<0xFF800000> : vector<32xf32>
    %24 = vector.multi_reduction <maximumf>, %21, %cst_16 [1] : vector<32x16xf32> to vector<32xf32>
    %25 = vector.shape_cast %24 : vector<32xf32> to vector<32x1xf32>
    %26 = arith.maximumf %23, %25 : vector<32x1xf32>
    %27 = arith.subf %23, %26 : vector<32x1xf32>
    %28 = math.exp %27 : vector<32x1xf32>
    %29 = vector.broadcast %26 : vector<32x1xf32> to vector<32x16xf32>
    %30 = arith.subf %21, %29 : vector<32x16xf32>
    %31 = math.exp %30 : vector<32x16xf32>
    %c0_17 = arith.constant 0 : index
    %c0_18 = arith.constant 0 : index
    %c0_19 = arith.constant 0 : index
    %32 = vector.load %arg13[%c0_17, %c0_18, %c0_19] : memref<2x32x1xf32, #tpu.memory_space<vmem>>, vector<1x32x1xf32>
    %33 = vector.shape_cast %32 : vector<1x32x1xf32> to vector<32x1xf32>
    %34 = arith.mulf %28, %33 : vector<32x1xf32>
    %cst_20 = arith.constant dense<0.000000e+00> : vector<32xf32>
    %35 = vector.multi_reduction <add>, %31, %cst_20 [1] : vector<32x16xf32> to vector<32xf32>
    %36 = vector.shape_cast %35 : vector<32xf32> to vector<32x1xf32>
    %37 = arith.addf %34, %36 : vector<32x1xf32>
    %c0_21 = arith.constant 0 : index
    %c0_22 = arith.constant 0 : index
    %c0_23 = arith.constant 0 : index
    %38 = vector.load %arg13[%c0_21, %c0_22, %c0_23] : memref<2x32x1xf32, #tpu.memory_space<vmem>>, vector<1x32x1xf32>
    %39 = vector.shape_cast %38 : vector<1x32x1xf32> to vector<32x1xf32>
    %40 = vector.shape_cast %37 : vector<32x1xf32> to vector<1x32x1xf32>
    tpu.vector_store %arg13[%c0_21, %c0_22, %c0_23], %40 {strides = array<i32>} : memref<2x32x1xf32, #tpu.memory_space<vmem>>, vector<1x32x1xf32>,
    %c0_24 = arith.constant 0 : index
    %c0_25 = arith.constant 0 : index
    %c0_26 = arith.constant 0 : index
    %41 = vector.load %arg14[%c0_24, %c0_25, %c0_26] : memref<2x32x64xf32, #tpu.memory_space<vmem>>, vector<1x32x64xf32>
    %42 = vector.shape_cast %41 : vector<1x32x64xf32> to vector<32x64xf32>
    %43 = vector.broadcast %28 : vector<32x1xf32> to vector<32x64xf32>
    %44 = arith.mulf %43, %42 : vector<32x64xf32>
    %45 = arith.truncf %31 : vector<32x16xf32> to vector<32x16xbf16>
    %cst_27 = arith.constant dense<0.000000e+00> : vector<32x64xf32>
    %46 = tpu.matmul %45, %18, %cst_27 {dimension_numbers = #tpu.dot_dimension_numbers<[1], [0], [0], [1], [0, 0, 1, 1], [], []>} : vector<32x16xbf16>, vector<16x64xbf16>, vector<32x64xf32> -> vector<32x64xf32>
    %47 = arith.addf %44, %46 : vector<32x64xf32>
    %c0_28 = arith.constant 0 : index
    %c0_29 = arith.constant 0 : index
    %c0_30 = arith.constant 0 : index
    %48 = vector.load %arg14[%c0_28, %c0_29, %c0_30] : memref<2x32x64xf32, #tpu.memory_space<vmem>>, vector<1x32x64xf32>
    %49 = vector.shape_cast %48 : vector<1x32x64xf32> to vector<32x64xf32>
    %50 = vector.shape_cast %47 : vector<32x64xf32> to vector<1x32x64xf32>
    tpu.vector_store %arg14[%c0_28, %c0_29, %c0_30], %50 {strides = array<i32>} : memref<2x32x64xf32, #tpu.memory_space<vmem>>, vector<1x32x64xf32>,
    %c0_31 = arith.constant 0 : index
    %c0_32 = arith.constant 0 : index
    %c0_33 = arith.constant 0 : index
    %51 = vector.load %arg12[%c0_31, %c0_32, %c0_33] : memref<2x32x1xf32, #tpu.memory_space<vmem>>, vector<1x32x1xf32>
    %52 = vector.shape_cast %51 : vector<1x32x1xf32> to vector<32x1xf32>
    %53 = vector.shape_cast %26 : vector<32x1xf32> to vector<1x32x1xf32>
    tpu.vector_store %arg12[%c0_31, %c0_32, %c0_33], %53 {strides = array<i32>} : memref<2x32x1xf32, #tpu.memory_space<vmem>>, vector<1x32x1xf32>,
    %54 = vector.extract_strided_slice %6 {offsets = [0, 64], sizes = [16, 64], strides = [1, 1]} : vector<16x128xf32> to vector<16x64xf32>
    %55 = arith.mulf %54, %3 : vector<16x64xf32>
    %56 = vector.extract_strided_slice %54 {offsets = [0, 32], sizes = [16, 32], strides = [1, 1]} : vector<16x64xf32> to vector<16x32xf32>
    %57 = vector.extract_strided_slice %54 {offsets = [0, 0], sizes = [16, 32], strides = [1, 1]} : vector<16x64xf32> to vector<16x32xf32>
    %58 = tpu.concatenate %56, %57 in 1 : vector<16x32xf32>, vector<16x32xf32> -> vector<16x64xf32>
    %59 = arith.mulf %58, %4 : vector<16x64xf32>
    %60 = arith.addf %55, %59 : vector<16x64xf32>
    %61 = arith.truncf %60 : vector<16x64xf32> to vector<16x64xbf16>
    %62 = vector.extract_strided_slice %8 {offsets = [0, 64], sizes = [16, 64], strides = [1, 1]} : vector<16x128xf32> to vector<16x64xf32>
    %63 = arith.truncf %62 : vector<16x64xf32> to vector<16x64xbf16>
    %c1 = arith.constant 1 : index
    %c0_34 = arith.constant 0 : index
    %c0_35 = arith.constant 0 : index
    %64 = vector.load %arg11[%c1, %c0_34, %c0_35] : memref<2x32x64xbf16, #tpu.memory_space<vmem>>, vector<1x32x64xbf16>
    %65 = vector.shape_cast %64 : vector<1x32x64xbf16> to vector<32x64xbf16>
    %cst_36 = arith.constant dense<0.000000e+00> : vector<32x16xf32>
    %66 = tpu.matmul %65, %61, %cst_36 {dimension_numbers = #tpu.dot_dimension_numbers<[1], [1], [0], [0], [0, 0, 1, 0], [], []>} : vector<32x64xbf16>, vector<16x64xbf16>, vector<32x16xf32> -> vector<32x16xf32>
    %c1_37 = arith.constant 1 : index
    %c0_38 = arith.constant 0 : index
    %c0_39 = arith.constant 0 : index
    %67 = vector.load %arg12[%c1_37, %c0_38, %c0_39] : memref<2x32x1xf32, #tpu.memory_space<vmem>>, vector<1x32x1xf32>
    %68 = vector.shape_cast %67 : vector<1x32x1xf32> to vector<32x1xf32>
    %cst_40 = arith.constant dense<0xFF800000> : vector<32xf32>
    %69 = vector.multi_reduction <maximumf>, %66, %cst_40 [1] : vector<32x16xf32> to vector<32xf32>
    %70 = vector.shape_cast %69 : vector<32xf32> to vector<32x1xf32>
    %71 = arith.maximumf %68, %70 : vector<32x1xf32>
    %72 = arith.subf %68, %71 : vector<32x1xf32>
    %73 = math.exp %72 : vector<32x1xf32>
    %74 = vector.broadcast %71 : vector<32x1xf32> to vector<32x16xf32>
    %75 = arith.subf %66, %74 : vector<32x16xf32>
    %76 = math.exp %75 : vector<32x16xf32>
    %c1_41 = arith.constant 1 : index
    %c0_42 = arith.constant 0 : index
    %c0_43 = arith.constant 0 : index
    %77 = vector.load %arg13[%c1_41, %c0_42, %c0_43] : memref<2x32x1xf32, #tpu.memory_space<vmem>>, vector<1x32x1xf32>
    %78 = vector.shape_cast %77 : vector<1x32x1xf32> to vector<32x1xf32>
    %79 = arith.mulf %73, %78 : vector<32x1xf32>
    %cst_44 = arith.constant dense<0.000000e+00> : vector<32xf32>
    %80 = vector.multi_reduction <add>, %76, %cst_44 [1] : vector<32x16xf32> to vector<32xf32>
    %81 = vector.shape_cast %80 : vector<32xf32> to vector<32x1xf32>
    %82 = arith.addf %79, %81 : vector<32x1xf32>
    %c1_45 = arith.constant 1 : index
    %c0_46 = arith.constant 0 : index
    %c0_47 = arith.constant 0 : index
    %83 = vector.load %arg13[%c1_45, %c0_46, %c0_47] : memref<2x32x1xf32, #tpu.memory_space<vmem>>, vector<1x32x1xf32>
    %84 = vector.shape_cast %83 : vector<1x32x1xf32> to vector<32x1xf32>
    %85 = vector.shape_cast %82 : vector<32x1xf32> to vector<1x32x1xf32>
    tpu.vector_store %arg13[%c1_45, %c0_46, %c0_47], %85 {strides = array<i32>} : memref<2x32x1xf32, #tpu.memory_space<vmem>>, vector<1x32x1xf32>,
    %c1_48 = arith.constant 1 : index
    %c0_49 = arith.constant 0 : index
    %c0_50 = arith.constant 0 : index
    %86 = vector.load %arg14[%c1_48, %c0_49, %c0_50] : memref<2x32x64xf32, #tpu.memory_space<vmem>>, vector<1x32x64xf32>
    %87 = vector.shape_cast %86 : vector<1x32x64xf32> to vector<32x64xf32>
    %88 = vector.broadcast %73 : vector<32x1xf32> to vector<32x64xf32>
    %89 = arith.mulf %88, %87 : vector<32x64xf32>
    %90 = arith.truncf %76 : vector<32x16xf32> to vector<32x16xbf16>
    %cst_51 = arith.constant dense<0.000000e+00> : vector<32x64xf32>
    %91 = tpu.matmul %90, %63, %cst_51 {dimension_numbers = #tpu.dot_dimension_numbers<[1], [0], [0], [1], [0, 0, 1, 1], [], []>} : vector<32x16xbf16>, vector<16x64xbf16>, vector<32x64xf32> -> vector<32x64xf32>
    %92 = arith.addf %89, %91 : vector<32x64xf32>
    %c1_52 = arith.constant 1 : index
    %c0_53 = arith.constant 0 : index
    %c0_54 = arith.constant 0 : index
    %93 = vector.load %arg14[%c1_52, %c0_53, %c0_54] : memref<2x32x64xf32, #tpu.memory_space<vmem>>, vector<1x32x64xf32>
    %94 = vector.shape_cast %93 : vector<1x32x64xf32> to vector<32x64xf32>
    %95 = vector.shape_cast %92 : vector<32x64xf32> to vector<1x32x64xf32>
    tpu.vector_store %arg14[%c1_52, %c0_53, %c0_54], %95 {strides = array<i32>} : memref<2x32x64xf32, #tpu.memory_space<vmem>>, vector<1x32x64xf32>,
    %c1_55 = arith.constant 1 : index
    %c0_56 = arith.constant 0 : index
    %c0_57 = arith.constant 0 : index
    %96 = vector.load %arg12[%c1_55, %c0_56, %c0_57] : memref<2x32x1xf32, #tpu.memory_space<vmem>>, vector<1x32x1xf32>
    %97 = vector.shape_cast %96 : vector<1x32x1xf32> to vector<32x1xf32>
    %98 = vector.shape_cast %71 : vector<32x1xf32> to vector<1x32x1xf32>
    tpu.vector_store %arg12[%c1_55, %c0_56, %c0_57], %98 {strides = array<i32>} : memref<2x32x1xf32, #tpu.memory_space<vmem>>, vector<1x32x1xf32>,
    %c0_i32_58 = arith.constant 0 : i32
    %99 = arith.cmpi eq, %arg2, %c0_i32_58 : i32
    %100 = arith.extui %99 : i1 to i32
    %c0_i32_59 = arith.constant 0 : i32
    %101 = arith.cmpi ne, %100, %c0_i32_59 : i32
    scf.if %101 {
      %c0_60 = arith.constant 0 : index
      %c0_61 = arith.constant 0 : index
      %c0_62 = arith.constant 0 : index
      %102 = vector.load %arg14[%c0_60, %c0_61, %c0_62] : memref<2x32x64xf32, #tpu.memory_space<vmem>>, vector<1x32x64xf32>
      %103 = vector.shape_cast %102 : vector<1x32x64xf32> to vector<32x64xf32>
      %c0_63 = arith.constant 0 : index
      %c0_64 = arith.constant 0 : index
      %c0_65 = arith.constant 0 : index
      %104 = vector.load %arg13[%c0_63, %c0_64, %c0_65] : memref<2x32x1xf32, #tpu.memory_space<vmem>>, vector<1x32x1xf32>
      %105 = vector.shape_cast %104 : vector<1x32x1xf32> to vector<32x1xf32>
      %106 = tpu.reciprocal %105 : vector<32x1xf32> -> vector<32x1xf32>
      %107 = vector.broadcast %106 : vector<32x1xf32> to vector<32x64xf32>
      %108 = arith.mulf %103, %107 : vector<32x64xf32>
      %109 = vector.extract_strided_slice %108 {offsets = [0, 0], sizes = [16, 64], strides = [1, 1]} : vector<32x64xf32> to vector<16x64xf32>
      %110 = vector.extract_strided_slice %108 {offsets = [16, 0], sizes = [16, 64], strides = [1, 1]} : vector<32x64xf32> to vector<16x64xf32>
      %c1_66 = arith.constant 1 : index
      %c0_67 = arith.constant 0 : index
      %c0_68 = arith.constant 0 : index
      %111 = vector.load %arg14[%c1_66, %c0_67, %c0_68] : memref<2x32x64xf32, #tpu.memory_space<vmem>>, vector<1x32x64xf32>
      %112 = vector.shape_cast %111 : vector<1x32x64xf32> to vector<32x64xf32>
      %c1_69 = arith.constant 1 : index
      %c0_70 = arith.constant 0 : index
      %c0_71 = arith.constant 0 : index
      %113 = vector.load %arg13[%c1_69, %c0_70, %c0_71] : memref<2x32x1xf32, #tpu.memory_space<vmem>>, vector<1x32x1xf32>
      %114 = vector.shape_cast %113 : vector<1x32x1xf32> to vector<32x1xf32>
      %115 = tpu.reciprocal %114 : vector<32x1xf32> -> vector<32x1xf32>
      %116 = vector.broadcast %115 : vector<32x1xf32> to vector<32x64xf32>
      %117 = arith.mulf %112, %116 : vector<32x64xf32>
      %118 = vector.extract_strided_slice %117 {offsets = [0, 0], sizes = [16, 64], strides = [1, 1]} : vector<32x64xf32> to vector<16x64xf32>
      %119 = vector.extract_strided_slice %117 {offsets = [16, 0], sizes = [16, 64], strides = [1, 1]} : vector<32x64xf32> to vector<16x64xf32>
      %120 = tpu.concatenate %109, %110, %118, %119 in 1 : vector<16x64xf32>, vector<16x64xf32>, vector<16x64xf32>, vector<16x64xf32> -> vector<16x256xf32>
      %c0_72 = arith.constant 0 : index
      %c0_73 = arith.constant 0 : index
      %c0_74 = arith.constant 0 : index
      %121 = vector.load %arg10[%c0_72, %c0_73, %c0_74] : memref<1x16x256xf32, #tpu.memory_space<vmem>>, vector<1x16x256xf32>
      %122 = vector.shape_cast %121 : vector<1x16x256xf32> to vector<16x256xf32>
      %123 = vector.shape_cast %120 : vector<16x256xf32> to vector<1x16x256xf32>
      tpu.vector_store %arg10[%c0_72, %c0_73, %c0_74], %123 {strides = array<i32>} : memref<1x16x256xf32, #tpu.memory_space<vmem>>, vector<1x16x256xf32>,
    } else {
    }
    return
  }
  func.func @transform_0(%arg0: i32, %arg1: i32, %arg2: i32) -> (i32, i32, i32) {
    %c0_i32 = arith.constant 0 : i32
    %c0_i32_0 = arith.constant 0 : i32
    return %arg0, %arg1, %c0_i32 : i32, i32, i32
  }
  func.func @transform_1(%arg0: i32, %arg1: i32, %arg2: i32) -> (i32, i32, i32) {
    %c2_i32 = arith.constant 2 : i32
    %c0_i32 = arith.constant 0 : i32
    return %arg0, %arg2, %c2_i32 : i32, i32, i32
  }
  func.func @transform_2(%arg0: i32, %arg1: i32, %arg2: i32) -> (i32, i32, i32) {
    %c3_i32 = arith.constant 3 : i32
    %c0_i32 = arith.constant 0 : i32
    return %arg0, %arg2, %c3_i32 : i32, i32, i32
  }
  func.func @transform_3(%arg0: i32, %arg1: i32, %arg2: i32) -> (i32, i32) {
    %c0_i32 = arith.constant 0 : i32
    %c0_i32_0 = arith.constant 0 : i32
    return %arg1, %c0_i32 : i32, i32
  }
  func.func @transform_4(%arg0: i32, %arg1: i32, %arg2: i32) -> (i32, i32) {
    %c0_i32 = arith.constant 0 : i32
    %c0_i32_0 = arith.constant 0 : i32
    return %arg1, %c0_i32 : i32, i32
  }
  func.func @transform_5(%arg0: i32, %arg1: i32, %arg2: i32) -> (i32, i32) {
    %c0_i32 = arith.constant 0 : i32
    %c0_i32_0 = arith.constant 0 : i32
    return %arg2, %c0_i32 : i32, i32
  }
  func.func @transform_6(%arg0: i32, %arg1: i32, %arg2: i32) -> (i32, i32) {
    %c0_i32 = arith.constant 0 : i32
    %c0_i32_0 = arith.constant 0 : i32
    return %arg2, %c0_i32 : i32, i32
  }
  func.func @transform_7(%arg0: i32, %arg1: i32, %arg2: i32) -> (i32, i32, i32) {
    %c0_i32 = arith.constant 0 : i32
    %c0_i32_0 = arith.constant 0 : i32
    return %arg0, %arg1, %c0_i32 : i32, i32, i32
  }
}

module attributes {stable_mosaic.version = 11 : i64} {
  func.func @_mm_bias_kernel(%arg0: i32, %arg1: i32, %arg2: i32, %arg3: memref<32x256xf32, #tpu.memory_space<vmem>>, %arg4: memref<256x512xbf16, #tpu.memory_space<vmem>>, %arg5: memref<1x512xf32, #tpu.memory_space<vmem>>, %arg6: memref<32x512xf32, #tpu.memory_space<vmem>>, %arg7: memref<32x512xf32, #tpu.memory_space<vmem>>) attributes {dimension_semantics = [#tpu.dimension_semantics<parallel>, #tpu.dimension_semantics<parallel>, #tpu.dimension_semantics<arbitrary>], iteration_bounds = array<i64: 1, 1, 1>, scalar_prefetch = 0 : i64, scratch_operands = 1 : i64, tpu.core_type = #tpu.core_type<tc>, window_params = [{transform_indices = @transform_0, window_bounds = array<i64: 32, 256>}, {transform_indices = @transform_1, window_bounds = array<i64: 256, 512>}, {transform_indices = @transform_2, window_bounds = array<i64: 1, 512>}, {transform_indices = @transform_3, window_bounds = array<i64: 32, 512>}]} {
    %c0_i32 = arith.constant 0 : i32
    %0 = arith.cmpi eq, %arg2, %c0_i32 : i32
    %1 = arith.extui %0 : i1 to i32
    %c0_i32_0 = arith.constant 0 : i32
    %2 = arith.cmpi ne, %1, %c0_i32_0 : i32
    scf.if %2 {
      %cst_10 = arith.constant 0.000000e+00 : f32
      %13 = vector.broadcast %cst_10 : f32 to vector<32x512xf32>
      %c0_11 = arith.constant 0 : index
      %c0_12 = arith.constant 0 : index
      %14 = vector.load %arg7[%c0_11, %c0_12] : memref<32x512xf32, #tpu.memory_space<vmem>>, vector<32x512xf32>
      tpu.vector_store %arg7[%c0_11, %c0_12], %13 {strides = array<i32>} : memref<32x512xf32, #tpu.memory_space<vmem>>, vector<32x512xf32>,
    } else {
    }
    %c0 = arith.constant 0 : index
    %c0_1 = arith.constant 0 : index
    %3 = vector.load %arg7[%c0, %c0_1] : memref<32x512xf32, #tpu.memory_space<vmem>>, vector<32x512xf32>
    %c0_2 = arith.constant 0 : index
    %c0_3 = arith.constant 0 : index
    %4 = vector.load %arg3[%c0_2, %c0_3] : memref<32x256xf32, #tpu.memory_space<vmem>>, vector<32x256xf32>
    %5 = arith.truncf %4 : vector<32x256xf32> to vector<32x256xbf16>
    %c0_4 = arith.constant 0 : index
    %c0_5 = arith.constant 0 : index
    %6 = vector.load %arg4[%c0_4, %c0_5] : memref<256x512xbf16, #tpu.memory_space<vmem>>, vector<256x512xbf16>
    %cst = arith.constant dense<0.000000e+00> : vector<32x512xf32>
    %7 = tpu.matmul %5, %6, %cst {dimension_numbers = #tpu.dot_dimension_numbers<[1], [0], [0], [1], [0, 0, 1, 1], [], []>} : vector<32x256xbf16>, vector<256x512xbf16>, vector<32x512xf32> -> vector<32x512xf32>
    %8 = arith.addf %3, %7 : vector<32x512xf32>
    %c0_6 = arith.constant 0 : index
    %c0_7 = arith.constant 0 : index
    %9 = vector.load %arg7[%c0_6, %c0_7] : memref<32x512xf32, #tpu.memory_space<vmem>>, vector<32x512xf32>
    tpu.vector_store %arg7[%c0_6, %c0_7], %8 {strides = array<i32>} : memref<32x512xf32, #tpu.memory_space<vmem>>, vector<32x512xf32>,
    %c0_i32_8 = arith.constant 0 : i32
    %10 = arith.cmpi eq, %arg2, %c0_i32_8 : i32
    %11 = arith.extui %10 : i1 to i32
    %c0_i32_9 = arith.constant 0 : i32
    %12 = arith.cmpi ne, %11, %c0_i32_9 : i32
    scf.if %12 {
      %c0_10 = arith.constant 0 : index
      %c0_11 = arith.constant 0 : index
      %13 = vector.load %arg7[%c0_10, %c0_11] : memref<32x512xf32, #tpu.memory_space<vmem>>, vector<32x512xf32>
      %c0_12 = arith.constant 0 : index
      %c0_13 = arith.constant 0 : index
      %14 = vector.load %arg5[%c0_12, %c0_13] : memref<1x512xf32, #tpu.memory_space<vmem>>, vector<1x512xf32>
      %15 = vector.broadcast %14 : vector<1x512xf32> to vector<32x512xf32>
      %16 = arith.addf %13, %15 : vector<32x512xf32>
      %c0_14 = arith.constant 0 : index
      %c0_15 = arith.constant 0 : index
      %17 = vector.load %arg6[%c0_14, %c0_15] : memref<32x512xf32, #tpu.memory_space<vmem>>, vector<32x512xf32>
      tpu.vector_store %arg6[%c0_14, %c0_15], %16 {strides = array<i32>} : memref<32x512xf32, #tpu.memory_space<vmem>>, vector<32x512xf32>,
    } else {
    }
    return
  }
  func.func @transform_0(%arg0: i32, %arg1: i32, %arg2: i32) -> (i32, i32) {
    %c0_i32 = arith.constant 0 : i32
    return %arg0, %arg2 : i32, i32
  }
  func.func @transform_1(%arg0: i32, %arg1: i32, %arg2: i32) -> (i32, i32) {
    %c0_i32 = arith.constant 0 : i32
    return %arg2, %arg1 : i32, i32
  }
  func.func @transform_2(%arg0: i32, %arg1: i32, %arg2: i32) -> (i32, i32) {
    %c0_i32 = arith.constant 0 : i32
    %c0_i32_0 = arith.constant 0 : i32
    return %c0_i32, %arg1 : i32, i32
  }
  func.func @transform_3(%arg0: i32, %arg1: i32, %arg2: i32) -> (i32, i32) {
    %c0_i32 = arith.constant 0 : i32
    return %arg0, %arg1 : i32, i32
  }
}

module attributes {stable_mosaic.version = 11 : i64} {
  func.func @_mm_bias_add_ln_kernel(%arg0: i32, %arg1: i32, %arg2: memref<32x512xf32, #tpu.memory_space<vmem>>, %arg3: memref<512x256xbf16, #tpu.memory_space<vmem>>, %arg4: memref<1x256xf32, #tpu.memory_space<vmem>>, %arg5: memref<32x256xf32, #tpu.memory_space<vmem>>, %arg6: memref<1x256xf32, #tpu.memory_space<vmem>>, %arg7: memref<1x256xf32, #tpu.memory_space<vmem>>, %arg8: memref<32x256xf32, #tpu.memory_space<vmem>>, %arg9: memref<32x256xf32, #tpu.memory_space<vmem>>) attributes {dimension_semantics = [#tpu.dimension_semantics<parallel>, #tpu.dimension_semantics<arbitrary>], iteration_bounds = array<i64: 1, 1>, scalar_prefetch = 0 : i64, scratch_operands = 1 : i64, tpu.core_type = #tpu.core_type<tc>, window_params = [{transform_indices = @transform_0, window_bounds = array<i64: 32, 512>}, {transform_indices = @transform_1, window_bounds = array<i64: 512, 256>}, {pipeline_mode = #tpu.pipeline_mode<synchronous>, transform_indices = @transform_2, window_bounds = array<i64: 1, 256>}, {transform_indices = @transform_3, window_bounds = array<i64: 32, 256>}, {pipeline_mode = #tpu.pipeline_mode<synchronous>, transform_indices = @transform_4, window_bounds = array<i64: 1, 256>}, {pipeline_mode = #tpu.pipeline_mode<synchronous>, transform_indices = @transform_5, window_bounds = array<i64: 1, 256>}, {transform_indices = @transform_6, window_bounds = array<i64: 32, 256>}]} {
    %c0_i32 = arith.constant 0 : i32
    %0 = arith.cmpi eq, %arg1, %c0_i32 : i32
    %1 = arith.extui %0 : i1 to i32
    %c0_i32_0 = arith.constant 0 : i32
    %2 = arith.cmpi ne, %1, %c0_i32_0 : i32
    scf.if %2 {
      %cst_10 = arith.constant 0.000000e+00 : f32
      %13 = vector.broadcast %cst_10 : f32 to vector<32x256xf32>
      %c0_11 = arith.constant 0 : index
      %c0_12 = arith.constant 0 : index
      %14 = vector.load %arg9[%c0_11, %c0_12] : memref<32x256xf32, #tpu.memory_space<vmem>>, vector<32x256xf32>
      tpu.vector_store %arg9[%c0_11, %c0_12], %13 {strides = array<i32>} : memref<32x256xf32, #tpu.memory_space<vmem>>, vector<32x256xf32>,
    } else {
    }
    %c0 = arith.constant 0 : index
    %c0_1 = arith.constant 0 : index
    %3 = vector.load %arg9[%c0, %c0_1] : memref<32x256xf32, #tpu.memory_space<vmem>>, vector<32x256xf32>
    %c0_2 = arith.constant 0 : index
    %c0_3 = arith.constant 0 : index
    %4 = vector.load %arg2[%c0_2, %c0_3] : memref<32x512xf32, #tpu.memory_space<vmem>>, vector<32x512xf32>
    %5 = arith.truncf %4 : vector<32x512xf32> to vector<32x512xbf16>
    %c0_4 = arith.constant 0 : index
    %c0_5 = arith.constant 0 : index
    %6 = vector.load %arg3[%c0_4, %c0_5] : memref<512x256xbf16, #tpu.memory_space<vmem>>, vector<512x256xbf16>
    %cst = arith.constant dense<0.000000e+00> : vector<32x256xf32>
    %7 = tpu.matmul %5, %6, %cst {dimension_numbers = #tpu.dot_dimension_numbers<[1], [0], [0], [1], [0, 0, 1, 1], [], []>} : vector<32x512xbf16>, vector<512x256xbf16>, vector<32x256xf32> -> vector<32x256xf32>
    %8 = arith.addf %3, %7 : vector<32x256xf32>
    %c0_6 = arith.constant 0 : index
    %c0_7 = arith.constant 0 : index
    %9 = vector.load %arg9[%c0_6, %c0_7] : memref<32x256xf32, #tpu.memory_space<vmem>>, vector<32x256xf32>
    tpu.vector_store %arg9[%c0_6, %c0_7], %8 {strides = array<i32>} : memref<32x256xf32, #tpu.memory_space<vmem>>, vector<32x256xf32>,
    %c0_i32_8 = arith.constant 0 : i32
    %10 = arith.cmpi eq, %arg1, %c0_i32_8 : i32
    %11 = arith.extui %10 : i1 to i32
    %c0_i32_9 = arith.constant 0 : i32
    %12 = arith.cmpi ne, %11, %c0_i32_9 : i32
    scf.if %12 {
      %c0_10 = arith.constant 0 : index
      %c0_11 = arith.constant 0 : index
      %13 = vector.load %arg9[%c0_10, %c0_11] : memref<32x256xf32, #tpu.memory_space<vmem>>, vector<32x256xf32>
      %c0_12 = arith.constant 0 : index
      %c0_13 = arith.constant 0 : index
      %14 = vector.load %arg4[%c0_12, %c0_13] : memref<1x256xf32, #tpu.memory_space<vmem>>, vector<1x256xf32>
      %15 = vector.broadcast %14 : vector<1x256xf32> to vector<32x256xf32>
      %16 = arith.addf %13, %15 : vector<32x256xf32>
      %c0_14 = arith.constant 0 : index
      %c0_15 = arith.constant 0 : index
      %17 = vector.load %arg5[%c0_14, %c0_15] : memref<32x256xf32, #tpu.memory_space<vmem>>, vector<32x256xf32>
      %18 = arith.addf %16, %17 : vector<32x256xf32>
      %cst_16 = arith.constant dense<0.000000e+00> : vector<32xf32>
      %19 = vector.multi_reduction <add>, %18, %cst_16 [1] : vector<32x256xf32> to vector<32xf32>
      %20 = vector.shape_cast %19 : vector<32xf32> to vector<32x1xf32>
      %cst_17 = arith.constant 2.560000e+02 : f32
      %21 = vector.broadcast %cst_17 : f32 to vector<32x1xf32>
      %22 = arith.divf %20, %21 : vector<32x1xf32>
      %23 = vector.broadcast %22 : vector<32x1xf32> to vector<32x256xf32>
      %24 = arith.subf %18, %23 : vector<32x256xf32>
      %25 = arith.mulf %24, %24 : vector<32x256xf32>
      %cst_18 = arith.constant dense<0.000000e+00> : vector<32xf32>
      %26 = vector.multi_reduction <add>, %25, %cst_18 [1] : vector<32x256xf32> to vector<32xf32>
      %27 = vector.shape_cast %26 : vector<32xf32> to vector<32x1xf32>
      %cst_19 = arith.constant 2.560000e+02 : f32
      %28 = vector.broadcast %cst_19 : f32 to vector<32x1xf32>
      %29 = arith.divf %27, %28 : vector<32x1xf32>
      %30 = vector.broadcast %22 : vector<32x1xf32> to vector<32x256xf32>
      %31 = arith.subf %18, %30 : vector<32x256xf32>
      %cst_20 = arith.constant 9.99999974E-6 : f32
      %32 = vector.broadcast %cst_20 : f32 to vector<32x1xf32>
      %33 = arith.addf %29, %32 : vector<32x1xf32>
      %34 = math.rsqrt %33 : vector<32x1xf32>
      %35 = vector.broadcast %34 : vector<32x1xf32> to vector<32x256xf32>
      %36 = arith.mulf %31, %35 : vector<32x256xf32>
      %c0_21 = arith.constant 0 : index
      %c0_22 = arith.constant 0 : index
      %37 = vector.load %arg6[%c0_21, %c0_22] : memref<1x256xf32, #tpu.memory_space<vmem>>, vector<1x256xf32>
      %38 = vector.broadcast %37 : vector<1x256xf32> to vector<32x256xf32>
      %39 = arith.mulf %36, %38 : vector<32x256xf32>
      %c0_23 = arith.constant 0 : index
      %c0_24 = arith.constant 0 : index
      %40 = vector.load %arg7[%c0_23, %c0_24] : memref<1x256xf32, #tpu.memory_space<vmem>>, vector<1x256xf32>
      %41 = vector.broadcast %40 : vector<1x256xf32> to vector<32x256xf32>
      %42 = arith.addf %39, %41 : vector<32x256xf32>
      %c0_25 = arith.constant 0 : index
      %c0_26 = arith.constant 0 : index
      %43 = vector.load %arg8[%c0_25, %c0_26] : memref<32x256xf32, #tpu.memory_space<vmem>>, vector<32x256xf32>
      tpu.vector_store %arg8[%c0_25, %c0_26], %42 {strides = array<i32>} : memref<32x256xf32, #tpu.memory_space<vmem>>, vector<32x256xf32>,
    } else {
    }
    return
  }
  func.func @transform_0(%arg0: i32, %arg1: i32) -> (i32, i32) {
    %c0_i32 = arith.constant 0 : i32
    return %arg0, %arg1 : i32, i32
  }
  func.func @transform_1(%arg0: i32, %arg1: i32) -> (i32, i32) {
    %c0_i32 = arith.constant 0 : i32
    %c0_i32_0 = arith.constant 0 : i32
    return %arg1, %c0_i32 : i32, i32
  }
  func.func @transform_2(%arg0: i32, %arg1: i32) -> (i32, i32) {
    %c0_i32 = arith.constant 0 : i32
    %c0_i32_0 = arith.constant 0 : i32
    %c0_i32_1 = arith.constant 0 : i32
    return %c0_i32, %c0_i32_0 : i32, i32
  }
  func.func @transform_3(%arg0: i32, %arg1: i32) -> (i32, i32) {
    %c0_i32 = arith.constant 0 : i32
    %c0_i32_0 = arith.constant 0 : i32
    return %arg0, %c0_i32 : i32, i32
  }
  func.func @transform_4(%arg0: i32, %arg1: i32) -> (i32, i32) {
    %c0_i32 = arith.constant 0 : i32
    %c0_i32_0 = arith.constant 0 : i32
    %c0_i32_1 = arith.constant 0 : i32
    return %c0_i32, %c0_i32_0 : i32, i32
  }
  func.func @transform_5(%arg0: i32, %arg1: i32) -> (i32, i32) {
    %c0_i32 = arith.constant 0 : i32
    %c0_i32_0 = arith.constant 0 : i32
    %c0_i32_1 = arith.constant 0 : i32
    return %c0_i32, %c0_i32_0 : i32, i32
  }
  func.func @transform_6(%arg0: i32, %arg1: i32) -> (i32, i32) {
    %c0_i32 = arith.constant 0 : i32
    %c0_i32_0 = arith.constant 0 : i32
    return %arg0, %c0_i32 : i32, i32
  }
}

</mosaic_0001>

<llo_original>
// kernel: flash_roberta_layer.7
$region0: #{flash_roberta_layer.7}
  #allocation0 [shape = 'u32[]', space=smem, size = 0x4, offset = 0x4, fixed_abs, tag = 'smem constant byte address 0x4 - core index']
  #allocation1 [shape = 'u32[72,128]{1,0:T(1,128)}', space=vmem, size = 0x9000, scoped, tag = 'internal scratch']
  #allocation2 [shape = 'f32[32,256]{1,0:T(8,128)}', space=vmem, size = 0x8000, scoped, tag = 'scratch operand']
  %s0 = inlined_call_operand.vmem [shape: f32[32,256], index: 0, kind: input, shape index: {}]
  %s1 = inlined_call_operand.hbm [shape: bf16[256,256], index: 1, kind: input, shape index: {}]
  %s2 = inlined_call_operand.hbm [shape: f32[1,256], index: 2, kind: input, shape index: {}]
  %s3 = inlined_call_operand.hbm [shape: f32[32,256], index: 3, kind: input, shape index: {}]
  %s4 = inlined_call_operand.hbm [shape: f32[1,256], index: 4, kind: input, shape index: {}]
  %s5 = inlined_call_operand.hbm [shape: f32[1,256], index: 5, kind: input, shape index: {}]
  %s6 = inlined_call_operand.vmem [shape: f32[32,256], index: 6, kind: output, shape index: {}]
  %s7 = sld [smem:[#allocation0]]
  $region62: #{flash_roberta_layer.7} parent=0
    _
  %s9 = ssub.s32 1, %s7
  %s10 = scalar_select 0, %s9, %s7
  $region1: #{flash_roberta_layer.7} parent=0
    #allocation3 [shape = 'u8[131072]{0}', space=vmem, size = 0x20000, scoped, tag = 'input window, operand 1, single buffered']
    #allocation4 [shape = 's32[1]{0}', space=sflag, size = 0x4, scoped, tag = 'scoped memory for flash_roberta_layer.7']
    #allocation5 [shape = 'u8[1024]{0}', space=vmem, size = 0x400, scoped, tag = 'input window, operand 2, single buffered']
    #allocation6 [shape = 's32[1]{0}', space=sflag, size = 0x4, scoped, tag = 'scoped memory for flash_roberta_layer.7']
    #allocation7 [shape = 'u8[32768]{0}', space=vmem, size = 0x8000, scoped, tag = 'input window, operand 3, single buffered']
    #allocation8 [shape = 'u8[1024]{0}', space=vmem, size = 0x400, scoped, tag = 'input window, operand 4, single buffered']
    #allocation9 [shape = 's32[1]{0}', space=sflag, size = 0x4, scoped, tag = 'scoped memory for flash_roberta_layer.7']
    #allocation10 [shape = 'u8[1024]{0}', space=vmem, size = 0x400, scoped, tag = 'input window, operand 5, single buffered']
    %11 = vsyncpa [#allocation4], 0
    %12 = vsyncpa [#allocation6], 0
    %13 = vsyncpa [#allocation9], 0
    // Predicated region
    $region2: #{flash_roberta_layer.7} parent=1 // pred_check
      _
    $region3: #{flash_roberta_layer.7} parent=1 // pred_check_branch
      %15 = sbr.rel (0) target = $region5
    $region4: #{flash_roberta_layer.7} parent=1 // pred_region
      _
    $region5: #{flash_roberta_layer.7} parent=1 // pred_fallthru
      _
    // Predicated region
    $region6: #{flash_roberta_layer.7} parent=1 // pred_check
      _
    $region7: #{flash_roberta_layer.7} parent=1 // pred_check_branch
      %17 = sbr.rel (0) target = $region9
    $region8: #{flash_roberta_layer.7} parent=1 // pred_region
      %19 = vsyncadd [#allocation4], 0
      %s20 = sshll.u32 %s1, 4
      %s21 = int_to_ptr.hbm [resolvable:$true] %s20
      %s22 = sshll.u32 [#allocation3], 4
      %s23 = int_to_ptr.vmem [resolvable:$true] %s22
      %28 = dma.hbm_to_vmem [thread:$0]  %s21, 4096, %s23, [#allocation4], 128, 128, 8
    $region9: #{flash_roberta_layer.7} parent=1 // pred_fallthru
      _
    // Predicated region
    $region10: #{flash_roberta_layer.7} parent=1 // pred_check
      _
    $region11: #{flash_roberta_layer.7} parent=1 // pred_check_branch
      %30 = sbr.rel (0) target = $region13
    $region12: #{flash_roberta_layer.7} parent=1 // pred_region
      %32 = vsyncadd [#allocation6], 0
      %s34 = sshll.u32 %s2, 4
      %s35 = int_to_ptr.hbm [resolvable:$true] %s34
      %s36 = sshll.u32 [#allocation5], 4
      %s37 = int_to_ptr.vmem [resolvable:$true] %s36
      %39 = dma.hbm_to_vmem [thread:$0]  %s35, 32, %s37, [#allocation6]
    $region13: #{flash_roberta_layer.7} parent=1 // pred_fallthru
      _
    // Predicated region
    $region14: #{flash_roberta_layer.7} parent=1 // pred_check
      _
    $region15: #{flash_roberta_layer.7} parent=1 // pred_check_branch
      %41 = sbr.rel (0) target = $region17
    $region16: #{flash_roberta_layer.7} parent=1 // pred_region
      %43 = vsyncadd [#allocation6], 0
      %s44 = sshll.u32 %s3, 4
      %s45 = int_to_ptr.hbm [resolvable:$true] %s44
      %s46 = sshll.u32 [#allocation7], 4
      %s47 = int_to_ptr.vmem [resolvable:$true] %s46
      %52 = dma.hbm_to_vmem [thread:$0]  %s45, 1024, %s47, [#allocation6], 256, 256, 16
    $region17: #{flash_roberta_layer.7} parent=1 // pred_fallthru
      _
    // Predicated region
    $region18: #{flash_roberta_layer.7} parent=1 // pred_check
      _
    $region19: #{flash_roberta_layer.7} parent=1 // pred_check_branch
      %54 = sbr.rel (0) target = $region21
    $region20: #{flash_roberta_layer.7} parent=1 // pred_region
      %56 = vsyncadd [#allocation9], 0
      %s58 = sshll.u32 %s4, 4
      %s59 = int_to_ptr.hbm [resolvable:$true] %s58
      %s60 = sshll.u32 [#allocation8], 4
      %s61 = int_to_ptr.vmem [resolvable:$true] %s60
      %63 = dma.hbm_to_vmem [thread:$0]  %s59, 32, %s61, [#allocation9]
    $region21: #{flash_roberta_layer.7} parent=1 // pred_fallthru
      _
    // Predicated region
    $region22: #{flash_roberta_layer.7} parent=1 // pred_check
      _
    $region23: #{flash_roberta_layer.7} parent=1 // pred_check_branch
      %65 = sbr.rel (0) target = $region25
    $region24: #{flash_roberta_layer.7} parent=1 // pred_region
      %67 = vsyncadd [#allocation9], 0
      %s69 = sshll.u32 %s5, 4
      %s70 = int_to_ptr.hbm [resolvable:$true] %s69
      %s71 = sshll.u32 [#allocation10], 4
      %s72 = int_to_ptr.vmem [resolvable:$true] %s71
      %74 = dma.hbm_to_vmem [thread:$0]  %s70, 32, %s72, [#allocation9]
    $region25: #{flash_roberta_layer.7} parent=1 // pred_fallthru
      _
    // Predicated region
    $region26: #{flash_roberta_layer.7} parent=1 // pred_check
      _
    $region27: #{flash_roberta_layer.7} parent=1 // pred_check_branch
      %76 = sbr.rel (0) target = $region29
    $region28: #{flash_roberta_layer.7} parent=1 // pred_region
      %78 = dma.done [#allocation4], 4096
    $region29: #{flash_roberta_layer.7} parent=1 // pred_fallthru
      _
    // Predicated region
    $region30: #{flash_roberta_layer.7} parent=1 // pred_check
      _
    $region31: #{flash_roberta_layer.7} parent=1 // pred_check_branch
      %80 = sbr.rel (0) target = $region33
    $region32: #{flash_roberta_layer.7} parent=1 // pred_region
      %82 = dma.done [#allocation6], 32
    $region33: #{flash_roberta_layer.7} parent=1 // pred_fallthru
      _
    // Predicated region
    $region34: #{flash_roberta_layer.7} parent=1 // pred_check
      _
    $region35: #{flash_roberta_layer.7} parent=1 // pred_check_branch
      %84 = sbr.rel (0) target = $region37
    $region36: #{flash_roberta_layer.7} parent=1 // pred_region
      %86 = dma.done [#allocation6], 1024
    $region37: #{flash_roberta_layer.7} parent=1 // pred_fallthru
      _
    // Predicated region
    $region38: #{flash_roberta_layer.7} parent=1 // pred_check
      _
    $region39: #{flash_roberta_layer.7} parent=1 // pred_check_branch
      %88 = sbr.rel (0) target = $region41
    $region40: #{flash_roberta_layer.7} parent=1 // pred_region
      %90 = dma.done [#allocation9], 32
    $region41: #{flash_roberta_layer.7} parent=1 // pred_fallthru
      _
    // Predicated region
    $region42: #{flash_roberta_layer.7} parent=1 // pred_check
      _
    $region43: #{flash_roberta_layer.7} parent=1 // pred_check_branch
      %92 = sbr.rel (0) target = $region45
    $region44: #{flash_roberta_layer.7} parent=1 // pred_region
      %94 = dma.done [#allocation9], 32
    $region45: #{flash_roberta_layer.7} parent=1 // pred_fallthru
      _
    %p95 = scmp.eq.s32.totalorder 0, 0
    // Predicated region
    $region46: #{flash_roberta_layer.7} parent=1 // pred_check
      %p96 = pneg %p95
    $region47: #{flash_roberta_layer.7} parent=1 // pred_check_branch
      %98 = sbr.rel (%p96) target = $region49
    $region48: #{flash_roberta_layer.7} parent=1 // pred_region
      %99 = vst [vmem:[#allocation2] sm:$0xff] 0.0
      %100 = vst [vmem:[#allocation2 + $0x8] sm:$0xff] 0.0
      %101 = vst [vmem:[#allocation2 + $0x10] sm:$0xff] 0.0
      %102 = vst [vmem:[#allocation2 + $0x18] sm:$0xff] 0.0
      %103 = vst [vmem:[#allocation2 + $0x20] sm:$0xff] 0.0
      %104 = vst [vmem:[#allocation2 + $0x28] sm:$0xff] 0.0
      %105 = vst [vmem:[#allocation2 + $0x30] sm:$0xff] 0.0
      %106 = vst [vmem:[#allocation2 + $0x38] sm:$0xff] 0.0
    $region49: #{flash_roberta_layer.7} parent=1 // pred_fallthru
      _
    %v107 = vld [vmem:[#allocation2] sm:$0xff]
    %v108 = vld [vmem:[#allocation2 + $0x8] sm:$0xff]
    %v109 = vld [vmem:[#allocation2 + $0x10] sm:$0xff]
    %v110 = vld [vmem:[#allocation2 + $0x18] sm:$0xff]
    %v111 = vld [vmem:[#allocation2 + $0x20] sm:$0xff]
    %v112 = vld [vmem:[#allocation2 + $0x28] sm:$0xff]
    %v113 = vld [vmem:[#allocation2 + $0x30] sm:$0xff]
    %v114 = vld [vmem:[#allocation2 + $0x38] sm:$0xff]
    %v115 = vld [vmem:[%s0] sm:$0xff]
    %v116 = vld [vmem:[%s0 + $0x8] sm:$0xff]
    %v117 = vld [vmem:[%s0 + $0x10] sm:$0xff]
    %v118 = vld [vmem:[%s0 + $0x18] sm:$0xff]
    %v119 = vld [vmem:[%s0 + $0x20] sm:$0xff]
    %v120 = vld [vmem:[%s0 + $0x28] sm:$0xff]
    %v121 = vld [vmem:[%s0 + $0x30] sm:$0xff]
    %v122 = vld [vmem:[%s0 + $0x38] sm:$0xff]
    %v123 = vpack.c.bf16 %v117, %v115
    %v124 = vpack.c.bf16 %v118, %v116
    %v125 = vpack.c.bf16 %v121, %v119
    %v126 = vpack.c.bf16 %v122, %v120
    %v127 = vld [vmem:[#allocation3] sm:$0xff]
    %v128 = vld [vmem:[#allocation3 + $0x8] sm:$0xff]
    %v129 = vld [vmem:[#allocation3 + $0x10] sm:$0xff]
    %v130 = vld [vmem:[#allocation3 + $0x18] sm:$0xff]
    %v131 = vld [vmem:[#allocation3 + $0x20] sm:$0xff]
    %v132 = vld [vmem:[#allocation3 + $0x28] sm:$0xff]
    %v133 = vld [vmem:[#allocation3 + $0x30] sm:$0xff]
    %v134 = vld [vmem:[#allocation3 + $0x38] sm:$0xff]
    %v135 = vld [vmem:[#allocation3 + $0x40] sm:$0xff]
    %v136 = vld [vmem:[#allocation3 + $0x48] sm:$0xff]
    %v137 = vld [vmem:[#allocation3 + $0x50] sm:$0xff]
    %v138 = vld [vmem:[#allocation3 + $0x58] sm:$0xff]
    %v139 = vld [vmem:[#allocation3 + $0x60] sm:$0xff]
    %v140 = vld [vmem:[#allocation3 + $0x68] sm:$0xff]
    %v141 = vld [vmem:[#allocation3 + $0x70] sm:$0xff]
    %v142 = vld [vmem:[#allocation3 + $0x78] sm:$0xff]
    %v143 = vld [vmem:[#allocation3 + $0x80] sm:$0xff]
    %v144 = vld [vmem:[#allocation3 + $0x88] sm:$0xff]
    %v145 = vld [vmem:[#allocation3 + $0x90] sm:$0xff]
    %v146 = vld [vmem:[#allocation3 + $0x98] sm:$0xff]
    %v147 = vld [vmem:[#allocation3 + $0xa0] sm:$0xff]
    %v148 = vld [vmem:[#allocation3 + $0xa8] sm:$0xff]
    %v149 = vld [vmem:[#allocation3 + $0xb0] sm:$0xff]
    %v150 = vld [vmem:[#allocation3 + $0xb8] sm:$0xff]
    %v151 = vld [vmem:[#allocation3 + $0xc0] sm:$0xff]
    %v152 = vld [vmem:[#allocation3 + $0xc8] sm:$0xff]
    %v153 = vld [vmem:[#allocation3 + $0xd0] sm:$0xff]
    %v154 = vld [vmem:[#allocation3 + $0xd8] sm:$0xff]
    %v155 = vld [vmem:[#allocation3 + $0xe0] sm:$0xff]
    %v156 = vld [vmem:[#allocation3 + $0xe8] sm:$0xff]
    %v157 = vld [vmem:[#allocation3 + $0xf0] sm:$0xff]
    %v158 = vld [vmem:[#allocation3 + $0xf8] sm:$0xff]
    %v191 = vunpack.c.l.b16 %v127
    %v192 = vunpack.c.h.b16 %v127
    %v193 = vunpack.c.l.b16 %v128
    %v194 = vunpack.c.h.b16 %v128
    %v195 = vunpack.c.l.b16 %v129
    %v196 = vunpack.c.h.b16 %v129
    %v197 = vunpack.c.l.b16 %v130
    %v198 = vunpack.c.h.b16 %v130
    %v199 = vunpack.c.l.b16 %v131
    %v200 = vunpack.c.h.b16 %v131
    %v201 = vunpack.c.l.b16 %v132
    %v202 = vunpack.c.h.b16 %v132
    %v203 = vunpack.c.l.b16 %v133
    %v204 = vunpack.c.h.b16 %v133
    %v205 = vunpack.c.l.b16 %v134
    %v206 = vunpack.c.h.b16 %v134
    %v207 = vunpack.c.l.b16 %v135
    %v208 = vunpack.c.h.b16 %v135
    %v209 = vunpack.c.l.b16 %v136
    %v210 = vunpack.c.h.b16 %v136
    %v211 = vunpack.c.l.b16 %v137
    %v212 = vunpack.c.h.b16 %v137
    %v213 = vunpack.c.l.b16 %v138
    %v214 = vunpack.c.h.b16 %v138
    %v215 = vunpack.c.l.b16 %v139
    %v216 = vunpack.c.h.b16 %v139
    %v217 = vunpack.c.l.b16 %v140
    %v218 = vunpack.c.h.b16 %v140
    %v219 = vunpack.c.l.b16 %v141
    %v220 = vunpack.c.h.b16 %v141
    %v221 = vunpack.c.l.b16 %v142
    %v222 = vunpack.c.h.b16 %v142
    %v223 = vunpack.c.l.b16 %v143
    %v224 = vunpack.c.h.b16 %v143
    %v225 = vunpack.c.l.b16 %v144
    %v226 = vunpack.c.h.b16 %v144
    %v227 = vunpack.c.l.b16 %v145
    %v228 = vunpack.c.h.b16 %v145
    %v229 = vunpack.c.l.b16 %v146
    %v230 = vunpack.c.h.b16 %v146
    %v231 = vunpack.c.l.b16 %v147
    %v232 = vunpack.c.h.b16 %v147
    %v233 = vunpack.c.l.b16 %v148
    %v234 = vunpack.c.h.b16 %v148
    %v235 = vunpack.c.l.b16 %v149
    %v236 = vunpack.c.h.b16 %v149
    %v237 = vunpack.c.l.b16 %v150
    %v238 = vunpack.c.h.b16 %v150
    %v239 = vunpack.c.l.b16 %v151
    %v240 = vunpack.c.h.b16 %v151
    %v241 = vunpack.c.l.b16 %v152
    %v242 = vunpack.c.h.b16 %v152
    %v243 = vunpack.c.l.b16 %v153
    %v244 = vunpack.c.h.b16 %v153
    %v245 = vunpack.c.l.b16 %v154
    %v246 = vunpack.c.h.b16 %v154
    %v247 = vunpack.c.l.b16 %v155
    %v248 = vunpack.c.h.b16 %v155
    %v249 = vunpack.c.l.b16 %v156
    %v250 = vunpack.c.h.b16 %v156
    %v251 = vunpack.c.l.b16 %v157
    %v252 = vunpack.c.h.b16 %v157
    %v253 = vunpack.c.l.b16 %v158
    %v254 = vunpack.c.h.b16 %v158
    %v255 = vpack.c.b16 %v193, %v191
    %v256 = vpack.c.b16 %v194, %v192
    %v257 = vpack.c.b16 %v197, %v195
    %v258 = vpack.c.b16 %v198, %v196
    %v259 = vpack.c.b16 %v201, %v199
    %v260 = vpack.c.b16 %v202, %v200
    %v261 = vpack.c.b16 %v205, %v203
    %v262 = vpack.c.b16 %v206, %v204
    %v263 = vpack.c.b16 %v209, %v207
    %v264 = vpack.c.b16 %v210, %v208
    %v265 = vpack.c.b16 %v213, %v211
    %v266 = vpack.c.b16 %v214, %v212
    %v267 = vpack.c.b16 %v217, %v215
    %v268 = vpack.c.b16 %v218, %v216
    %v269 = vpack.c.b16 %v221, %v219
    %v270 = vpack.c.b16 %v222, %v220
    %v271 = vpack.c.b16 %v225, %v223
    %v272 = vpack.c.b16 %v226, %v224
    %v273 = vpack.c.b16 %v229, %v227
    %v274 = vpack.c.b16 %v230, %v228
    %v275 = vpack.c.b16 %v233, %v231
    %v276 = vpack.c.b16 %v234, %v232
    %v277 = vpack.c.b16 %v237, %v235
    %v278 = vpack.c.b16 %v238, %v236
    %v279 = vpack.c.b16 %v241, %v239
    %v280 = vpack.c.b16 %v242, %v240
    %v281 = vpack.c.b16 %v245, %v243
    %v282 = vpack.c.b16 %v246, %v244
    %v283 = vpack.c.b16 %v249, %v247
    %v284 = vpack.c.b16 %v250, %v248
    %v285 = vpack.c.b16 %v253, %v251
    %v286 = vpack.c.b16 %v254, %v252
    %319 = vmatpush.bf16.msra.mxu0 %v269
    %320 = vmatpush.bf16.msra.mxu0 %v267
    %321 = vmatpush.bf16.msra.mxu0 %v265
    %322 = vmatpush.bf16.msra.mxu0 %v263
    %323 = vmatpush.bf16.msra.mxu0 %v261
    %324 = vmatpush.bf16.msra.mxu0 %v259
    %325 = vmatpush.bf16.msra.mxu0 %v257
    %326 = vmatpush.bf16.msra.mxu0 %v255
    %327 = vmatmul.bf16.gmra.mxu0 %v123
    %v328 = vpop.f32.mrf.mxu0
    %v329 = vadd.f32 0.0, %v328
    %v330 = vpop.f32.mrf.mxu0
    %v331 = vadd.f32 0.0, %v330
    %332 = vmatmul.bf16.gmra.mxu0 %v125
    %v333 = vpop.f32.mrf.mxu0
    %v334 = vadd.f32 0.0, %v333
    %v335 = vpop.f32.mrf.mxu0
    %v336 = vadd.f32 0.0, %v335
    %337 = vdwg.mxu0
    %338 = vmatpush.bf16.msra.mxu0 %v285
    %339 = vmatpush.bf16.msra.mxu0 %v283
    %340 = vmatpush.bf16.msra.mxu0 %v281
    %341 = vmatpush.bf16.msra.mxu0 %v279
    %342 = vmatpush.bf16.msra.mxu0 %v277
    %343 = vmatpush.bf16.msra.mxu0 %v275
    %344 = vmatpush.bf16.msra.mxu0 %v273
    %345 = vmatpush.bf16.msra.mxu0 %v271
    %346 = vmatmul.bf16.gmra.mxu0 %v124
    %v347 = vpop.f32.mrf.mxu0
    %v348 = vadd.f32 %v329, %v347
    %v349 = vpop.f32.mrf.mxu0
    %v350 = vadd.f32 %v331, %v349
    %351 = vmatmul.bf16.gmra.mxu0 %v126
    %v352 = vpop.f32.mrf.mxu0
    %v353 = vadd.f32 %v334, %v352
    %v354 = vpop.f32.mrf.mxu0
    %v355 = vadd.f32 %v336, %v354
    %356 = vdwg.mxu0
    %357 = vmatpush.bf16.msra.mxu0 %v270
    %358 = vmatpush.bf16.msra.mxu0 %v268
    %359 = vmatpush.bf16.msra.mxu0 %v266
    %360 = vmatpush.bf16.msra.mxu0 %v264
    %361 = vmatpush.bf16.msra.mxu0 %v262
    %362 = vmatpush.bf16.msra.mxu0 %v260
    %363 = vmatpush.bf16.msra.mxu0 %v258
    %364 = vmatpush.bf16.msra.mxu0 %v256
    %365 = vmatmul.bf16.gmra.mxu0 %v123
    %v366 = vpop.f32.mrf.mxu0
    %v367 = vadd.f32 0.0, %v366
    %v368 = vpop.f32.mrf.mxu0
    %v369 = vadd.f32 0.0, %v368
    %370 = vmatmul.bf16.gmra.mxu0 %v125
    %v371 = vpop.f32.mrf.mxu0
    %v372 = vadd.f32 0.0, %v371
    %v373 = vpop.f32.mrf.mxu0
    %v374 = vadd.f32 0.0, %v373
    %375 = vdwg.mxu0
    %376 = vmatpush.bf16.msra.mxu0 %v286
    %377 = vmatpush.bf16.msra.mxu0 %v284
    %378 = vmatpush.bf16.msra.mxu0 %v282
    %379 = vmatpush.bf16.msra.mxu0 %v280
    %380 = vmatpush.bf16.msra.mxu0 %v278
    %381 = vmatpush.bf16.msra.mxu0 %v276
    %382 = vmatpush.bf16.msra.mxu0 %v274
    %383 = vmatpush.bf16.msra.mxu0 %v272
    %384 = vmatmul.bf16.gmra.mxu0 %v124
    %v385 = vpop.f32.mrf.mxu0
    %v386 = vadd.f32 %v367, %v385
    %v387 = vpop.f32.mrf.mxu0
    %v388 = vadd.f32 %v369, %v387
    %389 = vmatmul.bf16.gmra.mxu0 %v126
    %v390 = vpop.f32.mrf.mxu0
    %v391 = vadd.f32 %v372, %v390
    %v392 = vpop.f32.mrf.mxu0
    %v393 = vadd.f32 %v374, %v392
    %394 = vdwg.mxu0
    %v395 = vadd.f32 %v107, %v348
    %v396 = vadd.f32 %v108, %v386
    %v397 = vadd.f32 %v109, %v350
    %v398 = vadd.f32 %v110, %v388
    %v399 = vadd.f32 %v111, %v353
    %v400 = vadd.f32 %v112, %v391
    %v401 = vadd.f32 %v113, %v355
    %v402 = vadd.f32 %v114, %v393
    %403 = vst [vmem:[#allocation2] sm:$0xff] %v395
    %404 = vst [vmem:[#allocation2 + $0x8] sm:$0xff] %v396
    %405 = vst [vmem:[#allocation2 + $0x10] sm:$0xff] %v397
    %406 = vst [vmem:[#allocation2 + $0x18] sm:$0xff] %v398
    %407 = vst [vmem:[#allocation2 + $0x20] sm:$0xff] %v399
    %408 = vst [vmem:[#allocation2 + $0x28] sm:$0xff] %v400
    %409 = vst [vmem:[#allocation2 + $0x30] sm:$0xff] %v401
    %410 = vst [vmem:[#allocation2 + $0x38] sm:$0xff] %v402
    // Predicated region
    $region50: #{flash_roberta_layer.7} parent=1 // pred_check
      %p411 = pneg %p95
    $region51: #{flash_roberta_layer.7} parent=1 // pred_check_branch
      %413 = sbr.rel (%p411) target = $region53
    $region52: #{flash_roberta_layer.7} parent=1 // pred_region
      %v414 = vld [vmem:[#allocation2] sm:$0xff]
      %v415 = vld [vmem:[#allocation2 + $0x8] sm:$0xff]
      %v416 = vld [vmem:[#allocation2 + $0x10] sm:$0xff]
      %v417 = vld [vmem:[#allocation2 + $0x18] sm:$0xff]
      %v418 = vld [vmem:[#allocation2 + $0x20] sm:$0xff]
      %v419 = vld [vmem:[#allocation2 + $0x28] sm:$0xff]
      %v420 = vld [vmem:[#allocation2 + $0x30] sm:$0xff]
      %v421 = vld [vmem:[#allocation2 + $0x38] sm:$0xff]
      %v422 = vld [vmem:[#allocation5] sm:$0x3]
      %v424 = vperm.slane %v422, 0
      %v425 = vperm.slane %v422, 1
      %v428 = vadd.f32 %v414, %v424
      %v429 = vadd.f32 %v415, %v425
      %v430 = vadd.f32 %v416, %v424
      %v431 = vadd.f32 %v417, %v425
      %v432 = vadd.f32 %v418, %v424
      %v433 = vadd.f32 %v419, %v425
      %v434 = vadd.f32 %v420, %v424
      %v435 = vadd.f32 %v421, %v425
      %v436 = vld [vmem:[#allocation7] sm:$0xff]
      %v437 = vld [vmem:[#allocation7 + $0x8] sm:$0xff]
      %v438 = vld [vmem:[#allocation7 + $0x10] sm:$0xff]
      %v439 = vld [vmem:[#allocation7 + $0x18] sm:$0xff]
      %v440 = vld [vmem:[#allocation7 + $0x20] sm:$0xff]
      %v441 = vld [vmem:[#allocation7 + $0x28] sm:$0xff]
      %v442 = vld [vmem:[#allocation7 + $0x30] sm:$0xff]
      %v443 = vld [vmem:[#allocation7 + $0x38] sm:$0xff]
      %v444 = vadd.f32 %v428, %v436
      %v445 = vadd.f32 %v429, %v437
      %v446 = vadd.f32 %v430, %v438
      %v447 = vadd.f32 %v431, %v439
      %v448 = vadd.f32 %v432, %v440
      %v449 = vadd.f32 %v433, %v441
      %v450 = vadd.f32 %v434, %v442
      %v451 = vadd.f32 %v435, %v443
      %v452 = vadd.f32 %v444, %v445
      %453 = vadd.xlane.f32.xlu0 %v452
      %v454 = vpop.xlane.xlu0 %453
      %v455 = vadd.f32 %v446, %v447
      %456 = vadd.xlane.f32.xlu0 %v455
      %v457 = vpop.xlane.xlu0 %456
      %v458 = vadd.f32 %v448, %v449
      %459 = vadd.xlane.f32.xlu0 %v458
      %v460 = vpop.xlane.xlu0 %459
      %v461 = vadd.f32 %v450, %v451
      %462 = vadd.xlane.f32.xlu0 %v461
      %v463 = vpop.xlane.xlu0 %462
      %v464 = vrcp.pop 256.0
      %v465 = vmul.f32 256.0, %v464
      %v466 = vsub.f32 1.0, %v465
      %v467 = vmul.f32 %v464, %v466
      %v468 = vadd.f32 %v464, %v467
      %vm469 = vweird.f32 %v464
      %v470 = vsel %vm469, %v464, %v468
      %v471 = vmul.f32 %v454, %v470
      %v472 = vmul.f32 %v457, %v470
      %v473 = vmul.f32 %v460, %v470
      %v474 = vmul.f32 %v463, %v470
      %v475 = vsub.f32 %v444, %v471
      %v476 = vsub.f32 %v445, %v471
      %v477 = vsub.f32 %v446, %v472
      %v478 = vsub.f32 %v447, %v472
      %v479 = vsub.f32 %v448, %v473
      %v480 = vsub.f32 %v449, %v473
      %v481 = vsub.f32 %v450, %v474
      %v482 = vsub.f32 %v451, %v474
      %v483 = vmul.f32 %v475, %v475
      %v484 = vmul.f32 %v476, %v476
      %v485 = vmul.f32 %v477, %v477
      %v486 = vmul.f32 %v478, %v478
      %v487 = vmul.f32 %v479, %v479
      %v488 = vmul.f32 %v480, %v480
      %v489 = vmul.f32 %v481, %v481
      %v490 = vmul.f32 %v482, %v482
      %v491 = vadd.f32 %v483, %v484
      %492 = vadd.xlane.f32.xlu0 %v491
      %v493 = vpop.xlane.xlu0 %492
      %v494 = vadd.f32 %v485, %v486
      %495 = vadd.xlane.f32.xlu0 %v494
      %v496 = vpop.xlane.xlu0 %495
      %v497 = vadd.f32 %v487, %v488
      %498 = vadd.xlane.f32.xlu0 %v497
      %v499 = vpop.xlane.xlu0 %498
      %v500 = vadd.f32 %v489, %v490
      %501 = vadd.xlane.f32.xlu0 %v500
      %v502 = vpop.xlane.xlu0 %501
      %v503 = vmul.f32 %v493, %v470
      %v504 = vmul.f32 %v496, %v470
      %v505 = vmul.f32 %v499, %v470
      %v506 = vmul.f32 %v502, %v470
      %v507 = vadd.f32 %v503, 1e-05
      %v508 = vadd.f32 %v504, 1e-05
      %v509 = vadd.f32 %v505, 1e-05
      %v510 = vadd.f32 %v506, 1e-05
      %v511 = vrsqrt.pop %v507
      %v512 = vmul.f32 %v511, %v507
      %v513 = vmul.f32 %v512, %v511
      %v514 = vmul.f32 0.5, %v513
      %v515 = vsub.f32 1.5, %v514
      %v516 = vmul.f32 %v511, %v515
      %vm517 = vweird.f32 %v507
      %vm518 = vweird.f32 %v511
      %vm519 = vmor %vm517, %vm518
      %v520 = vsel %vm519, %v511, %v516
      %v521 = vrsqrt.pop %v508
      %v522 = vmul.f32 %v521, %v508
      %v523 = vmul.f32 %v522, %v521
      %v524 = vmul.f32 0.5, %v523
      %v525 = vsub.f32 1.5, %v524
      %v526 = vmul.f32 %v521, %v525
      %vm527 = vweird.f32 %v508
      %vm528 = vweird.f32 %v521
      %vm529 = vmor %vm527, %vm528
      %v530 = vsel %vm529, %v521, %v526
      %v531 = vrsqrt.pop %v509
      %v532 = vmul.f32 %v531, %v509
      %v533 = vmul.f32 %v532, %v531
      %v534 = vmul.f32 0.5, %v533
      %v535 = vsub.f32 1.5, %v534
      %v536 = vmul.f32 %v531, %v535
      %vm537 = vweird.f32 %v509
      %vm538 = vweird.f32 %v531
      %vm539 = vmor %vm537, %vm538
      %v540 = vsel %vm539, %v531, %v536
      %v541 = vrsqrt.pop %v510
      %v542 = vmul.f32 %v541, %v510
      %v543 = vmul.f32 %v542, %v541
      %v544 = vmul.f32 0.5, %v543
      %v545 = vsub.f32 1.5, %v544
      %v546 = vmul.f32 %v541, %v545
      %vm547 = vweird.f32 %v510
      %vm548 = vweird.f32 %v541
      %vm549 = vmor %vm547, %vm548
      %v550 = vsel %vm549, %v541, %v546
      %v551 = vmul.f32 %v475, %v520
      %v552 = vmul.f32 %v476, %v520
      %v553 = vmul.f32 %v477, %v530
      %v554 = vmul.f32 %v478, %v530
      %v555 = vmul.f32 %v479, %v540
      %v556 = vmul.f32 %v480, %v540
      %v557 = vmul.f32 %v481, %v550
      %v558 = vmul.f32 %v482, %v550
      %v559 = vld [vmem:[#allocation8] sm:$0x3]
      %v561 = vperm.slane %v559, 0
      %v562 = vperm.slane %v559, 1
      %v565 = vmul.f32 %v551, %v561
      %v566 = vmul.f32 %v552, %v562
      %v567 = vmul.f32 %v553, %v561
      %v568 = vmul.f32 %v554, %v562
      %v569 = vmul.f32 %v555, %v561
      %v570 = vmul.f32 %v556, %v562
      %v571 = vmul.f32 %v557, %v561
      %v572 = vmul.f32 %v558, %v562
      %v573 = vld [vmem:[#allocation10] sm:$0x3]
      %v575 = vperm.slane %v573, 0
      %v576 = vperm.slane %v573, 1
      %v579 = vadd.f32 %v565, %v575
      %v580 = vadd.f32 %v566, %v576
      %v581 = vadd.f32 %v567, %v575
      %v582 = vadd.f32 %v568, %v576
      %v583 = vadd.f32 %v569, %v575
      %v584 = vadd.f32 %v570, %v576
      %v585 = vadd.f32 %v571, %v575
      %v586 = vadd.f32 %v572, %v576
      %587 = vst [vmem:[%s6] sm:$0xff] %v579
      %588 = vst [vmem:[%s6 + $0x8] sm:$0xff] %v580
      %589 = vst [vmem:[%s6 + $0x10] sm:$0xff] %v581
      %590 = vst [vmem:[%s6 + $0x18] sm:$0xff] %v582
      %591 = vst [vmem:[%s6 + $0x20] sm:$0xff] %v583
      %592 = vst [vmem:[%s6 + $0x28] sm:$0xff] %v584
      %593 = vst [vmem:[%s6 + $0x30] sm:$0xff] %v585
      %594 = vst [vmem:[%s6 + $0x38] sm:$0xff] %v586
    $region53: #{flash_roberta_layer.7} parent=1 // pred_fallthru
      _
    // Predicated region
    $region54: #{flash_roberta_layer.7} parent=1 // pred_check
      _
    $region55: #{flash_roberta_layer.7} parent=1 // pred_check_branch
      %596 = sbr.rel (0) target = $region57
    $region56: #{flash_roberta_layer.7} parent=1 // pred_region
      _
    $region57: #{flash_roberta_layer.7} parent=1 // pred_fallthru
      _
    // Predicated region
    $region58: #{flash_roberta_layer.7} parent=1 // pred_check
      _
    $region59: #{flash_roberta_layer.7} parent=1 // pred_check_branch
      %598 = sbr.rel (0) target = $region61
    $region60: #{flash_roberta_layer.7} parent=1 // pred_region
      _
    $region61: #{flash_roberta_layer.7} parent=1 // pred_fallthru
      _
    %599 = vsyncpa [#allocation4], 1
    %600 = vsyncpa [#allocation6], 1
    %601 = vsyncpa [#allocation9], 1

// kernel: flash_roberta_layer.8
$region0: #{flash_roberta_layer.8}
  #allocation0 [shape = 'u32[]', space=smem, size = 0x4, offset = 0x4, fixed_abs, tag = 'smem constant byte address 0x4 - core index']
  #allocation1 [shape = 'u32[72,128]{1,0:T(1,128)}', space=vmem, size = 0x9000, scoped, tag = 'internal scratch']
  #allocation2 [shape = 'f32[32,512]{1,0:T(8,128)}', space=vmem, size = 0x10000, scoped, tag = 'scratch operand']
  #allocation3 [shape = 'f32[1,1]{1,0:T(1,128)S(6)}', space=smem, size = 0x200, scoped, tag = 'scoped memory for flash_roberta_layer.8']
  %s0 = inlined_call_operand.vmem [shape: f32[32,256], index: 0, kind: input, shape index: {}]
  %s1 = inlined_call_operand.hbm [shape: bf16[256,512], index: 1, kind: input, shape index: {}]
  %s2 = inlined_call_operand.vmem [shape: f32[1,512], index: 2, kind: input, shape index: {}]
  %s3 = inlined_call_operand.<no memory space> [shape: f32[1,1], index: 3, kind: input, shape index: {}]
  %s4 = inlined_call_operand.vmem [shape: f32[32,512], index: 4, kind: output, shape index: {}]
  %s5 = sld [smem:[#allocation0]]
  $region38: #{flash_roberta_layer.8} parent=0
    _
  %s7 = ssub.s32 1, %s5
  %s8 = scalar_select 0, %s7, %s5
  %9 = sst [smem:[#allocation3]] %s3
  $region1: #{flash_roberta_layer.8} parent=0
    #allocation4 [shape = 'u8[262144]{0}', space=vmem, size = 0x40000, scoped, tag = 'input window, operand 1, single buffered']
    #allocation5 [shape = 's32[1]{0}', space=sflag, size = 0x4, scoped, tag = 'scoped memory for flash_roberta_layer.8']
    %10 = vsyncpa [#allocation5], 0
    // Predicated region
    $region2: #{flash_roberta_layer.8} parent=1 // pred_check
      _
    $region3: #{flash_roberta_layer.8} parent=1 // pred_check_branch
      %12 = sbr.rel (0) target = $region5
    $region4: #{flash_roberta_layer.8} parent=1 // pred_region
      _
    $region5: #{flash_roberta_layer.8} parent=1 // pred_fallthru
      _
    // Predicated region
    $region6: #{flash_roberta_layer.8} parent=1 // pred_check
      _
    $region7: #{flash_roberta_layer.8} parent=1 // pred_check_branch
      %14 = sbr.rel (0) target = $region9
    $region8: #{flash_roberta_layer.8} parent=1 // pred_region
      %16 = vsyncadd [#allocation5], 0
      %s17 = sshll.u32 %s1, 4
      %s18 = int_to_ptr.hbm [resolvable:$true] %s17
      %s19 = sshll.u32 [#allocation4], 4
      %s20 = int_to_ptr.vmem [resolvable:$true] %s19
      %25 = dma.hbm_to_vmem [thread:$0]  %s18, 8192, %s20, [#allocation5], 256, 256, 16
    $region9: #{flash_roberta_layer.8} parent=1 // pred_fallthru
      _
    // Predicated region
    $region10: #{flash_roberta_layer.8} parent=1 // pred_check
      _
    $region11: #{flash_roberta_layer.8} parent=1 // pred_check_branch
      %27 = sbr.rel (0) target = $region13
    $region12: #{flash_roberta_layer.8} parent=1 // pred_region
      _
    $region13: #{flash_roberta_layer.8} parent=1 // pred_fallthru
      _
    // Predicated region
    $region14: #{flash_roberta_layer.8} parent=1 // pred_check
      _
    $region15: #{flash_roberta_layer.8} parent=1 // pred_check_branch
      %29 = sbr.rel (0) target = $region17
    $region16: #{flash_roberta_layer.8} parent=1 // pred_region
      _
    $region17: #{flash_roberta_layer.8} parent=1 // pred_fallthru
      _
    // Predicated region
    $region18: #{flash_roberta_layer.8} parent=1 // pred_check
      _
    $region19: #{flash_roberta_layer.8} parent=1 // pred_check_branch
      %31 = sbr.rel (0) target = $region21
    $region20: #{flash_roberta_layer.8} parent=1 // pred_region
      %33 = dma.done [#allocation5], 8192
    $region21: #{flash_roberta_layer.8} parent=1 // pred_fallthru
      _
    %p34 = scmp.eq.s32.totalorder 0, 0
    // Predicated region
    $region22: #{flash_roberta_layer.8} parent=1 // pred_check
      %p35 = pneg %p34
    $region23: #{flash_roberta_layer.8} parent=1 // pred_check_branch
      %37 = sbr.rel (%p35) target = $region25
    $region24: #{flash_roberta_layer.8} parent=1 // pred_region
      %38 = vst [vmem:[#allocation2] sm:$0xff] 0.0
      %39 = vst [vmem:[#allocation2 + $0x8] sm:$0xff] 0.0
      %40 = vst [vmem:[#allocation2 + $0x10] sm:$0xff] 0.0
      %41 = vst [vmem:[#allocation2 + $0x18] sm:$0xff] 0.0
      %42 = vst [vmem:[#allocation2 + $0x20] sm:$0xff] 0.0
      %43 = vst [vmem:[#allocation2 + $0x28] sm:$0xff] 0.0
      %44 = vst [vmem:[#allocation2 + $0x30] sm:$0xff] 0.0
      %45 = vst [vmem:[#allocation2 + $0x38] sm:$0xff] 0.0
      %46 = vst [vmem:[#allocation2 + $0x40] sm:$0xff] 0.0
      %47 = vst [vmem:[#allocation2 + $0x48] sm:$0xff] 0.0
      %48 = vst [vmem:[#allocation2 + $0x50] sm:$0xff] 0.0
      %49 = vst [vmem:[#allocation2 + $0x58] sm:$0xff] 0.0
      %50 = vst [vmem:[#allocation2 + $0x60] sm:$0xff] 0.0
      %51 = vst [vmem:[#allocation2 + $0x68] sm:$0xff] 0.0
      %52 = vst [vmem:[#allocation2 + $0x70] sm:$0xff] 0.0
      %53 = vst [vmem:[#allocation2 + $0x78] sm:$0xff] 0.0
    $region25: #{flash_roberta_layer.8} parent=1 // pred_fallthru
      _
    %v54 = vld [vmem:[#allocation2] sm:$0xff]
    %v55 = vld [vmem:[#allocation2 + $0x8] sm:$0xff]
    %v56 = vld [vmem:[#allocation2 + $0x10] sm:$0xff]
    %v57 = vld [vmem:[#allocation2 + $0x18] sm:$0xff]
    %v58 = vld [vmem:[#allocation2 + $0x20] sm:$0xff]
    %v59 = vld [vmem:[#allocation2 + $0x28] sm:$0xff]
    %v60 = vld [vmem:[#allocation2 + $0x30] sm:$0xff]
    %v61 = vld [vmem:[#allocation2 + $0x38] sm:$0xff]
    %v62 = vld [vmem:[#allocation2 + $0x40] sm:$0xff]
    %v63 = vld [vmem:[#allocation2 + $0x48] sm:$0xff]
    %v64 = vld [vmem:[#allocation2 + $0x50] sm:$0xff]
    %v65 = vld [vmem:[#allocation2 + $0x58] sm:$0xff]
    %v66 = vld [vmem:[#allocation2 + $0x60] sm:$0xff]
    %v67 = vld [vmem:[#allocation2 + $0x68] sm:$0xff]
    %v68 = vld [vmem:[#allocation2 + $0x70] sm:$0xff]
    %v69 = vld [vmem:[#allocation2 + $0x78] sm:$0xff]
    %v70 = vld [vmem:[%s0] sm:$0xff]
    %v71 = vld [vmem:[%s0 + $0x8] sm:$0xff]
    %v72 = vld [vmem:[%s0 + $0x10] sm:$0xff]
    %v73 = vld [vmem:[%s0 + $0x18] sm:$0xff]
    %v74 = vld [vmem:[%s0 + $0x20] sm:$0xff]
    %v75 = vld [vmem:[%s0 + $0x28] sm:$0xff]
    %v76 = vld [vmem:[%s0 + $0x30] sm:$0xff]
    %v77 = vld [vmem:[%s0 + $0x38] sm:$0xff]
    %v78 = vpack.c.bf16 %v72, %v70
    %v79 = vpack.c.bf16 %v73, %v71
    %v80 = vpack.c.bf16 %v76, %v74
    %v81 = vpack.c.bf16 %v77, %v75
    %v82 = vld [vmem:[#allocation4] sm:$0xff]
    %v83 = vld [vmem:[#allocation4 + $0x8] sm:$0xff]
    %v84 = vld [vmem:[#allocation4 + $0x10] sm:$0xff]
    %v85 = vld [vmem:[#allocation4 + $0x18] sm:$0xff]
    %v86 = vld [vmem:[#allocation4 + $0x20] sm:$0xff]
    %v87 = vld [vmem:[#allocation4 + $0x28] sm:$0xff]
    %v88 = vld [vmem:[#allocation4 + $0x30] sm:$0xff]
    %v89 = vld [vmem:[#allocation4 + $0x38] sm:$0xff]
    %v90 = vld [vmem:[#allocation4 + $0x40] sm:$0xff]
    %v91 = vld [vmem:[#allocation4 + $0x48] sm:$0xff]
    %v92 = vld [vmem:[#allocation4 + $0x50] sm:$0xff]
    %v93 = vld [vmem:[#allocation4 + $0x58] sm:$0xff]
    %v94 = vld [vmem:[#allocation4 + $0x60] sm:$0xff]
    %v95 = vld [vmem:[#allocation4 + $0x68] sm:$0xff]
    %v96 = vld [vmem:[#allocation4 + $0x70] sm:$0xff]
    %v97 = vld [vmem:[#allocation4 + $0x78] sm:$0xff]
    %v98 = vld [vmem:[#allocation4 + $0x80] sm:$0xff]
    %v99 = vld [vmem:[#allocation4 + $0x88] sm:$0xff]
    %v100 = vld [vmem:[#allocation4 + $0x90] sm:$0xff]
    %v101 = vld [vmem:[#allocation4 + $0x98] sm:$0xff]
    %v102 = vld [vmem:[#allocation4 + $0xa0] sm:$0xff]
    %v103 = vld [vmem:[#allocation4 + $0xa8] sm:$0xff]
    %v104 = vld [vmem:[#allocation4 + $0xb0] sm:$0xff]
    %v105 = vld [vmem:[#allocation4 + $0xb8] sm:$0xff]
    %v106 = vld [vmem:[#allocation4 + $0xc0] sm:$0xff]
    %v107 = vld [vmem:[#allocation4 + $0xc8] sm:$0xff]
    %v108 = vld [vmem:[#allocation4 + $0xd0] sm:$0xff]
    %v109 = vld [vmem:[#allocation4 + $0xd8] sm:$0xff]
    %v110 = vld [vmem:[#allocation4 + $0xe0] sm:$0xff]
    %v111 = vld [vmem:[#allocation4 + $0xe8] sm:$0xff]
    %v112 = vld [vmem:[#allocation4 + $0xf0] sm:$0xff]
    %v113 = vld [vmem:[#allocation4 + $0xf8] sm:$0xff]
    %v114 = vld [vmem:[#allocation4 + $0x100] sm:$0xff]
    %v115 = vld [vmem:[#allocation4 + $0x108] sm:$0xff]
    %v116 = vld [vmem:[#allocation4 + $0x110] sm:$0xff]
    %v117 = vld [vmem:[#allocation4 + $0x118] sm:$0xff]
    %v118 = vld [vmem:[#allocation4 + $0x120] sm:$0xff]
    %v119 = vld [vmem:[#allocation4 + $0x128] sm:$0xff]
    %v120 = vld [vmem:[#allocation4 + $0x130] sm:$0xff]
    %v121 = vld [vmem:[#allocation4 + $0x138] sm:$0xff]
    %v122 = vld [vmem:[#allocation4 + $0x140] sm:$0xff]
    %v123 = vld [vmem:[#allocation4 + $0x148] sm:$0xff]
    %v124 = vld [vmem:[#allocation4 + $0x150] sm:$0xff]
    %v125 = vld [vmem:[#allocation4 + $0x158] sm:$0xff]
    %v126 = vld [vmem:[#allocation4 + $0x160] sm:$0xff]
    %v127 = vld [vmem:[#allocation4 + $0x168] sm:$0xff]
    %v128 = vld [vmem:[#allocation4 + $0x170] sm:$0xff]
    %v129 = vld [vmem:[#allocation4 + $0x178] sm:$0xff]
    %v130 = vld [vmem:[#allocation4 + $0x180] sm:$0xff]
    %v131 = vld [vmem:[#allocation4 + $0x188] sm:$0xff]
    %v132 = vld [vmem:[#allocation4 + $0x190] sm:$0xff]
    %v133 = vld [vmem:[#allocation4 + $0x198] sm:$0xff]
    %v134 = vld [vmem:[#allocation4 + $0x1a0] sm:$0xff]
    %v135 = vld [vmem:[#allocation4 + $0x1a8] sm:$0xff]
    %v136 = vld [vmem:[#allocation4 + $0x1b0] sm:$0xff]
    %v137 = vld [vmem:[#allocation4 + $0x1b8] sm:$0xff]
    %v138 = vld [vmem:[#allocation4 + $0x1c0] sm:$0xff]
    %v139 = vld [vmem:[#allocation4 + $0x1c8] sm:$0xff]
    %v140 = vld [vmem:[#allocation4 + $0x1d0] sm:$0xff]
    %v141 = vld [vmem:[#allocation4 + $0x1d8] sm:$0xff]
    %v142 = vld [vmem:[#allocation4 + $0x1e0] sm:$0xff]
    %v143 = vld [vmem:[#allocation4 + $0x1e8] sm:$0xff]
    %v144 = vld [vmem:[#allocation4 + $0x1f0] sm:$0xff]
    %v145 = vld [vmem:[#allocation4 + $0x1f8] sm:$0xff]
    %v210 = vunpack.c.l.b16 %v82
    %v211 = vunpack.c.h.b16 %v82
    %v212 = vunpack.c.l.b16 %v83
    %v213 = vunpack.c.h.b16 %v83
    %v214 = vunpack.c.l.b16 %v84
    %v215 = vunpack.c.h.b16 %v84
    %v216 = vunpack.c.l.b16 %v85
    %v217 = vunpack.c.h.b16 %v85
    %v218 = vunpack.c.l.b16 %v86
    %v219 = vunpack.c.h.b16 %v86
    %v220 = vunpack.c.l.b16 %v87
    %v221 = vunpack.c.h.b16 %v87
    %v222 = vunpack.c.l.b16 %v88
    %v223 = vunpack.c.h.b16 %v88
    %v224 = vunpack.c.l.b16 %v89
    %v225 = vunpack.c.h.b16 %v89
    %v226 = vunpack.c.l.b16 %v90
    %v227 = vunpack.c.h.b16 %v90
    %v228 = vunpack.c.l.b16 %v91
    %v229 = vunpack.c.h.b16 %v91
    %v230 = vunpack.c.l.b16 %v92
    %v231 = vunpack.c.h.b16 %v92
    %v232 = vunpack.c.l.b16 %v93
    %v233 = vunpack.c.h.b16 %v93
    %v234 = vunpack.c.l.b16 %v94
    %v235 = vunpack.c.h.b16 %v94
    %v236 = vunpack.c.l.b16 %v95
    %v237 = vunpack.c.h.b16 %v95
    %v238 = vunpack.c.l.b16 %v96
    %v239 = vunpack.c.h.b16 %v96
    %v240 = vunpack.c.l.b16 %v97
    %v241 = vunpack.c.h.b16 %v97
    %v242 = vunpack.c.l.b16 %v98
    %v243 = vunpack.c.h.b16 %v98
    %v244 = vunpack.c.l.b16 %v99
    %v245 = vunpack.c.h.b16 %v99
    %v246 = vunpack.c.l.b16 %v100
    %v247 = vunpack.c.h.b16 %v100
    %v248 = vunpack.c.l.b16 %v101
    %v249 = vunpack.c.h.b16 %v101
    %v250 = vunpack.c.l.b16 %v102
    %v251 = vunpack.c.h.b16 %v102
    %v252 = vunpack.c.l.b16 %v103
    %v253 = vunpack.c.h.b16 %v103
    %v254 = vunpack.c.l.b16 %v104
    %v255 = vunpack.c.h.b16 %v104
    %v256 = vunpack.c.l.b16 %v105
    %v257 = vunpack.c.h.b16 %v105
    %v258 = vunpack.c.l.b16 %v106
    %v259 = vunpack.c.h.b16 %v106
    %v260 = vunpack.c.l.b16 %v107
    %v261 = vunpack.c.h.b16 %v107
    %v262 = vunpack.c.l.b16 %v108
    %v263 = vunpack.c.h.b16 %v108
    %v264 = vunpack.c.l.b16 %v109
    %v265 = vunpack.c.h.b16 %v109
    %v266 = vunpack.c.l.b16 %v110
    %v267 = vunpack.c.h.b16 %v110
    %v268 = vunpack.c.l.b16 %v111
    %v269 = vunpack.c.h.b16 %v111
    %v270 = vunpack.c.l.b16 %v112
    %v271 = vunpack.c.h.b16 %v112
    %v272 = vunpack.c.l.b16 %v113
    %v273 = vunpack.c.h.b16 %v113
    %v274 = vunpack.c.l.b16 %v114
    %v275 = vunpack.c.h.b16 %v114
    %v276 = vunpack.c.l.b16 %v115
    %v277 = vunpack.c.h.b16 %v115
    %v278 = vunpack.c.l.b16 %v116
    %v279 = vunpack.c.h.b16 %v116
    %v280 = vunpack.c.l.b16 %v117
    %v281 = vunpack.c.h.b16 %v117
    %v282 = vunpack.c.l.b16 %v118
    %v283 = vunpack.c.h.b16 %v118
    %v284 = vunpack.c.l.b16 %v119
    %v285 = vunpack.c.h.b16 %v119
    %v286 = vunpack.c.l.b16 %v120
    %v287 = vunpack.c.h.b16 %v120
    %v288 = vunpack.c.l.b16 %v121
    %v289 = vunpack.c.h.b16 %v121
    %v290 = vunpack.c.l.b16 %v122
    %v291 = vunpack.c.h.b16 %v122
    %v292 = vunpack.c.l.b16 %v123
    %v293 = vunpack.c.h.b16 %v123
    %v294 = vunpack.c.l.b16 %v124
    %v295 = vunpack.c.h.b16 %v124
    %v296 = vunpack.c.l.b16 %v125
    %v297 = vunpack.c.h.b16 %v125
    %v298 = vunpack.c.l.b16 %v126
    %v299 = vunpack.c.h.b16 %v126
    %v300 = vunpack.c.l.b16 %v127
    %v301 = vunpack.c.h.b16 %v127
    %v302 = vunpack.c.l.b16 %v128
    %v303 = vunpack.c.h.b16 %v128
    %v304 = vunpack.c.l.b16 %v129
    %v305 = vunpack.c.h.b16 %v129
    %v306 = vunpack.c.l.b16 %v130
    %v307 = vunpack.c.h.b16 %v130
    %v308 = vunpack.c.l.b16 %v131
    %v309 = vunpack.c.h.b16 %v131
    %v310 = vunpack.c.l.b16 %v132
    %v311 = vunpack.c.h.b16 %v132
    %v312 = vunpack.c.l.b16 %v133
    %v313 = vunpack.c.h.b16 %v133
    %v314 = vunpack.c.l.b16 %v134
    %v315 = vunpack.c.h.b16 %v134
    %v316 = vunpack.c.l.b16 %v135
    %v317 = vunpack.c.h.b16 %v135
    %v318 = vunpack.c.l.b16 %v136
    %v319 = vunpack.c.h.b16 %v136
    %v320 = vunpack.c.l.b16 %v137
    %v321 = vunpack.c.h.b16 %v137
    %v322 = vunpack.c.l.b16 %v138
    %v323 = vunpack.c.h.b16 %v138
    %v324 = vunpack.c.l.b16 %v139
    %v325 = vunpack.c.h.b16 %v139
    %v326 = vunpack.c.l.b16 %v140
    %v327 = vunpack.c.h.b16 %v140
    %v328 = vunpack.c.l.b16 %v141
    %v329 = vunpack.c.h.b16 %v141
    %v330 = vunpack.c.l.b16 %v142
    %v331 = vunpack.c.h.b16 %v142
    %v332 = vunpack.c.l.b16 %v143
    %v333 = vunpack.c.h.b16 %v143
    %v334 = vunpack.c.l.b16 %v144
    %v335 = vunpack.c.h.b16 %v144
    %v336 = vunpack.c.l.b16 %v145
    %v337 = vunpack.c.h.b16 %v145
    %v338 = vpack.c.b16 %v214, %v210
    %v339 = vpack.c.b16 %v215, %v211
    %v340 = vpack.c.b16 %v216, %v212
    %v341 = vpack.c.b16 %v217, %v213
    %v342 = vpack.c.b16 %v222, %v218
    %v343 = vpack.c.b16 %v223, %v219
    %v344 = vpack.c.b16 %v224, %v220
    %v345 = vpack.c.b16 %v225, %v221
    %v346 = vpack.c.b16 %v230, %v226
    %v347 = vpack.c.b16 %v231, %v227
    %v348 = vpack.c.b16 %v232, %v228
    %v349 = vpack.c.b16 %v233, %v229
    %v350 = vpack.c.b16 %v238, %v234
    %v351 = vpack.c.b16 %v239, %v235
    %v352 = vpack.c.b16 %v240, %v236
    %v353 = vpack.c.b16 %v241, %v237
    %v354 = vpack.c.b16 %v246, %v242
    %v355 = vpack.c.b16 %v247, %v243
    %v356 = vpack.c.b16 %v248, %v244
    %v357 = vpack.c.b16 %v249, %v245
    %v358 = vpack.c.b16 %v254, %v250
    %v359 = vpack.c.b16 %v255, %v251
    %v360 = vpack.c.b16 %v256, %v252
    %v361 = vpack.c.b16 %v257, %v253
    %v362 = vpack.c.b16 %v262, %v258
    %v363 = vpack.c.b16 %v263, %v259
    %v364 = vpack.c.b16 %v264, %v260
    %v365 = vpack.c.b16 %v265, %v261
    %v366 = vpack.c.b16 %v270, %v266
    %v367 = vpack.c.b16 %v271, %v267
    %v368 = vpack.c.b16 %v272, %v268
    %v369 = vpack.c.b16 %v273, %v269
    %v370 = vpack.c.b16 %v278, %v274
    %v371 = vpack.c.b16 %v279, %v275
    %v372 = vpack.c.b16 %v280, %v276
    %v373 = vpack.c.b16 %v281, %v277
    %v374 = vpack.c.b16 %v286, %v282
    %v375 = vpack.c.b16 %v287, %v283
    %v376 = vpack.c.b16 %v288, %v284
    %v377 = vpack.c.b16 %v289, %v285
    %v378 = vpack.c.b16 %v294, %v290
    %v379 = vpack.c.b16 %v295, %v291
    %v380 = vpack.c.b16 %v296, %v292
    %v381 = vpack.c.b16 %v297, %v293
    %v382 = vpack.c.b16 %v302, %v298
    %v383 = vpack.c.b16 %v303, %v299
    %v384 = vpack.c.b16 %v304, %v300
    %v385 = vpack.c.b16 %v305, %v301
    %v386 = vpack.c.b16 %v310, %v306
    %v387 = vpack.c.b16 %v311, %v307
    %v388 = vpack.c.b16 %v312, %v308
    %v389 = vpack.c.b16 %v313, %v309
    %v390 = vpack.c.b16 %v318, %v314
    %v391 = vpack.c.b16 %v319, %v315
    %v392 = vpack.c.b16 %v320, %v316
    %v393 = vpack.c.b16 %v321, %v317
    %v394 = vpack.c.b16 %v326, %v322
    %v395 = vpack.c.b16 %v327, %v323
    %v396 = vpack.c.b16 %v328, %v324
    %v397 = vpack.c.b16 %v329, %v325
    %v398 = vpack.c.b16 %v334, %v330
    %v399 = vpack.c.b16 %v335, %v331
    %v400 = vpack.c.b16 %v336, %v332
    %v401 = vpack.c.b16 %v337, %v333
    %466 = vmatpush.bf16.msra.mxu0 %v366
    %467 = vmatpush.bf16.msra.mxu0 %v362
    %468 = vmatpush.bf16.msra.mxu0 %v358
    %469 = vmatpush.bf16.msra.mxu0 %v354
    %470 = vmatpush.bf16.msra.mxu0 %v350
    %471 = vmatpush.bf16.msra.mxu0 %v346
    %472 = vmatpush.bf16.msra.mxu0 %v342
    %473 = vmatpush.bf16.msra.mxu0 %v338
    %474 = vmatmul.bf16.gmra.mxu0 %v78
    %v475 = vpop.f32.mrf.mxu0
    %v476 = vadd.f32 0.0, %v475
    %v477 = vpop.f32.mrf.mxu0
    %v478 = vadd.f32 0.0, %v477
    %479 = vmatmul.bf16.gmra.mxu0 %v80
    %v480 = vpop.f32.mrf.mxu0
    %v481 = vadd.f32 0.0, %v480
    %v482 = vpop.f32.mrf.mxu0
    %v483 = vadd.f32 0.0, %v482
    %484 = vdwg.mxu0
    %485 = vmatpush.bf16.msra.mxu0 %v398
    %486 = vmatpush.bf16.msra.mxu0 %v394
    %487 = vmatpush.bf16.msra.mxu0 %v390
    %488 = vmatpush.bf16.msra.mxu0 %v386
    %489 = vmatpush.bf16.msra.mxu0 %v382
    %490 = vmatpush.bf16.msra.mxu0 %v378
    %491 = vmatpush.bf16.msra.mxu0 %v374
    %492 = vmatpush.bf16.msra.mxu0 %v370
    %493 = vmatmul.bf16.gmra.mxu0 %v79
    %v494 = vpop.f32.mrf.mxu0
    %v495 = vadd.f32 %v476, %v494
    %v496 = vpop.f32.mrf.mxu0
    %v497 = vadd.f32 %v478, %v496
    %498 = vmatmul.bf16.gmra.mxu0 %v81
    %v499 = vpop.f32.mrf.mxu0
    %v500 = vadd.f32 %v481, %v499
    %v501 = vpop.f32.mrf.mxu0
    %v502 = vadd.f32 %v483, %v501
    %503 = vdwg.mxu0
    %504 = vmatpush.bf16.msra.mxu0 %v367
    %505 = vmatpush.bf16.msra.mxu0 %v363
    %506 = vmatpush.bf16.msra.mxu0 %v359
    %507 = vmatpush.bf16.msra.mxu0 %v355
    %508 = vmatpush.bf16.msra.mxu0 %v351
    %509 = vmatpush.bf16.msra.mxu0 %v347
    %510 = vmatpush.bf16.msra.mxu0 %v343
    %511 = vmatpush.bf16.msra.mxu0 %v339
    %512 = vmatmul.bf16.gmra.mxu0 %v78
    %v513 = vpop.f32.mrf.mxu0
    %v514 = vadd.f32 0.0, %v513
    %v515 = vpop.f32.mrf.mxu0
    %v516 = vadd.f32 0.0, %v515
    %517 = vmatmul.bf16.gmra.mxu0 %v80
    %v518 = vpop.f32.mrf.mxu0
    %v519 = vadd.f32 0.0, %v518
    %v520 = vpop.f32.mrf.mxu0
    %v521 = vadd.f32 0.0, %v520
    %522 = vdwg.mxu0
    %523 = vmatpush.bf16.msra.mxu0 %v399
    %524 = vmatpush.bf16.msra.mxu0 %v395
    %525 = vmatpush.bf16.msra.mxu0 %v391
    %526 = vmatpush.bf16.msra.mxu0 %v387
    %527 = vmatpush.bf16.msra.mxu0 %v383
    %528 = vmatpush.bf16.msra.mxu0 %v379
    %529 = vmatpush.bf16.msra.mxu0 %v375
    %530 = vmatpush.bf16.msra.mxu0 %v371
    %531 = vmatmul.bf16.gmra.mxu0 %v79
    %v532 = vpop.f32.mrf.mxu0
    %v533 = vadd.f32 %v514, %v532
    %v534 = vpop.f32.mrf.mxu0
    %v535 = vadd.f32 %v516, %v534
    %536 = vmatmul.bf16.gmra.mxu0 %v81
    %v537 = vpop.f32.mrf.mxu0
    %v538 = vadd.f32 %v519, %v537
    %v539 = vpop.f32.mrf.mxu0
    %v540 = vadd.f32 %v521, %v539
    %541 = vdwg.mxu0
    %542 = vmatpush.bf16.msra.mxu0 %v368
    %543 = vmatpush.bf16.msra.mxu0 %v364
    %544 = vmatpush.bf16.msra.mxu0 %v360
    %545 = vmatpush.bf16.msra.mxu0 %v356
    %546 = vmatpush.bf16.msra.mxu0 %v352
    %547 = vmatpush.bf16.msra.mxu0 %v348
    %548 = vmatpush.bf16.msra.mxu0 %v344
    %549 = vmatpush.bf16.msra.mxu0 %v340
    %550 = vmatmul.bf16.gmra.mxu0 %v78
    %v551 = vpop.f32.mrf.mxu0
    %v552 = vadd.f32 0.0, %v551
    %v553 = vpop.f32.mrf.mxu0
    %v554 = vadd.f32 0.0, %v553
    %555 = vmatmul.bf16.gmra.mxu0 %v80
    %v556 = vpop.f32.mrf.mxu0
    %v557 = vadd.f32 0.0, %v556
    %v558 = vpop.f32.mrf.mxu0
    %v559 = vadd.f32 0.0, %v558
    %560 = vdwg.mxu0
    %561 = vmatpush.bf16.msra.mxu0 %v400
    %562 = vmatpush.bf16.msra.mxu0 %v396
    %563 = vmatpush.bf16.msra.mxu0 %v392
    %564 = vmatpush.bf16.msra.mxu0 %v388
    %565 = vmatpush.bf16.msra.mxu0 %v384
    %566 = vmatpush.bf16.msra.mxu0 %v380
    %567 = vmatpush.bf16.msra.mxu0 %v376
    %568 = vmatpush.bf16.msra.mxu0 %v372
    %569 = vmatmul.bf16.gmra.mxu0 %v79
    %v570 = vpop.f32.mrf.mxu0
    %v571 = vadd.f32 %v552, %v570
    %v572 = vpop.f32.mrf.mxu0
    %v573 = vadd.f32 %v554, %v572
    %574 = vmatmul.bf16.gmra.mxu0 %v81
    %v575 = vpop.f32.mrf.mxu0
    %v576 = vadd.f32 %v557, %v575
    %v577 = vpop.f32.mrf.mxu0
    %v578 = vadd.f32 %v559, %v577
    %579 = vdwg.mxu0
    %580 = vmatpush.bf16.msra.mxu0 %v369
    %581 = vmatpush.bf16.msra.mxu0 %v365
    %582 = vmatpush.bf16.msra.mxu0 %v361
    %583 = vmatpush.bf16.msra.mxu0 %v357
    %584 = vmatpush.bf16.msra.mxu0 %v353
    %585 = vmatpush.bf16.msra.mxu0 %v349
    %586 = vmatpush.bf16.msra.mxu0 %v345
    %587 = vmatpush.bf16.msra.mxu0 %v341
    %588 = vmatmul.bf16.gmra.mxu0 %v78
    %v589 = vpop.f32.mrf.mxu0
    %v590 = vadd.f32 0.0, %v589
    %v591 = vpop.f32.mrf.mxu0
    %v592 = vadd.f32 0.0, %v591
    %593 = vmatmul.bf16.gmra.mxu0 %v80
    %v594 = vpop.f32.mrf.mxu0
    %v595 = vadd.f32 0.0, %v594
    %v596 = vpop.f32.mrf.mxu0
    %v597 = vadd.f32 0.0, %v596
    %598 = vdwg.mxu0
    %599 = vmatpush.bf16.msra.mxu0 %v401
    %600 = vmatpush.bf16.msra.mxu0 %v397
    %601 = vmatpush.bf16.msra.mxu0 %v393
    %602 = vmatpush.bf16.msra.mxu0 %v389
    %603 = vmatpush.bf16.msra.mxu0 %v385
    %604 = vmatpush.bf16.msra.mxu0 %v381
    %605 = vmatpush.bf16.msra.mxu0 %v377
    %606 = vmatpush.bf16.msra.mxu0 %v373
    %607 = vmatmul.bf16.gmra.mxu0 %v79
    %v608 = vpop.f32.mrf.mxu0
    %v609 = vadd.f32 %v590, %v608
    %v610 = vpop.f32.mrf.mxu0
    %v611 = vadd.f32 %v592, %v610
    %612 = vmatmul.bf16.gmra.mxu0 %v81
    %v613 = vpop.f32.mrf.mxu0
    %v614 = vadd.f32 %v595, %v613
    %v615 = vpop.f32.mrf.mxu0
    %v616 = vadd.f32 %v597, %v615
    %617 = vdwg.mxu0
    %v618 = vadd.f32 %v54, %v495
    %v619 = vadd.f32 %v55, %v533
    %v620 = vadd.f32 %v56, %v571
    %v621 = vadd.f32 %v57, %v609
    %v622 = vadd.f32 %v58, %v497
    %v623 = vadd.f32 %v59, %v535
    %v624 = vadd.f32 %v60, %v573
    %v625 = vadd.f32 %v61, %v611
    %v626 = vadd.f32 %v62, %v500
    %v627 = vadd.f32 %v63, %v538
    %v628 = vadd.f32 %v64, %v576
    %v629 = vadd.f32 %v65, %v614
    %v630 = vadd.f32 %v66, %v502
    %v631 = vadd.f32 %v67, %v540
    %v632 = vadd.f32 %v68, %v578
    %v633 = vadd.f32 %v69, %v616
    %634 = vst [vmem:[#allocation2] sm:$0xff] %v618
    %635 = vst [vmem:[#allocation2 + $0x8] sm:$0xff] %v619
    %636 = vst [vmem:[#allocation2 + $0x10] sm:$0xff] %v620
    %637 = vst [vmem:[#allocation2 + $0x18] sm:$0xff] %v621
    %638 = vst [vmem:[#allocation2 + $0x20] sm:$0xff] %v622
    %639 = vst [vmem:[#allocation2 + $0x28] sm:$0xff] %v623
    %640 = vst [vmem:[#allocation2 + $0x30] sm:$0xff] %v624
    %641 = vst [vmem:[#allocation2 + $0x38] sm:$0xff] %v625
    %642 = vst [vmem:[#allocation2 + $0x40] sm:$0xff] %v626
    %643 = vst [vmem:[#allocation2 + $0x48] sm:$0xff] %v627
    %644 = vst [vmem:[#allocation2 + $0x50] sm:$0xff] %v628
    %645 = vst [vmem:[#allocation2 + $0x58] sm:$0xff] %v629
    %646 = vst [vmem:[#allocation2 + $0x60] sm:$0xff] %v630
    %647 = vst [vmem:[#allocation2 + $0x68] sm:$0xff] %v631
    %648 = vst [vmem:[#allocation2 + $0x70] sm:$0xff] %v632
    %649 = vst [vmem:[#allocation2 + $0x78] sm:$0xff] %v633
    // Predicated region
    $region26: #{flash_roberta_layer.8} parent=1 // pred_check
      %p650 = pneg %p34
    $region27: #{flash_roberta_layer.8} parent=1 // pred_check_branch
      %652 = sbr.rel (%p650) target = $region29
    $region28: #{flash_roberta_layer.8} parent=1 // pred_region
      %v653 = vld [vmem:[#allocation2] sm:$0xff]
      %v654 = vld [vmem:[#allocation2 + $0x8] sm:$0xff]
      %v655 = vld [vmem:[#allocation2 + $0x10] sm:$0xff]
      %v656 = vld [vmem:[#allocation2 + $0x18] sm:$0xff]
      %v657 = vld [vmem:[#allocation2 + $0x20] sm:$0xff]
      %v658 = vld [vmem:[#allocation2 + $0x28] sm:$0xff]
      %v659 = vld [vmem:[#allocation2 + $0x30] sm:$0xff]
      %v660 = vld [vmem:[#allocation2 + $0x38] sm:$0xff]
      %v661 = vld [vmem:[#allocation2 + $0x40] sm:$0xff]
      %v662 = vld [vmem:[#allocation2 + $0x48] sm:$0xff]
      %v663 = vld [vmem:[#allocation2 + $0x50] sm:$0xff]
      %v664 = vld [vmem:[#allocation2 + $0x58] sm:$0xff]
      %v665 = vld [vmem:[#allocation2 + $0x60] sm:$0xff]
      %v666 = vld [vmem:[#allocation2 + $0x68] sm:$0xff]
      %v667 = vld [vmem:[#allocation2 + $0x70] sm:$0xff]
      %v668 = vld [vmem:[#allocation2 + $0x78] sm:$0xff]
      %v669 = vld [vmem:[%s2] sm:$0xf]
      %v671 = vperm.slane %v669, 0
      %v672 = vperm.slane %v669, 1
      %v673 = vperm.slane %v669, 2
      %v674 = vperm.slane %v669, 3
      %v679 = vadd.f32 %v653, %v671
      %v680 = vadd.f32 %v654, %v672
      %v681 = vadd.f32 %v655, %v673
      %v682 = vadd.f32 %v656, %v674
      %v683 = vadd.f32 %v657, %v671
      %v684 = vadd.f32 %v658, %v672
      %v685 = vadd.f32 %v659, %v673
      %v686 = vadd.f32 %v660, %v674
      %v687 = vadd.f32 %v661, %v671
      %v688 = vadd.f32 %v662, %v672
      %v689 = vadd.f32 %v663, %v673
      %v690 = vadd.f32 %v664, %v674
      %v691 = vadd.f32 %v665, %v671
      %v692 = vadd.f32 %v666, %v672
      %v693 = vadd.f32 %v667, %v673
      %v694 = vadd.f32 %v668, %v674
      %s695 = sld [smem:[#allocation3]]
      %v696 = vstv %s695
      %v697 = vmul.f32 %v696, %v679
      %v698 = vmul.f32 %v696, %v680
      %v699 = vmul.f32 %v696, %v681
      %v700 = vmul.f32 %v696, %v682
      %v701 = vmul.f32 %v696, %v683
      %v702 = vmul.f32 %v696, %v684
      %v703 = vmul.f32 %v696, %v685
      %v704 = vmul.f32 %v696, %v686
      %v705 = vmul.f32 %v696, %v687
      %v706 = vmul.f32 %v696, %v688
      %v707 = vmul.f32 %v696, %v689
      %v708 = vmul.f32 %v696, %v690
      %v709 = vmul.f32 %v696, %v691
      %v710 = vmul.f32 %v696, %v692
      %v711 = vmul.f32 %v696, %v693
      %v712 = vmul.f32 %v696, %v694
      %v713 = vxor.u32 %v697, 2147483648
      %v714 = vxor.u32 %v698, 2147483648
      %v715 = vxor.u32 %v699, 2147483648
      %v716 = vxor.u32 %v700, 2147483648
      %v717 = vxor.u32 %v701, 2147483648
      %v718 = vxor.u32 %v702, 2147483648
      %v719 = vxor.u32 %v703, 2147483648
      %v720 = vxor.u32 %v704, 2147483648
      %v721 = vxor.u32 %v705, 2147483648
      %v722 = vxor.u32 %v706, 2147483648
      %v723 = vxor.u32 %v707, 2147483648
      %v724 = vxor.u32 %v708, 2147483648
      %v725 = vxor.u32 %v709, 2147483648
      %v726 = vxor.u32 %v710, 2147483648
      %v727 = vxor.u32 %v711, 2147483648
      %v728 = vxor.u32 %v712, 2147483648
      %v729 = vmul.f32 %v713, 1.442695
      %v730 = vpow.pop %v729
      %v731 = vmul.f32 %v714, 1.442695
      %v732 = vpow.pop %v731
      %v733 = vmul.f32 %v715, 1.442695
      %v734 = vpow.pop %v733
      %v735 = vmul.f32 %v716, 1.442695
      %v736 = vpow.pop %v735
      %v737 = vmul.f32 %v717, 1.442695
      %v738 = vpow.pop %v737
      %v739 = vmul.f32 %v718, 1.442695
      %v740 = vpow.pop %v739
      %v741 = vmul.f32 %v719, 1.442695
      %v742 = vpow.pop %v741
      %v743 = vmul.f32 %v720, 1.442695
      %v744 = vpow.pop %v743
      %v745 = vmul.f32 %v721, 1.442695
      %v746 = vpow.pop %v745
      %v747 = vmul.f32 %v722, 1.442695
      %v748 = vpow.pop %v747
      %v749 = vmul.f32 %v723, 1.442695
      %v750 = vpow.pop %v749
      %v751 = vmul.f32 %v724, 1.442695
      %v752 = vpow.pop %v751
      %v753 = vmul.f32 %v725, 1.442695
      %v754 = vpow.pop %v753
      %v755 = vmul.f32 %v726, 1.442695
      %v756 = vpow.pop %v755
      %v757 = vmul.f32 %v727, 1.442695
      %v758 = vpow.pop %v757
      %v759 = vmul.f32 %v728, 1.442695
      %v760 = vpow.pop %v759
      %v761 = vadd.f32 %v730, 1.0
      %v762 = vadd.f32 %v732, 1.0
      %v763 = vadd.f32 %v734, 1.0
      %v764 = vadd.f32 %v736, 1.0
      %v765 = vadd.f32 %v738, 1.0
      %v766 = vadd.f32 %v740, 1.0
      %v767 = vadd.f32 %v742, 1.0
      %v768 = vadd.f32 %v744, 1.0
      %v769 = vadd.f32 %v746, 1.0
      %v770 = vadd.f32 %v748, 1.0
      %v771 = vadd.f32 %v750, 1.0
      %v772 = vadd.f32 %v752, 1.0
      %v773 = vadd.f32 %v754, 1.0
      %v774 = vadd.f32 %v756, 1.0
      %v775 = vadd.f32 %v758, 1.0
      %v776 = vadd.f32 %v760, 1.0
      %v777 = vrcp.pop %v761
      %v778 = vmul.f32 %v761, %v777
      %v779 = vsub.f32 1.0, %v778
      %v780 = vmul.f32 %v777, %v779
      %v781 = vadd.f32 %v777, %v780
      %vm782 = vweird.f32 %v761
      %vm783 = vweird.f32 %v777
      %vm784 = vmor %vm782, %vm783
      %v785 = vsel %vm784, %v777, %v781
      %v786 = vand.u32 2147483647, %v761
      %vm787 = vcmp.eq.f32.partialorder %v786, 8.507059e+37
      %v788 = vand.u32 %v761, 2147483648
      %v789 = vor.u32 1.1754944e-38, %v788
      %v790 = vsel %vm787, %v789, %v785
      %v791 = vmul.f32 1.0, %v790
      %v792 = vrcp.pop %v762
      %v793 = vmul.f32 %v762, %v792
      %v794 = vsub.f32 1.0, %v793
      %v795 = vmul.f32 %v792, %v794
      %v796 = vadd.f32 %v792, %v795
      %vm797 = vweird.f32 %v762
      %vm798 = vweird.f32 %v792
      %vm799 = vmor %vm797, %vm798
      %v800 = vsel %vm799, %v792, %v796
      %v801 = vand.u32 2147483647, %v762
      %vm802 = vcmp.eq.f32.partialorder %v801, 8.507059e+37
      %v803 = vand.u32 %v762, 2147483648
      %v804 = vor.u32 1.1754944e-38, %v803
      %v805 = vsel %vm802, %v804, %v800
      %v806 = vmul.f32 1.0, %v805
      %v807 = vrcp.pop %v763
      %v808 = vmul.f32 %v763, %v807
      %v809 = vsub.f32 1.0, %v808
      %v810 = vmul.f32 %v807, %v809
      %v811 = vadd.f32 %v807, %v810
      %vm812 = vweird.f32 %v763
      %vm813 = vweird.f32 %v807
      %vm814 = vmor %vm812, %vm813
      %v815 = vsel %vm814, %v807, %v811
      %v816 = vand.u32 2147483647, %v763
      %vm817 = vcmp.eq.f32.partialorder %v816, 8.507059e+37
      %v818 = vand.u32 %v763, 2147483648
      %v819 = vor.u32 1.1754944e-38, %v818
      %v820 = vsel %vm817, %v819, %v815
      %v821 = vmul.f32 1.0, %v820
      %v822 = vrcp.pop %v764
      %v823 = vmul.f32 %v764, %v822
      %v824 = vsub.f32 1.0, %v823
      %v825 = vmul.f32 %v822, %v824
      %v826 = vadd.f32 %v822, %v825
      %vm827 = vweird.f32 %v764
      %vm828 = vweird.f32 %v822
      %vm829 = vmor %vm827, %vm828
      %v830 = vsel %vm829, %v822, %v826
      %v831 = vand.u32 2147483647, %v764
      %vm832 = vcmp.eq.f32.partialorder %v831, 8.507059e+37
      %v833 = vand.u32 %v764, 2147483648
      %v834 = vor.u32 1.1754944e-38, %v833
      %v835 = vsel %vm832, %v834, %v830
      %v836 = vmul.f32 1.0, %v835
      %v837 = vrcp.pop %v765
      %v838 = vmul.f32 %v765, %v837
      %v839 = vsub.f32 1.0, %v838
      %v840 = vmul.f32 %v837, %v839
      %v841 = vadd.f32 %v837, %v840
      %vm842 = vweird.f32 %v765
      %vm843 = vweird.f32 %v837
      %vm844 = vmor %vm842, %vm843
      %v845 = vsel %vm844, %v837, %v841
      %v846 = vand.u32 2147483647, %v765
      %vm847 = vcmp.eq.f32.partialorder %v846, 8.507059e+37
      %v848 = vand.u32 %v765, 2147483648
      %v849 = vor.u32 1.1754944e-38, %v848
      %v850 = vsel %vm847, %v849, %v845
      %v851 = vmul.f32 1.0, %v850
      %v852 = vrcp.pop %v766
      %v853 = vmul.f32 %v766, %v852
      %v854 = vsub.f32 1.0, %v853
      %v855 = vmul.f32 %v852, %v854
      %v856 = vadd.f32 %v852, %v855
      %vm857 = vweird.f32 %v766
      %vm858 = vweird.f32 %v852
      %vm859 = vmor %vm857, %vm858
      %v860 = vsel %vm859, %v852, %v856
      %v861 = vand.u32 2147483647, %v766
      %vm862 = vcmp.eq.f32.partialorder %v861, 8.507059e+37
      %v863 = vand.u32 %v766, 2147483648
      %v864 = vor.u32 1.1754944e-38, %v863
      %v865 = vsel %vm862, %v864, %v860
      %v866 = vmul.f32 1.0, %v865
      %v867 = vrcp.pop %v767
      %v868 = vmul.f32 %v767, %v867
      %v869 = vsub.f32 1.0, %v868
      %v870 = vmul.f32 %v867, %v869
      %v871 = vadd.f32 %v867, %v870
      %vm872 = vweird.f32 %v767
      %vm873 = vweird.f32 %v867
      %vm874 = vmor %vm872, %vm873
      %v875 = vsel %vm874, %v867, %v871
      %v876 = vand.u32 2147483647, %v767
      %vm877 = vcmp.eq.f32.partialorder %v876, 8.507059e+37
      %v878 = vand.u32 %v767, 2147483648
      %v879 = vor.u32 1.1754944e-38, %v878
      %v880 = vsel %vm877, %v879, %v875
      %v881 = vmul.f32 1.0, %v880
      %v882 = vrcp.pop %v768
      %v883 = vmul.f32 %v768, %v882
      %v884 = vsub.f32 1.0, %v883
      %v885 = vmul.f32 %v882, %v884
      %v886 = vadd.f32 %v882, %v885
      %vm887 = vweird.f32 %v768
      %vm888 = vweird.f32 %v882
      %vm889 = vmor %vm887, %vm888
      %v890 = vsel %vm889, %v882, %v886
      %v891 = vand.u32 2147483647, %v768
      %vm892 = vcmp.eq.f32.partialorder %v891, 8.507059e+37
      %v893 = vand.u32 %v768, 2147483648
      %v894 = vor.u32 1.1754944e-38, %v893
      %v895 = vsel %vm892, %v894, %v890
      %v896 = vmul.f32 1.0, %v895
      %v897 = vrcp.pop %v769
      %v898 = vmul.f32 %v769, %v897
      %v899 = vsub.f32 1.0, %v898
      %v900 = vmul.f32 %v897, %v899
      %v901 = vadd.f32 %v897, %v900
      %vm902 = vweird.f32 %v769
      %vm903 = vweird.f32 %v897
      %vm904 = vmor %vm902, %vm903
      %v905 = vsel %vm904, %v897, %v901
      %v906 = vand.u32 2147483647, %v769
      %vm907 = vcmp.eq.f32.partialorder %v906, 8.507059e+37
      %v908 = vand.u32 %v769, 2147483648
      %v909 = vor.u32 1.1754944e-38, %v908
      %v910 = vsel %vm907, %v909, %v905
      %v911 = vmul.f32 1.0, %v910
      %v912 = vrcp.pop %v770
      %v913 = vmul.f32 %v770, %v912
      %v914 = vsub.f32 1.0, %v913
      %v915 = vmul.f32 %v912, %v914
      %v916 = vadd.f32 %v912, %v915
      %vm917 = vweird.f32 %v770
      %vm918 = vweird.f32 %v912
      %vm919 = vmor %vm917, %vm918
      %v920 = vsel %vm919, %v912, %v916
      %v921 = vand.u32 2147483647, %v770
      %vm922 = vcmp.eq.f32.partialorder %v921, 8.507059e+37
      %v923 = vand.u32 %v770, 2147483648
      %v924 = vor.u32 1.1754944e-38, %v923
      %v925 = vsel %vm922, %v924, %v920
      %v926 = vmul.f32 1.0, %v925
      %v927 = vrcp.pop %v771
      %v928 = vmul.f32 %v771, %v927
      %v929 = vsub.f32 1.0, %v928
      %v930 = vmul.f32 %v927, %v929
      %v931 = vadd.f32 %v927, %v930
      %vm932 = vweird.f32 %v771
      %vm933 = vweird.f32 %v927
      %vm934 = vmor %vm932, %vm933
      %v935 = vsel %vm934, %v927, %v931
      %v936 = vand.u32 2147483647, %v771
      %vm937 = vcmp.eq.f32.partialorder %v936, 8.507059e+37
      %v938 = vand.u32 %v771, 2147483648
      %v939 = vor.u32 1.1754944e-38, %v938
      %v940 = vsel %vm937, %v939, %v935
      %v941 = vmul.f32 1.0, %v940
      %v942 = vrcp.pop %v772
      %v943 = vmul.f32 %v772, %v942
      %v944 = vsub.f32 1.0, %v943
      %v945 = vmul.f32 %v942, %v944
      %v946 = vadd.f32 %v942, %v945
      %vm947 = vweird.f32 %v772
      %vm948 = vweird.f32 %v942
      %vm949 = vmor %vm947, %vm948
      %v950 = vsel %vm949, %v942, %v946
      %v951 = vand.u32 2147483647, %v772
      %vm952 = vcmp.eq.f32.partialorder %v951, 8.507059e+37
      %v953 = vand.u32 %v772, 2147483648
      %v954 = vor.u32 1.1754944e-38, %v953
      %v955 = vsel %vm952, %v954, %v950
      %v956 = vmul.f32 1.0, %v955
      %v957 = vrcp.pop %v773
      %v958 = vmul.f32 %v773, %v957
      %v959 = vsub.f32 1.0, %v958
      %v960 = vmul.f32 %v957, %v959
      %v961 = vadd.f32 %v957, %v960
      %vm962 = vweird.f32 %v773
      %vm963 = vweird.f32 %v957
      %vm964 = vmor %vm962, %vm963
      %v965 = vsel %vm964, %v957, %v961
      %v966 = vand.u32 2147483647, %v773
      %vm967 = vcmp.eq.f32.partialorder %v966, 8.507059e+37
      %v968 = vand.u32 %v773, 2147483648
      %v969 = vor.u32 1.1754944e-38, %v968
      %v970 = vsel %vm967, %v969, %v965
      %v971 = vmul.f32 1.0, %v970
      %v972 = vrcp.pop %v774
      %v973 = vmul.f32 %v774, %v972
      %v974 = vsub.f32 1.0, %v973
      %v975 = vmul.f32 %v972, %v974
      %v976 = vadd.f32 %v972, %v975
      %vm977 = vweird.f32 %v774
      %vm978 = vweird.f32 %v972
      %vm979 = vmor %vm977, %vm978
      %v980 = vsel %vm979, %v972, %v976
      %v981 = vand.u32 2147483647, %v774
      %vm982 = vcmp.eq.f32.partialorder %v981, 8.507059e+37
      %v983 = vand.u32 %v774, 2147483648
      %v984 = vor.u32 1.1754944e-38, %v983
      %v985 = vsel %vm982, %v984, %v980
      %v986 = vmul.f32 1.0, %v985
      %v987 = vrcp.pop %v775
      %v988 = vmul.f32 %v775, %v987
      %v989 = vsub.f32 1.0, %v988
      %v990 = vmul.f32 %v987, %v989
      %v991 = vadd.f32 %v987, %v990
      %vm992 = vweird.f32 %v775
      %vm993 = vweird.f32 %v987
      %vm994 = vmor %vm992, %vm993
      %v995 = vsel %vm994, %v987, %v991
      %v996 = vand.u32 2147483647, %v775
      %vm997 = vcmp.eq.f32.partialorder %v996, 8.507059e+37
      %v998 = vand.u32 %v775, 2147483648
      %v999 = vor.u32 1.1754944e-38, %v998
      %v1000 = vsel %vm997, %v999, %v995
      %v1001 = vmul.f32 1.0, %v1000
      %v1002 = vrcp.pop %v776
      %v1003 = vmul.f32 %v776, %v1002
      %v1004 = vsub.f32 1.0, %v1003
      %v1005 = vmul.f32 %v1002, %v1004
      %v1006 = vadd.f32 %v1002, %v1005
      %vm1007 = vweird.f32 %v776
      %vm1008 = vweird.f32 %v1002
      %vm1009 = vmor %vm1007, %vm1008
      %v1010 = vsel %vm1009, %v1002, %v1006
      %v1011 = vand.u32 2147483647, %v776
      %vm1012 = vcmp.eq.f32.partialorder %v1011, 8.507059e+37
      %v1013 = vand.u32 %v776, 2147483648
      %v1014 = vor.u32 1.1754944e-38, %v1013
      %v1015 = vsel %vm1012, %v1014, %v1010
      %v1016 = vmul.f32 1.0, %v1015
      %v1017 = vmul.f32 %v679, %v791
      %v1018 = vmul.f32 %v680, %v806
      %v1019 = vmul.f32 %v681, %v821
      %v1020 = vmul.f32 %v682, %v836
      %v1021 = vmul.f32 %v683, %v851
      %v1022 = vmul.f32 %v684, %v866
      %v1023 = vmul.f32 %v685, %v881
      %v1024 = vmul.f32 %v686, %v896
      %v1025 = vmul.f32 %v687, %v911
      %v1026 = vmul.f32 %v688, %v926
      %v1027 = vmul.f32 %v689, %v941
      %v1028 = vmul.f32 %v690, %v956
      %v1029 = vmul.f32 %v691, %v971
      %v1030 = vmul.f32 %v692, %v986
      %v1031 = vmul.f32 %v693, %v1001
      %v1032 = vmul.f32 %v694, %v1016
      %1033 = vst [vmem:[%s4] sm:$0xff] %v1017
      %1034 = vst [vmem:[%s4 + $0x8] sm:$0xff] %v1018
      %1035 = vst [vmem:[%s4 + $0x10] sm:$0xff] %v1019
      %1036 = vst [vmem:[%s4 + $0x18] sm:$0xff] %v1020
      %1037 = vst [vmem:[%s4 + $0x20] sm:$0xff] %v1021
      %1038 = vst [vmem:[%s4 + $0x28] sm:$0xff] %v1022
      %1039 = vst [vmem:[%s4 + $0x30] sm:$0xff] %v1023
      %1040 = vst [vmem:[%s4 + $0x38] sm:$0xff] %v1024
      %1041 = vst [vmem:[%s4 + $0x40] sm:$0xff] %v1025
      %1042 = vst [vmem:[%s4 + $0x48] sm:$0xff] %v1026
      %1043 = vst [vmem:[%s4 + $0x50] sm:$0xff] %v1027
      %1044 = vst [vmem:[%s4 + $0x58] sm:$0xff] %v1028
      %1045 = vst [vmem:[%s4 + $0x60] sm:$0xff] %v1029
      %1046 = vst [vmem:[%s4 + $0x68] sm:$0xff] %v1030
      %1047 = vst [vmem:[%s4 + $0x70] sm:$0xff] %v1031
      %1048 = vst [vmem:[%s4 + $0x78] sm:$0xff] %v1032
    $region29: #{flash_roberta_layer.8} parent=1 // pred_fallthru
      _
    // Predicated region
    $region30: #{flash_roberta_layer.8} parent=1 // pred_check
      _
    $region31: #{flash_roberta_layer.8} parent=1 // pred_check_branch
      %1050 = sbr.rel (0) target = $region33
    $region32: #{flash_roberta_layer.8} parent=1 // pred_region
      _
    $region33: #{flash_roberta_layer.8} parent=1 // pred_fallthru
      _
    // Predicated region
    $region34: #{flash_roberta_layer.8} parent=1 // pred_check
      _
    $region35: #{flash_roberta_layer.8} parent=1 // pred_check_branch
      %1052 = sbr.rel (0) target = $region37
    $region36: #{flash_roberta_layer.8} parent=1 // pred_region
      _
    $region37: #{flash_roberta_layer.8} parent=1 // pred_fallthru
      _
    %1053 = vsyncpa [#allocation5], 1

// kernel: flash_roberta_layer.5
$region0: #{flash_roberta_layer.5}
  #allocation0 [shape = 'u32[]', space=smem, size = 0x4, offset = 0x4, fixed_abs, tag = 'smem constant byte address 0x4 - core index']
  #allocation1 [shape = 'u32[72,128]{1,0:T(1,128)}', space=vmem, size = 0x9000, scoped, tag = 'internal scratch']
  #allocation2 [shape = 'f32[32,512]{1,0:T(8,128)}', space=vmem, size = 0x10000, scoped, tag = 'scratch operand']
  %s0 = inlined_call_operand.hbm [shape: f32[32,256], index: 0, kind: input, shape index: {}]
  %s1 = inlined_call_operand.hbm [shape: bf16[256,512], index: 1, kind: input, shape index: {}]
  %s2 = inlined_call_operand.hbm [shape: f32[1,512], index: 2, kind: input, shape index: {}]
  %s3 = inlined_call_operand.vmem [shape: f32[32,512], index: 3, kind: output, shape index: {}]
  %s4 = sld [smem:[#allocation0]]
  $region42: #{flash_roberta_layer.5} parent=0
    _
  %s6 = ssub.s32 1, %s4
  %s7 = scalar_select 0, %s6, %s4
  $region1: #{flash_roberta_layer.5} parent=0
    #allocation3 [shape = 'u8[32768]{0}', space=vmem, size = 0x8000, scoped, tag = 'input window, operand 0, single buffered']
    #allocation4 [shape = 's32[1]{0}', space=sflag, size = 0x4, scoped, tag = 'scoped memory for flash_roberta_layer.5']
    #allocation5 [shape = 'u8[262144]{0}', space=vmem, size = 0x40000, scoped, tag = 'input window, operand 1, single buffered']
    #allocation6 [shape = 's32[1]{0}', space=sflag, size = 0x4, scoped, tag = 'scoped memory for flash_roberta_layer.5']
    #allocation7 [shape = 'u8[2048]{0}', space=vmem, size = 0x800, scoped, tag = 'input window, operand 2, single buffered']
    %8 = vsyncpa [#allocation4], 0
    %9 = vsyncpa [#allocation6], 0
    // Predicated region
    $region2: #{flash_roberta_layer.5} parent=1 // pred_check
      _
    $region3: #{flash_roberta_layer.5} parent=1 // pred_check_branch
      %11 = sbr.rel (0) target = $region5
    $region4: #{flash_roberta_layer.5} parent=1 // pred_region
      %13 = vsyncadd [#allocation4], 0
      %s14 = sshll.u32 %s0, 4
      %s15 = int_to_ptr.hbm [resolvable:$true] %s14
      %s16 = sshll.u32 [#allocation3], 4
      %s17 = int_to_ptr.vmem [resolvable:$true] %s16
      %22 = dma.hbm_to_vmem [thread:$0]  %s15, 1024, %s17, [#allocation4], 256, 256, 16
    $region5: #{flash_roberta_layer.5} parent=1 // pred_fallthru
      _
    // Predicated region
    $region6: #{flash_roberta_layer.5} parent=1 // pred_check
      _
    $region7: #{flash_roberta_layer.5} parent=1 // pred_check_branch
      %24 = sbr.rel (0) target = $region9
    $region8: #{flash_roberta_layer.5} parent=1 // pred_region
      %26 = vsyncadd [#allocation6], 0
      %s27 = sshll.u32 %s1, 4
      %s28 = int_to_ptr.hbm [resolvable:$true] %s27
      %s29 = sshll.u32 [#allocation5], 4
      %s30 = int_to_ptr.vmem [resolvable:$true] %s29
      %35 = dma.hbm_to_vmem [thread:$0]  %s28, 8192, %s30, [#allocation6], 256, 256, 16
    $region9: #{flash_roberta_layer.5} parent=1 // pred_fallthru
      _
    // Predicated region
    $region10: #{flash_roberta_layer.5} parent=1 // pred_check
      _
    $region11: #{flash_roberta_layer.5} parent=1 // pred_check_branch
      %37 = sbr.rel (0) target = $region13
    $region12: #{flash_roberta_layer.5} parent=1 // pred_region
      %39 = vsyncadd [#allocation6], 0
      %s41 = sshll.u32 %s2, 4
      %s42 = int_to_ptr.hbm [resolvable:$true] %s41
      %s43 = sshll.u32 [#allocation7], 4
      %s44 = int_to_ptr.vmem [resolvable:$true] %s43
      %46 = dma.hbm_to_vmem [thread:$0]  %s42, 64, %s44, [#allocation6]
    $region13: #{flash_roberta_layer.5} parent=1 // pred_fallthru
      _
    // Predicated region
    $region14: #{flash_roberta_layer.5} parent=1 // pred_check
      _
    $region15: #{flash_roberta_layer.5} parent=1 // pred_check_branch
      %48 = sbr.rel (0) target = $region17
    $region16: #{flash_roberta_layer.5} parent=1 // pred_region
      %50 = dma.done [#allocation4], 1024
    $region17: #{flash_roberta_layer.5} parent=1 // pred_fallthru
      _
    // Predicated region
    $region18: #{flash_roberta_layer.5} parent=1 // pred_check
      _
    $region19: #{flash_roberta_layer.5} parent=1 // pred_check_branch
      %52 = sbr.rel (0) target = $region21
    $region20: #{flash_roberta_layer.5} parent=1 // pred_region
      %54 = dma.done [#allocation6], 8192
    $region21: #{flash_roberta_layer.5} parent=1 // pred_fallthru
      _
    // Predicated region
    $region22: #{flash_roberta_layer.5} parent=1 // pred_check
      _
    $region23: #{flash_roberta_layer.5} parent=1 // pred_check_branch
      %56 = sbr.rel (0) target = $region25
    $region24: #{flash_roberta_layer.5} parent=1 // pred_region
      %58 = dma.done [#allocation6], 64
    $region25: #{flash_roberta_layer.5} parent=1 // pred_fallthru
      _
    %p59 = scmp.eq.s32.totalorder 0, 0
    // Predicated region
    $region26: #{flash_roberta_layer.5} parent=1 // pred_check
      %p60 = pneg %p59
    $region27: #{flash_roberta_layer.5} parent=1 // pred_check_branch
      %62 = sbr.rel (%p60) target = $region29
    $region28: #{flash_roberta_layer.5} parent=1 // pred_region
      %63 = vst [vmem:[#allocation2] sm:$0xff] 0.0
      %64 = vst [vmem:[#allocation2 + $0x8] sm:$0xff] 0.0
      %65 = vst [vmem:[#allocation2 + $0x10] sm:$0xff] 0.0
      %66 = vst [vmem:[#allocation2 + $0x18] sm:$0xff] 0.0
      %67 = vst [vmem:[#allocation2 + $0x20] sm:$0xff] 0.0
      %68 = vst [vmem:[#allocation2 + $0x28] sm:$0xff] 0.0
      %69 = vst [vmem:[#allocation2 + $0x30] sm:$0xff] 0.0
      %70 = vst [vmem:[#allocation2 + $0x38] sm:$0xff] 0.0
      %71 = vst [vmem:[#allocation2 + $0x40] sm:$0xff] 0.0
      %72 = vst [vmem:[#allocation2 + $0x48] sm:$0xff] 0.0
      %73 = vst [vmem:[#allocation2 + $0x50] sm:$0xff] 0.0
      %74 = vst [vmem:[#allocation2 + $0x58] sm:$0xff] 0.0
      %75 = vst [vmem:[#allocation2 + $0x60] sm:$0xff] 0.0
      %76 = vst [vmem:[#allocation2 + $0x68] sm:$0xff] 0.0
      %77 = vst [vmem:[#allocation2 + $0x70] sm:$0xff] 0.0
      %78 = vst [vmem:[#allocation2 + $0x78] sm:$0xff] 0.0
    $region29: #{flash_roberta_layer.5} parent=1 // pred_fallthru
      _
    %v79 = vld [vmem:[#allocation2] sm:$0xff]
    %v80 = vld [vmem:[#allocation2 + $0x8] sm:$0xff]
    %v81 = vld [vmem:[#allocation2 + $0x10] sm:$0xff]
    %v82 = vld [vmem:[#allocation2 + $0x18] sm:$0xff]
    %v83 = vld [vmem:[#allocation2 + $0x20] sm:$0xff]
    %v84 = vld [vmem:[#allocation2 + $0x28] sm:$0xff]
    %v85 = vld [vmem:[#allocation2 + $0x30] sm:$0xff]
    %v86 = vld [vmem:[#allocation2 + $0x38] sm:$0xff]
    %v87 = vld [vmem:[#allocation2 + $0x40] sm:$0xff]
    %v88 = vld [vmem:[#allocation2 + $0x48] sm:$0xff]
    %v89 = vld [vmem:[#allocation2 + $0x50] sm:$0xff]
    %v90 = vld [vmem:[#allocation2 + $0x58] sm:$0xff]
    %v91 = vld [vmem:[#allocation2 + $0x60] sm:$0xff]
    %v92 = vld [vmem:[#allocation2 + $0x68] sm:$0xff]
    %v93 = vld [vmem:[#allocation2 + $0x70] sm:$0xff]
    %v94 = vld [vmem:[#allocation2 + $0x78] sm:$0xff]
    %v95 = vld [vmem:[#allocation3] sm:$0xff]
    %v96 = vld [vmem:[#allocation3 + $0x8] sm:$0xff]
    %v97 = vld [vmem:[#allocation3 + $0x10] sm:$0xff]
    %v98 = vld [vmem:[#allocation3 + $0x18] sm:$0xff]
    %v99 = vld [vmem:[#allocation3 + $0x20] sm:$0xff]
    %v100 = vld [vmem:[#allocation3 + $0x28] sm:$0xff]
    %v101 = vld [vmem:[#allocation3 + $0x30] sm:$0xff]
    %v102 = vld [vmem:[#allocation3 + $0x38] sm:$0xff]
    %v103 = vpack.c.bf16 %v97, %v95
    %v104 = vpack.c.bf16 %v98, %v96
    %v105 = vpack.c.bf16 %v101, %v99
    %v106 = vpack.c.bf16 %v102, %v100
    %v107 = vld [vmem:[#allocation5] sm:$0xff]
    %v108 = vld [vmem:[#allocation5 + $0x8] sm:$0xff]
    %v109 = vld [vmem:[#allocation5 + $0x10] sm:$0xff]
    %v110 = vld [vmem:[#allocation5 + $0x18] sm:$0xff]
    %v111 = vld [vmem:[#allocation5 + $0x20] sm:$0xff]
    %v112 = vld [vmem:[#allocation5 + $0x28] sm:$0xff]
    %v113 = vld [vmem:[#allocation5 + $0x30] sm:$0xff]
    %v114 = vld [vmem:[#allocation5 + $0x38] sm:$0xff]
    %v115 = vld [vmem:[#allocation5 + $0x40] sm:$0xff]
    %v116 = vld [vmem:[#allocation5 + $0x48] sm:$0xff]
    %v117 = vld [vmem:[#allocation5 + $0x50] sm:$0xff]
    %v118 = vld [vmem:[#allocation5 + $0x58] sm:$0xff]
    %v119 = vld [vmem:[#allocation5 + $0x60] sm:$0xff]
    %v120 = vld [vmem:[#allocation5 + $0x68] sm:$0xff]
    %v121 = vld [vmem:[#allocation5 + $0x70] sm:$0xff]
    %v122 = vld [vmem:[#allocation5 + $0x78] sm:$0xff]
    %v123 = vld [vmem:[#allocation5 + $0x80] sm:$0xff]
    %v124 = vld [vmem:[#allocation5 + $0x88] sm:$0xff]
    %v125 = vld [vmem:[#allocation5 + $0x90] sm:$0xff]
    %v126 = vld [vmem:[#allocation5 + $0x98] sm:$0xff]
    %v127 = vld [vmem:[#allocation5 + $0xa0] sm:$0xff]
    %v128 = vld [vmem:[#allocation5 + $0xa8] sm:$0xff]
    %v129 = vld [vmem:[#allocation5 + $0xb0] sm:$0xff]
    %v130 = vld [vmem:[#allocation5 + $0xb8] sm:$0xff]
    %v131 = vld [vmem:[#allocation5 + $0xc0] sm:$0xff]
    %v132 = vld [vmem:[#allocation5 + $0xc8] sm:$0xff]
    %v133 = vld [vmem:[#allocation5 + $0xd0] sm:$0xff]
    %v134 = vld [vmem:[#allocation5 + $0xd8] sm:$0xff]
    %v135 = vld [vmem:[#allocation5 + $0xe0] sm:$0xff]
    %v136 = vld [vmem:[#allocation5 + $0xe8] sm:$0xff]
    %v137 = vld [vmem:[#allocation5 + $0xf0] sm:$0xff]
    %v138 = vld [vmem:[#allocation5 + $0xf8] sm:$0xff]
    %v139 = vld [vmem:[#allocation5 + $0x100] sm:$0xff]
    %v140 = vld [vmem:[#allocation5 + $0x108] sm:$0xff]
    %v141 = vld [vmem:[#allocation5 + $0x110] sm:$0xff]
    %v142 = vld [vmem:[#allocation5 + $0x118] sm:$0xff]
    %v143 = vld [vmem:[#allocation5 + $0x120] sm:$0xff]
    %v144 = vld [vmem:[#allocation5 + $0x128] sm:$0xff]
    %v145 = vld [vmem:[#allocation5 + $0x130] sm:$0xff]
    %v146 = vld [vmem:[#allocation5 + $0x138] sm:$0xff]
    %v147 = vld [vmem:[#allocation5 + $0x140] sm:$0xff]
    %v148 = vld [vmem:[#allocation5 + $0x148] sm:$0xff]
    %v149 = vld [vmem:[#allocation5 + $0x150] sm:$0xff]
    %v150 = vld [vmem:[#allocation5 + $0x158] sm:$0xff]
    %v151 = vld [vmem:[#allocation5 + $0x160] sm:$0xff]
    %v152 = vld [vmem:[#allocation5 + $0x168] sm:$0xff]
    %v153 = vld [vmem:[#allocation5 + $0x170] sm:$0xff]
    %v154 = vld [vmem:[#allocation5 + $0x178] sm:$0xff]
    %v155 = vld [vmem:[#allocation5 + $0x180] sm:$0xff]
    %v156 = vld [vmem:[#allocation5 + $0x188] sm:$0xff]
    %v157 = vld [vmem:[#allocation5 + $0x190] sm:$0xff]
    %v158 = vld [vmem:[#allocation5 + $0x198] sm:$0xff]
    %v159 = vld [vmem:[#allocation5 + $0x1a0] sm:$0xff]
    %v160 = vld [vmem:[#allocation5 + $0x1a8] sm:$0xff]
    %v161 = vld [vmem:[#allocation5 + $0x1b0] sm:$0xff]
    %v162 = vld [vmem:[#allocation5 + $0x1b8] sm:$0xff]
    %v163 = vld [vmem:[#allocation5 + $0x1c0] sm:$0xff]
    %v164 = vld [vmem:[#allocation5 + $0x1c8] sm:$0xff]
    %v165 = vld [vmem:[#allocation5 + $0x1d0] sm:$0xff]
    %v166 = vld [vmem:[#allocation5 + $0x1d8] sm:$0xff]
    %v167 = vld [vmem:[#allocation5 + $0x1e0] sm:$0xff]
    %v168 = vld [vmem:[#allocation5 + $0x1e8] sm:$0xff]
    %v169 = vld [vmem:[#allocation5 + $0x1f0] sm:$0xff]
    %v170 = vld [vmem:[#allocation5 + $0x1f8] sm:$0xff]
    %v235 = vunpack.c.l.b16 %v107
    %v236 = vunpack.c.h.b16 %v107
    %v237 = vunpack.c.l.b16 %v108
    %v238 = vunpack.c.h.b16 %v108
    %v239 = vunpack.c.l.b16 %v109
    %v240 = vunpack.c.h.b16 %v109
    %v241 = vunpack.c.l.b16 %v110
    %v242 = vunpack.c.h.b16 %v110
    %v243 = vunpack.c.l.b16 %v111
    %v244 = vunpack.c.h.b16 %v111
    %v245 = vunpack.c.l.b16 %v112
    %v246 = vunpack.c.h.b16 %v112
    %v247 = vunpack.c.l.b16 %v113
    %v248 = vunpack.c.h.b16 %v113
    %v249 = vunpack.c.l.b16 %v114
    %v250 = vunpack.c.h.b16 %v114
    %v251 = vunpack.c.l.b16 %v115
    %v252 = vunpack.c.h.b16 %v115
    %v253 = vunpack.c.l.b16 %v116
    %v254 = vunpack.c.h.b16 %v116
    %v255 = vunpack.c.l.b16 %v117
    %v256 = vunpack.c.h.b16 %v117
    %v257 = vunpack.c.l.b16 %v118
    %v258 = vunpack.c.h.b16 %v118
    %v259 = vunpack.c.l.b16 %v119
    %v260 = vunpack.c.h.b16 %v119
    %v261 = vunpack.c.l.b16 %v120
    %v262 = vunpack.c.h.b16 %v120
    %v263 = vunpack.c.l.b16 %v121
    %v264 = vunpack.c.h.b16 %v121
    %v265 = vunpack.c.l.b16 %v122
    %v266 = vunpack.c.h.b16 %v122
    %v267 = vunpack.c.l.b16 %v123
    %v268 = vunpack.c.h.b16 %v123
    %v269 = vunpack.c.l.b16 %v124
    %v270 = vunpack.c.h.b16 %v124
    %v271 = vunpack.c.l.b16 %v125
    %v272 = vunpack.c.h.b16 %v125
    %v273 = vunpack.c.l.b16 %v126
    %v274 = vunpack.c.h.b16 %v126
    %v275 = vunpack.c.l.b16 %v127
    %v276 = vunpack.c.h.b16 %v127
    %v277 = vunpack.c.l.b16 %v128
    %v278 = vunpack.c.h.b16 %v128
    %v279 = vunpack.c.l.b16 %v129
    %v280 = vunpack.c.h.b16 %v129
    %v281 = vunpack.c.l.b16 %v130
    %v282 = vunpack.c.h.b16 %v130
    %v283 = vunpack.c.l.b16 %v131
    %v284 = vunpack.c.h.b16 %v131
    %v285 = vunpack.c.l.b16 %v132
    %v286 = vunpack.c.h.b16 %v132
    %v287 = vunpack.c.l.b16 %v133
    %v288 = vunpack.c.h.b16 %v133
    %v289 = vunpack.c.l.b16 %v134
    %v290 = vunpack.c.h.b16 %v134
    %v291 = vunpack.c.l.b16 %v135
    %v292 = vunpack.c.h.b16 %v135
    %v293 = vunpack.c.l.b16 %v136
    %v294 = vunpack.c.h.b16 %v136
    %v295 = vunpack.c.l.b16 %v137
    %v296 = vunpack.c.h.b16 %v137
    %v297 = vunpack.c.l.b16 %v138
    %v298 = vunpack.c.h.b16 %v138
    %v299 = vunpack.c.l.b16 %v139
    %v300 = vunpack.c.h.b16 %v139
    %v301 = vunpack.c.l.b16 %v140
    %v302 = vunpack.c.h.b16 %v140
    %v303 = vunpack.c.l.b16 %v141
    %v304 = vunpack.c.h.b16 %v141
    %v305 = vunpack.c.l.b16 %v142
    %v306 = vunpack.c.h.b16 %v142
    %v307 = vunpack.c.l.b16 %v143
    %v308 = vunpack.c.h.b16 %v143
    %v309 = vunpack.c.l.b16 %v144
    %v310 = vunpack.c.h.b16 %v144
    %v311 = vunpack.c.l.b16 %v145
    %v312 = vunpack.c.h.b16 %v145
    %v313 = vunpack.c.l.b16 %v146
    %v314 = vunpack.c.h.b16 %v146
    %v315 = vunpack.c.l.b16 %v147
    %v316 = vunpack.c.h.b16 %v147
    %v317 = vunpack.c.l.b16 %v148
    %v318 = vunpack.c.h.b16 %v148
    %v319 = vunpack.c.l.b16 %v149
    %v320 = vunpack.c.h.b16 %v149
    %v321 = vunpack.c.l.b16 %v150
    %v322 = vunpack.c.h.b16 %v150
    %v323 = vunpack.c.l.b16 %v151
    %v324 = vunpack.c.h.b16 %v151
    %v325 = vunpack.c.l.b16 %v152
    %v326 = vunpack.c.h.b16 %v152
    %v327 = vunpack.c.l.b16 %v153
    %v328 = vunpack.c.h.b16 %v153
    %v329 = vunpack.c.l.b16 %v154
    %v330 = vunpack.c.h.b16 %v154
    %v331 = vunpack.c.l.b16 %v155
    %v332 = vunpack.c.h.b16 %v155
    %v333 = vunpack.c.l.b16 %v156
    %v334 = vunpack.c.h.b16 %v156
    %v335 = vunpack.c.l.b16 %v157
    %v336 = vunpack.c.h.b16 %v157
    %v337 = vunpack.c.l.b16 %v158
    %v338 = vunpack.c.h.b16 %v158
    %v339 = vunpack.c.l.b16 %v159
    %v340 = vunpack.c.h.b16 %v159
    %v341 = vunpack.c.l.b16 %v160
    %v342 = vunpack.c.h.b16 %v160
    %v343 = vunpack.c.l.b16 %v161
    %v344 = vunpack.c.h.b16 %v161
    %v345 = vunpack.c.l.b16 %v162
    %v346 = vunpack.c.h.b16 %v162
    %v347 = vunpack.c.l.b16 %v163
    %v348 = vunpack.c.h.b16 %v163
    %v349 = vunpack.c.l.b16 %v164
    %v350 = vunpack.c.h.b16 %v164
    %v351 = vunpack.c.l.b16 %v165
    %v352 = vunpack.c.h.b16 %v165
    %v353 = vunpack.c.l.b16 %v166
    %v354 = vunpack.c.h.b16 %v166
    %v355 = vunpack.c.l.b16 %v167
    %v356 = vunpack.c.h.b16 %v167
    %v357 = vunpack.c.l.b16 %v168
    %v358 = vunpack.c.h.b16 %v168
    %v359 = vunpack.c.l.b16 %v169
    %v360 = vunpack.c.h.b16 %v169
    %v361 = vunpack.c.l.b16 %v170
    %v362 = vunpack.c.h.b16 %v170
    %v363 = vpack.c.b16 %v239, %v235
    %v364 = vpack.c.b16 %v240, %v236
    %v365 = vpack.c.b16 %v241, %v237
    %v366 = vpack.c.b16 %v242, %v238
    %v367 = vpack.c.b16 %v247, %v243
    %v368 = vpack.c.b16 %v248, %v244
    %v369 = vpack.c.b16 %v249, %v245
    %v370 = vpack.c.b16 %v250, %v246
    %v371 = vpack.c.b16 %v255, %v251
    %v372 = vpack.c.b16 %v256, %v252
    %v373 = vpack.c.b16 %v257, %v253
    %v374 = vpack.c.b16 %v258, %v254
    %v375 = vpack.c.b16 %v263, %v259
    %v376 = vpack.c.b16 %v264, %v260
    %v377 = vpack.c.b16 %v265, %v261
    %v378 = vpack.c.b16 %v266, %v262
    %v379 = vpack.c.b16 %v271, %v267
    %v380 = vpack.c.b16 %v272, %v268
    %v381 = vpack.c.b16 %v273, %v269
    %v382 = vpack.c.b16 %v274, %v270
    %v383 = vpack.c.b16 %v279, %v275
    %v384 = vpack.c.b16 %v280, %v276
    %v385 = vpack.c.b16 %v281, %v277
    %v386 = vpack.c.b16 %v282, %v278
    %v387 = vpack.c.b16 %v287, %v283
    %v388 = vpack.c.b16 %v288, %v284
    %v389 = vpack.c.b16 %v289, %v285
    %v390 = vpack.c.b16 %v290, %v286
    %v391 = vpack.c.b16 %v295, %v291
    %v392 = vpack.c.b16 %v296, %v292
    %v393 = vpack.c.b16 %v297, %v293
    %v394 = vpack.c.b16 %v298, %v294
    %v395 = vpack.c.b16 %v303, %v299
    %v396 = vpack.c.b16 %v304, %v300
    %v397 = vpack.c.b16 %v305, %v301
    %v398 = vpack.c.b16 %v306, %v302
    %v399 = vpack.c.b16 %v311, %v307
    %v400 = vpack.c.b16 %v312, %v308
    %v401 = vpack.c.b16 %v313, %v309
    %v402 = vpack.c.b16 %v314, %v310
    %v403 = vpack.c.b16 %v319, %v315
    %v404 = vpack.c.b16 %v320, %v316
    %v405 = vpack.c.b16 %v321, %v317
    %v406 = vpack.c.b16 %v322, %v318
    %v407 = vpack.c.b16 %v327, %v323
    %v408 = vpack.c.b16 %v328, %v324
    %v409 = vpack.c.b16 %v329, %v325
    %v410 = vpack.c.b16 %v330, %v326
    %v411 = vpack.c.b16 %v335, %v331
    %v412 = vpack.c.b16 %v336, %v332
    %v413 = vpack.c.b16 %v337, %v333
    %v414 = vpack.c.b16 %v338, %v334
    %v415 = vpack.c.b16 %v343, %v339
    %v416 = vpack.c.b16 %v344, %v340
    %v417 = vpack.c.b16 %v345, %v341
    %v418 = vpack.c.b16 %v346, %v342
    %v419 = vpack.c.b16 %v351, %v347
    %v420 = vpack.c.b16 %v352, %v348
    %v421 = vpack.c.b16 %v353, %v349
    %v422 = vpack.c.b16 %v354, %v350
    %v423 = vpack.c.b16 %v359, %v355
    %v424 = vpack.c.b16 %v360, %v356
    %v425 = vpack.c.b16 %v361, %v357
    %v426 = vpack.c.b16 %v362, %v358
    %491 = vmatpush.bf16.msra.mxu0 %v391
    %492 = vmatpush.bf16.msra.mxu0 %v387
    %493 = vmatpush.bf16.msra.mxu0 %v383
    %494 = vmatpush.bf16.msra.mxu0 %v379
    %495 = vmatpush.bf16.msra.mxu0 %v375
    %496 = vmatpush.bf16.msra.mxu0 %v371
    %497 = vmatpush.bf16.msra.mxu0 %v367
    %498 = vmatpush.bf16.msra.mxu0 %v363
    %499 = vmatmul.bf16.gmra.mxu0 %v103
    %v500 = vpop.f32.mrf.mxu0
    %v501 = vadd.f32 0.0, %v500
    %v502 = vpop.f32.mrf.mxu0
    %v503 = vadd.f32 0.0, %v502
    %504 = vmatmul.bf16.gmra.mxu0 %v105
    %v505 = vpop.f32.mrf.mxu0
    %v506 = vadd.f32 0.0, %v505
    %v507 = vpop.f32.mrf.mxu0
    %v508 = vadd.f32 0.0, %v507
    %509 = vdwg.mxu0
    %510 = vmatpush.bf16.msra.mxu0 %v423
    %511 = vmatpush.bf16.msra.mxu0 %v419
    %512 = vmatpush.bf16.msra.mxu0 %v415
    %513 = vmatpush.bf16.msra.mxu0 %v411
    %514 = vmatpush.bf16.msra.mxu0 %v407
    %515 = vmatpush.bf16.msra.mxu0 %v403
    %516 = vmatpush.bf16.msra.mxu0 %v399
    %517 = vmatpush.bf16.msra.mxu0 %v395
    %518 = vmatmul.bf16.gmra.mxu0 %v104
    %v519 = vpop.f32.mrf.mxu0
    %v520 = vadd.f32 %v501, %v519
    %v521 = vpop.f32.mrf.mxu0
    %v522 = vadd.f32 %v503, %v521
    %523 = vmatmul.bf16.gmra.mxu0 %v106
    %v524 = vpop.f32.mrf.mxu0
    %v525 = vadd.f32 %v506, %v524
    %v526 = vpop.f32.mrf.mxu0
    %v527 = vadd.f32 %v508, %v526
    %528 = vdwg.mxu0
    %529 = vmatpush.bf16.msra.mxu0 %v392
    %530 = vmatpush.bf16.msra.mxu0 %v388
    %531 = vmatpush.bf16.msra.mxu0 %v384
    %532 = vmatpush.bf16.msra.mxu0 %v380
    %533 = vmatpush.bf16.msra.mxu0 %v376
    %534 = vmatpush.bf16.msra.mxu0 %v372
    %535 = vmatpush.bf16.msra.mxu0 %v368
    %536 = vmatpush.bf16.msra.mxu0 %v364
    %537 = vmatmul.bf16.gmra.mxu0 %v103
    %v538 = vpop.f32.mrf.mxu0
    %v539 = vadd.f32 0.0, %v538
    %v540 = vpop.f32.mrf.mxu0
    %v541 = vadd.f32 0.0, %v540
    %542 = vmatmul.bf16.gmra.mxu0 %v105
    %v543 = vpop.f32.mrf.mxu0
    %v544 = vadd.f32 0.0, %v543
    %v545 = vpop.f32.mrf.mxu0
    %v546 = vadd.f32 0.0, %v545
    %547 = vdwg.mxu0
    %548 = vmatpush.bf16.msra.mxu0 %v424
    %549 = vmatpush.bf16.msra.mxu0 %v420
    %550 = vmatpush.bf16.msra.mxu0 %v416
    %551 = vmatpush.bf16.msra.mxu0 %v412
    %552 = vmatpush.bf16.msra.mxu0 %v408
    %553 = vmatpush.bf16.msra.mxu0 %v404
    %554 = vmatpush.bf16.msra.mxu0 %v400
    %555 = vmatpush.bf16.msra.mxu0 %v396
    %556 = vmatmul.bf16.gmra.mxu0 %v104
    %v557 = vpop.f32.mrf.mxu0
    %v558 = vadd.f32 %v539, %v557
    %v559 = vpop.f32.mrf.mxu0
    %v560 = vadd.f32 %v541, %v559
    %561 = vmatmul.bf16.gmra.mxu0 %v106
    %v562 = vpop.f32.mrf.mxu0
    %v563 = vadd.f32 %v544, %v562
    %v564 = vpop.f32.mrf.mxu0
    %v565 = vadd.f32 %v546, %v564
    %566 = vdwg.mxu0
    %567 = vmatpush.bf16.msra.mxu0 %v393
    %568 = vmatpush.bf16.msra.mxu0 %v389
    %569 = vmatpush.bf16.msra.mxu0 %v385
    %570 = vmatpush.bf16.msra.mxu0 %v381
    %571 = vmatpush.bf16.msra.mxu0 %v377
    %572 = vmatpush.bf16.msra.mxu0 %v373
    %573 = vmatpush.bf16.msra.mxu0 %v369
    %574 = vmatpush.bf16.msra.mxu0 %v365
    %575 = vmatmul.bf16.gmra.mxu0 %v103
    %v576 = vpop.f32.mrf.mxu0
    %v577 = vadd.f32 0.0, %v576
    %v578 = vpop.f32.mrf.mxu0
    %v579 = vadd.f32 0.0, %v578
    %580 = vmatmul.bf16.gmra.mxu0 %v105
    %v581 = vpop.f32.mrf.mxu0
    %v582 = vadd.f32 0.0, %v581
    %v583 = vpop.f32.mrf.mxu0
    %v584 = vadd.f32 0.0, %v583
    %585 = vdwg.mxu0
    %586 = vmatpush.bf16.msra.mxu0 %v425
    %587 = vmatpush.bf16.msra.mxu0 %v421
    %588 = vmatpush.bf16.msra.mxu0 %v417
    %589 = vmatpush.bf16.msra.mxu0 %v413
    %590 = vmatpush.bf16.msra.mxu0 %v409
    %591 = vmatpush.bf16.msra.mxu0 %v405
    %592 = vmatpush.bf16.msra.mxu0 %v401
    %593 = vmatpush.bf16.msra.mxu0 %v397
    %594 = vmatmul.bf16.gmra.mxu0 %v104
    %v595 = vpop.f32.mrf.mxu0
    %v596 = vadd.f32 %v577, %v595
    %v597 = vpop.f32.mrf.mxu0
    %v598 = vadd.f32 %v579, %v597
    %599 = vmatmul.bf16.gmra.mxu0 %v106
    %v600 = vpop.f32.mrf.mxu0
    %v601 = vadd.f32 %v582, %v600
    %v602 = vpop.f32.mrf.mxu0
    %v603 = vadd.f32 %v584, %v602
    %604 = vdwg.mxu0
    %605 = vmatpush.bf16.msra.mxu0 %v394
    %606 = vmatpush.bf16.msra.mxu0 %v390
    %607 = vmatpush.bf16.msra.mxu0 %v386
    %608 = vmatpush.bf16.msra.mxu0 %v382
    %609 = vmatpush.bf16.msra.mxu0 %v378
    %610 = vmatpush.bf16.msra.mxu0 %v374
    %611 = vmatpush.bf16.msra.mxu0 %v370
    %612 = vmatpush.bf16.msra.mxu0 %v366
    %613 = vmatmul.bf16.gmra.mxu0 %v103
    %v614 = vpop.f32.mrf.mxu0
    %v615 = vadd.f32 0.0, %v614
    %v616 = vpop.f32.mrf.mxu0
    %v617 = vadd.f32 0.0, %v616
    %618 = vmatmul.bf16.gmra.mxu0 %v105
    %v619 = vpop.f32.mrf.mxu0
    %v620 = vadd.f32 0.0, %v619
    %v621 = vpop.f32.mrf.mxu0
    %v622 = vadd.f32 0.0, %v621
    %623 = vdwg.mxu0
    %624 = vmatpush.bf16.msra.mxu0 %v426
    %625 = vmatpush.bf16.msra.mxu0 %v422
    %626 = vmatpush.bf16.msra.mxu0 %v418
    %627 = vmatpush.bf16.msra.mxu0 %v414
    %628 = vmatpush.bf16.msra.mxu0 %v410
    %629 = vmatpush.bf16.msra.mxu0 %v406
    %630 = vmatpush.bf16.msra.mxu0 %v402
    %631 = vmatpush.bf16.msra.mxu0 %v398
    %632 = vmatmul.bf16.gmra.mxu0 %v104
    %v633 = vpop.f32.mrf.mxu0
    %v634 = vadd.f32 %v615, %v633
    %v635 = vpop.f32.mrf.mxu0
    %v636 = vadd.f32 %v617, %v635
    %637 = vmatmul.bf16.gmra.mxu0 %v106
    %v638 = vpop.f32.mrf.mxu0
    %v639 = vadd.f32 %v620, %v638
    %v640 = vpop.f32.mrf.mxu0
    %v641 = vadd.f32 %v622, %v640
    %642 = vdwg.mxu0
    %v643 = vadd.f32 %v79, %v520
    %v644 = vadd.f32 %v80, %v558
    %v645 = vadd.f32 %v81, %v596
    %v646 = vadd.f32 %v82, %v634
    %v647 = vadd.f32 %v83, %v522
    %v648 = vadd.f32 %v84, %v560
    %v649 = vadd.f32 %v85, %v598
    %v650 = vadd.f32 %v86, %v636
    %v651 = vadd.f32 %v87, %v525
    %v652 = vadd.f32 %v88, %v563
    %v653 = vadd.f32 %v89, %v601
    %v654 = vadd.f32 %v90, %v639
    %v655 = vadd.f32 %v91, %v527
    %v656 = vadd.f32 %v92, %v565
    %v657 = vadd.f32 %v93, %v603
    %v658 = vadd.f32 %v94, %v641
    %659 = vst [vmem:[#allocation2] sm:$0xff] %v643
    %660 = vst [vmem:[#allocation2 + $0x8] sm:$0xff] %v644
    %661 = vst [vmem:[#allocation2 + $0x10] sm:$0xff] %v645
    %662 = vst [vmem:[#allocation2 + $0x18] sm:$0xff] %v646
    %663 = vst [vmem:[#allocation2 + $0x20] sm:$0xff] %v647
    %664 = vst [vmem:[#allocation2 + $0x28] sm:$0xff] %v648
    %665 = vst [vmem:[#allocation2 + $0x30] sm:$0xff] %v649
    %666 = vst [vmem:[#allocation2 + $0x38] sm:$0xff] %v650
    %667 = vst [vmem:[#allocation2 + $0x40] sm:$0xff] %v651
    %668 = vst [vmem:[#allocation2 + $0x48] sm:$0xff] %v652
    %669 = vst [vmem:[#allocation2 + $0x50] sm:$0xff] %v653
    %670 = vst [vmem:[#allocation2 + $0x58] sm:$0xff] %v654
    %671 = vst [vmem:[#allocation2 + $0x60] sm:$0xff] %v655
    %672 = vst [vmem:[#allocation2 + $0x68] sm:$0xff] %v656
    %673 = vst [vmem:[#allocation2 + $0x70] sm:$0xff] %v657
    %674 = vst [vmem:[#allocation2 + $0x78] sm:$0xff] %v658
    // Predicated region
    $region30: #{flash_roberta_layer.5} parent=1 // pred_check
      %p675 = pneg %p59
    $region31: #{flash_roberta_layer.5} parent=1 // pred_check_branch
      %677 = sbr.rel (%p675) target = $region33
    $region32: #{flash_roberta_layer.5} parent=1 // pred_region
      %v678 = vld [vmem:[#allocation2] sm:$0xff]
      %v679 = vld [vmem:[#allocation2 + $0x8] sm:$0xff]
      %v680 = vld [vmem:[#allocation2 + $0x10] sm:$0xff]
      %v681 = vld [vmem:[#allocation2 + $0x18] sm:$0xff]
      %v682 = vld [vmem:[#allocation2 + $0x20] sm:$0xff]
      %v683 = vld [vmem:[#allocation2 + $0x28] sm:$0xff]
      %v684 = vld [vmem:[#allocation2 + $0x30] sm:$0xff]
      %v685 = vld [vmem:[#allocation2 + $0x38] sm:$0xff]
      %v686 = vld [vmem:[#allocation2 + $0x40] sm:$0xff]
      %v687 = vld [vmem:[#allocation2 + $0x48] sm:$0xff]
      %v688 = vld [vmem:[#allocation2 + $0x50] sm:$0xff]
      %v689 = vld [vmem:[#allocation2 + $0x58] sm:$0xff]
      %v690 = vld [vmem:[#allocation2 + $0x60] sm:$0xff]
      %v691 = vld [vmem:[#allocation2 + $0x68] sm:$0xff]
      %v692 = vld [vmem:[#allocation2 + $0x70] sm:$0xff]
      %v693 = vld [vmem:[#allocation2 + $0x78] sm:$0xff]
      %v694 = vld [vmem:[#allocation7] sm:$0xf]
      %v696 = vperm.slane %v694, 0
      %v697 = vperm.slane %v694, 1
      %v698 = vperm.slane %v694, 2
      %v699 = vperm.slane %v694, 3
      %v704 = vadd.f32 %v678, %v696
      %v705 = vadd.f32 %v679, %v697
      %v706 = vadd.f32 %v680, %v698
      %v707 = vadd.f32 %v681, %v699
      %v708 = vadd.f32 %v682, %v696
      %v709 = vadd.f32 %v683, %v697
      %v710 = vadd.f32 %v684, %v698
      %v711 = vadd.f32 %v685, %v699
      %v712 = vadd.f32 %v686, %v696
      %v713 = vadd.f32 %v687, %v697
      %v714 = vadd.f32 %v688, %v698
      %v715 = vadd.f32 %v689, %v699
      %v716 = vadd.f32 %v690, %v696
      %v717 = vadd.f32 %v691, %v697
      %v718 = vadd.f32 %v692, %v698
      %v719 = vadd.f32 %v693, %v699
      %720 = vst [vmem:[%s3] sm:$0xff] %v704
      %721 = vst [vmem:[%s3 + $0x8] sm:$0xff] %v705
      %722 = vst [vmem:[%s3 + $0x10] sm:$0xff] %v706
      %723 = vst [vmem:[%s3 + $0x18] sm:$0xff] %v707
      %724 = vst [vmem:[%s3 + $0x20] sm:$0xff] %v708
      %725 = vst [vmem:[%s3 + $0x28] sm:$0xff] %v709
      %726 = vst [vmem:[%s3 + $0x30] sm:$0xff] %v710
      %727 = vst [vmem:[%s3 + $0x38] sm:$0xff] %v711
      %728 = vst [vmem:[%s3 + $0x40] sm:$0xff] %v712
      %729 = vst [vmem:[%s3 + $0x48] sm:$0xff] %v713
      %730 = vst [vmem:[%s3 + $0x50] sm:$0xff] %v714
      %731 = vst [vmem:[%s3 + $0x58] sm:$0xff] %v715
      %732 = vst [vmem:[%s3 + $0x60] sm:$0xff] %v716
      %733 = vst [vmem:[%s3 + $0x68] sm:$0xff] %v717
      %734 = vst [vmem:[%s3 + $0x70] sm:$0xff] %v718
      %735 = vst [vmem:[%s3 + $0x78] sm:$0xff] %v719
    $region33: #{flash_roberta_layer.5} parent=1 // pred_fallthru
      _
    // Predicated region
    $region34: #{flash_roberta_layer.5} parent=1 // pred_check
      _
    $region35: #{flash_roberta_layer.5} parent=1 // pred_check_branch
      %737 = sbr.rel (0) target = $region37
    $region36: #{flash_roberta_layer.5} parent=1 // pred_region
      _
    $region37: #{flash_roberta_layer.5} parent=1 // pred_fallthru
      _
    // Predicated region
    $region38: #{flash_roberta_layer.5} parent=1 // pred_check
      _
    $region39: #{flash_roberta_layer.5} parent=1 // pred_check_branch
      %739 = sbr.rel (0) target = $region41
    $region40: #{flash_roberta_layer.5} parent=1 // pred_region
      _
    $region41: #{flash_roberta_layer.5} parent=1 // pred_fallthru
      _
    %740 = vsyncpa [#allocation4], 1
    %741 = vsyncpa [#allocation6], 1

// kernel: flash_roberta_layer.6
$region0: #{flash_roberta_layer.6}
  #allocation0 [shape = 'u32[]', space=smem, size = 0x4, offset = 0x4, fixed_abs, tag = 'smem constant byte address 0x4 - core index']
  #allocation1 [shape = 'u32[72,128]{1,0:T(1,128)}', space=vmem, size = 0x9000, scoped, tag = 'internal scratch']
  #allocation2 [shape = 'bf16[2,32,64]{2,1,0:T(8,128)(2,1)}', space=vmem, size = 0x4000, scoped, tag = 'scratch operand']
  #allocation3 [shape = 'f32[2,32,1]{2,1,0:T(8,128)}', space=vmem, size = 0x8000, scoped, tag = 'scratch operand']
  #allocation4 [shape = 'f32[2,32,1]{2,1,0:T(8,128)}', space=vmem, size = 0x8000, scoped, tag = 'scratch operand']
  #allocation5 [shape = 'f32[2,32,64]{2,1,0:T(8,128)}', space=vmem, size = 0x8000, scoped, tag = 'scratch operand']
  %s0 = inlined_call_operand.vmem [shape: f32[2,16,512], index: 0, kind: input, shape index: {}, may-alias: {0,1,2}]
  %s1 = inlined_call_operand.vmem [shape: f32[2,16,512], index: 1, kind: input, shape index: {}, may-alias: {0,1,2}]
  %s2 = inlined_call_operand.vmem [shape: f32[2,16,512], index: 2, kind: input, shape index: {}, may-alias: {0,1,2}]
  %s3 = inlined_call_operand.vmem [shape: f32[16,64], index: 3, kind: input, shape index: {}, may-alias: {3,5}]
  %s4 = inlined_call_operand.hbm [shape: f32[16,64], index: 4, kind: input, shape index: {}, may-alias: {4,6}]
  %s5 = inlined_call_operand.vmem [shape: f32[16,64], index: 5, kind: input, shape index: {}, may-alias: {3,5}]
  %s6 = inlined_call_operand.hbm [shape: f32[16,64], index: 6, kind: input, shape index: {}, may-alias: {4,6}]
  %s7 = inlined_call_operand.vmem [shape: f32[2,16,256], index: 7, kind: output, shape index: {}]
  %s8 = sld [smem:[#allocation0]]
  $region176: #{flash_roberta_layer.6} parent=0
    _
  %s10 = ssub.s32 1, %s8
  %s11 = scalar_select 0, %s10, %s8
  $region1: #{flash_roberta_layer.6} parent=0
    #allocation6 [shape = 'u8[32768]{0}', space=vmem, size = 0x8000, scoped, tag = 'input window, operand 0']
    #allocation7 [shape = 'u8[16384]{0}', space=vmem, size = 0x4000, scoped, tag = 'input window, operand 1']
    #allocation8 [shape = 'u8[16384]{0}', space=vmem, size = 0x4000, scoped, tag = 'input window, operand 2']
    #allocation9 [shape = 'u8[8192]{0}', space=vmem, size = 0x2000, scoped, tag = 'input window, operand 4, single buffered']
    #allocation10 [shape = 's32[2]{0}', space=sflag, size = 0x8, scoped, tag = 'scoped memory for flash_roberta_layer.6']
    #allocation11 [shape = 'u8[8192]{0}', space=vmem, size = 0x2000, scoped, tag = 'input window, operand 6, single buffered']
    #allocation12 [shape = 's32[1]{0}', space=sflag, size = 0x4, scoped, tag = 'scoped memory for flash_roberta_layer.6']
    %12 = vsyncpa [#allocation10], 0
    %13 = vsyncpa [#allocation12], 0
    loop: start=0, step=1, limit=4
    $region2: #{flash_roberta_layer.6} parent=1 // loop_pre_header
      _
    $region3: #{flash_roberta_layer.6} parent=1 // loop_header
      %s15 = sphi 0, %s19
      %p16 = scmp.ge.s32.totalorder %s15, 4
      %s22 = sphi 0, %s41
      %s23 = sphi 0, %s37
      %s24 = sphi 0, %s33
      %s25 = sphi 0, %s22
      %s26 = sphi 0, %s23
      %s27 = sphi 0, %s24
      %s28 = sphi 0, %s25
      %s29 = sphi 0, %s26
      %s30 = sphi 0, %s27
      %s46 = sphi 0, %s48
      %s49 = sphi 0, %s46
      %s50 = sphi 0, %s49
      %s66 = sphi 0, %s50
      %s74 = sphi 0, %s76
      %s77 = sphi 0, %s74
      %s78 = sphi 0, %s77
      %s94 = sphi 0, %s78
      %s102 = sphi 0, %s104
      %s105 = sphi 0, %s102
      %s106 = sphi 0, %s105
      %s122 = sphi 0, %s106
      %s128 = sphi 0, %s130
      %s131 = sphi 0, %s128
      %s132 = sphi 0, %s131
      %s148 = sphi 0, %s132
      %s154 = sphi 0, %s156
      %s157 = sphi 0, %s154
      %s158 = sphi 0, %s157
      %s174 = sphi 0, %s158
      %s180 = sphi 0, %s182
      %s183 = sphi 0, %s180
      %s184 = sphi 0, %s183
      %s200 = sphi 0, %s184
      %s206 = sphi 0, %s208
      %s209 = sphi 0, %s206
      %s210 = sphi 0, %s209
      %s226 = sphi 0, %s210
      %s234 = sphi 0, %s236
      %s237 = sphi 0, %s234
      %s238 = sphi 0, %s237
      %s254 = sphi 0, %s238
    $region4: #{flash_roberta_layer.6} parent=1 // loop_header_branch
      %18 = sbr.rel (%p16) target = $region8
    $region5: #{flash_roberta_layer.6} parent=1 // loop_body
      %s20 = ssub.s32 %s15, 1
      %s21 = ssub.s32 %s15, 2
      %s31 = sadd.s32 1, %s24
      %p32 = scmp.ge.s32.totalorder %s31, 1
      %s33 = scalar_select %p32, 0, %s31
      %s34 = sadd.s32 1, %s23
      %s35 = scalar_select %p32, %s34, %s23
      %p36 = scmp.ge.s32.totalorder %s35, 1
      %s37 = scalar_select %p36, 0, %s35
      %s38 = sadd.s32 1, %s22
      %s39 = scalar_select %p36, %s38, %s22
      %p40 = scmp.ge.s32.totalorder %s39, 2
      %s41 = scalar_select %p40, 0, %s39
      %s42 = ssub.s32 %s22, %s41
      %s43 = ssub.s32 %s23, %s37
      %s44 = sor.u32 %s42, %s43
      %p45 = scmp.eq.s32.totalorder %s44, 0
      %s47 = sadd.s32 %s46, 1
      %s48 = scalar_select %p45, %s46, %s47
      %p51 = pneg %p45
      %p52 = scmp.eq.s32.totalorder %s15, 1
      %p53 = por %p51, %p52
      %p54 = scmp.ne.s32.totalorder %s46, %s49
      %p55 = scmp.eq.s32.totalorder %s15, 0
      %p56 = por %p54, %p55
      %p57 = scmp.ne.s32.totalorder %s46, %s49
      %p58 = scmp.eq.s32.totalorder %s20, 1
      %p59 = por %p57, %p58
      %p60 = scmp.ne.s32.totalorder %s49, %s50
      %p61 = scmp.eq.s32.totalorder %s20, 0
      %p62 = por %p60, %p61
      %p63 = scmp.ne.s32.totalorder %s49, %s50
      %p64 = scmp.eq.s32.totalorder %s21, 1
      %p65 = por %p63, %p64
      %p67 = scmp.ne.s32.totalorder %s50, %s66
      %p68 = scmp.eq.s32.totalorder %s21, 0
      %p69 = por %p67, %p68
      %s70 = ssub.s32 %s22, %s41
      %s71 = ssub.s32 %s24, %s33
      %s72 = sor.u32 %s70, %s71
      %p73 = scmp.eq.s32.totalorder %s72, 0
      %s75 = sadd.s32 %s74, 1
      %s76 = scalar_select %p73, %s74, %s75
      %p79 = pneg %p73
      %p80 = scmp.eq.s32.totalorder %s15, 1
      %p81 = por %p79, %p80
      %p82 = scmp.ne.s32.totalorder %s74, %s77
      %p83 = scmp.eq.s32.totalorder %s15, 0
      %p84 = por %p82, %p83
      %p85 = scmp.ne.s32.totalorder %s74, %s77
      %p86 = scmp.eq.s32.totalorder %s20, 1
      %p87 = por %p85, %p86
      %p88 = scmp.ne.s32.totalorder %s77, %s78
      %p89 = scmp.eq.s32.totalorder %s20, 0
      %p90 = por %p88, %p89
      %p91 = scmp.ne.s32.totalorder %s77, %s78
      %p92 = scmp.eq.s32.totalorder %s21, 1
      %p93 = por %p91, %p92
      %p95 = scmp.ne.s32.totalorder %s78, %s94
      %p96 = scmp.eq.s32.totalorder %s21, 0
      %p97 = por %p95, %p96
      %s98 = ssub.s32 %s22, %s41
      %s99 = ssub.s32 %s24, %s33
      %s100 = sor.u32 %s98, %s99
      %p101 = scmp.eq.s32.totalorder %s100, 0
      %s103 = sadd.s32 %s102, 1
      %s104 = scalar_select %p101, %s102, %s103
      %p107 = pneg %p101
      %p108 = scmp.eq.s32.totalorder %s15, 1
      %p109 = por %p107, %p108
      %p110 = scmp.ne.s32.totalorder %s102, %s105
      %p111 = scmp.eq.s32.totalorder %s15, 0
      %p112 = por %p110, %p111
      %p113 = scmp.ne.s32.totalorder %s102, %s105
      %p114 = scmp.eq.s32.totalorder %s20, 1
      %p115 = por %p113, %p114
      %p116 = scmp.ne.s32.totalorder %s105, %s106
      %p117 = scmp.eq.s32.totalorder %s20, 0
      %p118 = por %p116, %p117
      %p119 = scmp.ne.s32.totalorder %s105, %s106
      %p120 = scmp.eq.s32.totalorder %s21, 1
      %p121 = por %p119, %p120
      %p123 = scmp.ne.s32.totalorder %s106, %s122
      %p124 = scmp.eq.s32.totalorder %s21, 0
      %p125 = por %p123, %p124
      %s126 = ssub.s32 %s23, %s37
      %p127 = scmp.eq.s32.totalorder %s126, 0
      %s129 = sadd.s32 %s128, 1
      %s130 = scalar_select %p127, %s128, %s129
      %p133 = pneg %p127
      %p134 = scmp.eq.s32.totalorder %s15, 1
      %p135 = por %p133, %p134
      %p136 = scmp.ne.s32.totalorder %s128, %s131
      %p137 = scmp.eq.s32.totalorder %s15, 0
      %p138 = por %p136, %p137
      %p139 = scmp.ne.s32.totalorder %s128, %s131
      %p140 = scmp.eq.s32.totalorder %s20, 1
      %p141 = por %p139, %p140
      %p142 = scmp.ne.s32.totalorder %s131, %s132
      %p143 = scmp.eq.s32.totalorder %s20, 0
      %p144 = por %p142, %p143
      %p145 = scmp.ne.s32.totalorder %s131, %s132
      %p146 = scmp.eq.s32.totalorder %s21, 1
      %p147 = por %p145, %p146
      %p149 = scmp.ne.s32.totalorder %s132, %s148
      %p150 = scmp.eq.s32.totalorder %s21, 0
      %p151 = por %p149, %p150
      %s152 = ssub.s32 %s23, %s37
      %p153 = scmp.eq.s32.totalorder %s152, 0
      %s155 = sadd.s32 %s154, 1
      %s156 = scalar_select %p153, %s154, %s155
      %p159 = pneg %p153
      %p160 = scmp.eq.s32.totalorder %s15, 1
      %p161 = por %p159, %p160
      %p162 = scmp.ne.s32.totalorder %s154, %s157
      %p163 = scmp.eq.s32.totalorder %s15, 0
      %p164 = por %p162, %p163
      %p165 = scmp.ne.s32.totalorder %s154, %s157
      %p166 = scmp.eq.s32.totalorder %s20, 1
      %p167 = por %p165, %p166
      %p168 = scmp.ne.s32.totalorder %s157, %s158
      %p169 = scmp.eq.s32.totalorder %s20, 0
      %p170 = por %p168, %p169
      %p171 = scmp.ne.s32.totalorder %s157, %s158
      %p172 = scmp.eq.s32.totalorder %s21, 1
      %p173 = por %p171, %p172
      %p175 = scmp.ne.s32.totalorder %s158, %s174
      %p176 = scmp.eq.s32.totalorder %s21, 0
      %p177 = por %p175, %p176
      %s178 = ssub.s32 %s24, %s33
      %p179 = scmp.eq.s32.totalorder %s178, 0
      %s181 = sadd.s32 %s180, 1
      %s182 = scalar_select %p179, %s180, %s181
      %p185 = pneg %p179
      %p186 = scmp.eq.s32.totalorder %s15, 1
      %p187 = por %p185, %p186
      %p188 = scmp.ne.s32.totalorder %s180, %s183
      %p189 = scmp.eq.s32.totalorder %s15, 0
      %p190 = por %p188, %p189
      %p191 = scmp.ne.s32.totalorder %s180, %s183
      %p192 = scmp.eq.s32.totalorder %s20, 1
      %p193 = por %p191, %p192
      %p194 = scmp.ne.s32.totalorder %s183, %s184
      %p195 = scmp.eq.s32.totalorder %s20, 0
      %p196 = por %p194, %p195
      %p197 = scmp.ne.s32.totalorder %s183, %s184
      %p198 = scmp.eq.s32.totalorder %s21, 1
      %p199 = por %p197, %p198
      %p201 = scmp.ne.s32.totalorder %s184, %s200
      %p202 = scmp.eq.s32.totalorder %s21, 0
      %p203 = por %p201, %p202
      %s204 = ssub.s32 %s24, %s33
      %p205 = scmp.eq.s32.totalorder %s204, 0
      %s207 = sadd.s32 %s206, 1
      %s208 = scalar_select %p205, %s206, %s207
      %p211 = pneg %p205
      %p212 = scmp.eq.s32.totalorder %s15, 1
      %p213 = por %p211, %p212
      %p214 = scmp.ne.s32.totalorder %s206, %s209
      %p215 = scmp.eq.s32.totalorder %s15, 0
      %p216 = por %p214, %p215
      %p217 = scmp.ne.s32.totalorder %s206, %s209
      %p218 = scmp.eq.s32.totalorder %s20, 1
      %p219 = por %p217, %p218
      %p220 = scmp.ne.s32.totalorder %s209, %s210
      %p221 = scmp.eq.s32.totalorder %s20, 0
      %p222 = por %p220, %p221
      %p223 = scmp.ne.s32.totalorder %s209, %s210
      %p224 = scmp.eq.s32.totalorder %s21, 1
      %p225 = por %p223, %p224
      %p227 = scmp.ne.s32.totalorder %s210, %s226
      %p228 = scmp.eq.s32.totalorder %s21, 0
      %p229 = por %p227, %p228
      %s230 = ssub.s32 %s22, %s41
      %s231 = ssub.s32 %s23, %s37
      %s232 = sor.u32 %s230, %s231
      %p233 = scmp.eq.s32.totalorder %s232, 0
      %s235 = sadd.s32 %s234, 1
      %s236 = scalar_select %p233, %s234, %s235
      %p239 = pneg %p233
      %p240 = scmp.eq.s32.totalorder %s15, 1
      %p241 = por %p239, %p240
      %p242 = scmp.ne.s32.totalorder %s234, %s237
      %p243 = scmp.eq.s32.totalorder %s15, 0
      %p244 = por %p242, %p243
      %p245 = scmp.ne.s32.totalorder %s234, %s237
      %p246 = scmp.eq.s32.totalorder %s20, 1
      %p247 = por %p245, %p246
      %p248 = scmp.ne.s32.totalorder %s237, %s238
      %p249 = scmp.eq.s32.totalorder %s20, 0
      %p250 = por %p248, %p249
      %p251 = scmp.ne.s32.totalorder %s237, %s238
      %p252 = scmp.eq.s32.totalorder %s21, 1
      %p253 = por %p251, %p252
      %p255 = scmp.ne.s32.totalorder %s238, %s254
      %p256 = scmp.eq.s32.totalorder %s21, 0
      %p257 = por %p255, %p256
      %p258 = scmp.le.s32.totalorder 1, %s15
      %p259 = scmp.lt.s32.totalorder %s15, 3
      %p260 = pnand %p258, %p259
      %p261 = pneg %p260
      // Predicated region
      $region9: #{flash_roberta_layer.6} parent=5 // pred_check
        _
      $region10: #{flash_roberta_layer.6} parent=5 // pred_check_branch
        %263 = sbr.rel (%p260) target = $region12
      $region11: #{flash_roberta_layer.6} parent=5 // pred_region
        %s264 = ssub.s32 %s15, 1
        // Predicated region
        $region13: #{flash_roberta_layer.6} parent=11 // pred_check
          %p265 = pneg %p144
        $region14: #{flash_roberta_layer.6} parent=11 // pred_check_branch
          %267 = sbr.rel (%p265) target = $region16
        $region15: #{flash_roberta_layer.6} parent=11 // pred_region
          %s268 = smul.u32 2, %s26
          %p269 = scmp.lt.s32.totalorder %s268, 1
          %s270 = scalar_select %p269, %s268, 1
          %s271 = smul.addr %s270, 8
          %s272 = scalar_lea.vmem %s3, %s271
          %s273 = smul.u32 2, %s26
        $region16: #{flash_roberta_layer.6} parent=11 // pred_fallthru
          _
        // Predicated region
        $region17: #{flash_roberta_layer.6} parent=11 // pred_check
          %p274 = pneg %p170
        $region18: #{flash_roberta_layer.6} parent=11 // pred_check_branch
          %276 = sbr.rel (%p274) target = $region20
        $region19: #{flash_roberta_layer.6} parent=11 // pred_region
          %s277 = smul.u32 2, %s26
          %279 = vsyncadd [#allocation10], 0
          %s280 = smul.addr %s277, 8
          %s281 = scalar_lea.hbm %s4, %s280
          %s282 = sshll.u32 %s281, 4
          %s283 = int_to_ptr.hbm [resolvable:$true] %s282
          %s284 = sshll.u32 [#allocation9], 4
          %s285 = int_to_ptr.vmem [resolvable:$true] %s284
          %290 = dma.hbm_to_vmem [thread:$0]  %s283, 256, %s285, [#allocation10], 128, 128, 8
        $region20: #{flash_roberta_layer.6} parent=11 // pred_fallthru
          _
        // Predicated region
        $region21: #{flash_roberta_layer.6} parent=11 // pred_check
          %p291 = pneg %p196
        $region22: #{flash_roberta_layer.6} parent=11 // pred_check_branch
          %293 = sbr.rel (%p291) target = $region24
        $region23: #{flash_roberta_layer.6} parent=11 // pred_region
          %s294 = smul.u32 2, %s27
          %p295 = scmp.lt.s32.totalorder %s294, 1
          %s296 = scalar_select %p295, %s294, 1
          %s297 = smul.addr %s296, 8
          %s298 = scalar_lea.vmem %s5, %s297
          %s299 = smul.u32 2, %s27
        $region24: #{flash_roberta_layer.6} parent=11 // pred_fallthru
          _
        // Predicated region
        $region25: #{flash_roberta_layer.6} parent=11 // pred_check
          %p300 = pneg %p222
        $region26: #{flash_roberta_layer.6} parent=11 // pred_check_branch
          %302 = sbr.rel (%p300) target = $region28
        $region27: #{flash_roberta_layer.6} parent=11 // pred_region
          %s303 = smul.u32 2, %s27
          %305 = vsyncadd [#allocation12], 0
          %s306 = smul.addr %s303, 8
          %s307 = scalar_lea.hbm %s6, %s306
          %s308 = sshll.u32 %s307, 4
          %s309 = int_to_ptr.hbm [resolvable:$true] %s308
          %s310 = sshll.u32 [#allocation11], 4
          %s311 = int_to_ptr.vmem [resolvable:$true] %s310
          %316 = dma.hbm_to_vmem [thread:$0]  %s309, 256, %s311, [#allocation12], 128, 128, 8
        $region28: #{flash_roberta_layer.6} parent=11 // pred_fallthru
          _
      $region12: #{flash_roberta_layer.6} parent=5 // pred_fallthru
        _
      %p317 = scmp.lt.s32.totalorder %s15, 2
      // Predicated region
      $region29: #{flash_roberta_layer.6} parent=5 // pred_check
        %p318 = pneg %p317
      $region30: #{flash_roberta_layer.6} parent=5 // pred_check_branch
        %320 = sbr.rel (%p318) target = $region32
      $region31: #{flash_roberta_layer.6} parent=5 // pred_region
        // Predicated region
        $region33: #{flash_roberta_layer.6} parent=31 // pred_check
          %p321 = pneg %p56
        $region34: #{flash_roberta_layer.6} parent=31 // pred_check_branch
          %323 = sbr.rel (%p321) target = $region36
        $region35: #{flash_roberta_layer.6} parent=31 // pred_region
          %s324 = sand.u32 %s46, 1
          %s325 = sand.u32 %s46, 1
          %s326 = smul.addr %s325, 32
          %s327 = scalar_lea.vmem [#allocation6], %s326
          %s328 = smul.u32 2, %s23
          %s329 = smul.addr %s328, 4
          %s330 = smul.addr %s22, 8
          %s331 = sadd.s32 %s329, %s330
          %s332 = smul.addr %s331, 8
          %s333 = scalar_lea.vmem %s0, %s332
          // Predicated region
          $region37: #{flash_roberta_layer.6} parent=35 // pred_check
            _
          $region38: #{flash_roberta_layer.6} parent=35 // pred_check_branch
            %335 = sbr.rel (0) target = $region40
          $region39: #{flash_roberta_layer.6} parent=35 // pred_region
            // Predicated region
            $region41: #{flash_roberta_layer.6} parent=39 // pred_check
              _
            $region42: #{flash_roberta_layer.6} parent=39 // pred_check_branch
              %337 = sbr.rel (0) target = $region44
            $region43: #{flash_roberta_layer.6} parent=39 // pred_region
              loop: start=0, step=1, limit=1
              $region45: #{flash_roberta_layer.6} parent=43 // loop_pre_header
                _
              $region46: #{flash_roberta_layer.6} parent=43 // loop_header
                %s339 = sphi 0, %s343
                %p340 = scmp.ge.s32.totalorder %s339, 1
                %s344 = sphi %s333, %s333
                %s345 = sphi %s327, %s327
              $region47: #{flash_roberta_layer.6} parent=43 // loop_header_branch
                %342 = sbr.rel (%p340) target = $region51
              $region48: #{flash_roberta_layer.6} parent=43 // loop_body
                %v346 = vld [vmem:[%s344] sm:$0xff]
                %347 = vst [vmem:[%s345] sm:$0xff] %v346
                %v348 = vld [vmem:[%s344 + $0x8] sm:$0xff]
                %349 = vst [vmem:[%s345 + $0x8] sm:$0xff] %v348
                %v350 = vld [vmem:[%s344 + $0x20] sm:$0xff]
                %351 = vst [vmem:[%s345 + $0x10] sm:$0xff] %v350
                %v352 = vld [vmem:[%s344 + $0x28] sm:$0xff]
                %353 = vst [vmem:[%s345 + $0x18] sm:$0xff] %v352
              $region49: #{flash_roberta_layer.6} parent=43 // loop_footer
                %s343 = sadd.s32 1, %s339
              $region50: #{flash_roberta_layer.6} parent=43 // loop_footer_branch
                %338 = sbr.rel target = $region46
              $region51: #{flash_roberta_layer.6} parent=43 // loop_exit
                _
            $region44: #{flash_roberta_layer.6} parent=39 // pred_fallthru
              _
            // Predicated region
            $region52: #{flash_roberta_layer.6} parent=39 // pred_check
              _
            $region53: #{flash_roberta_layer.6} parent=39 // pred_check_branch
              %355 = sbr.rel target = $region55
            $region54: #{flash_roberta_layer.6} parent=39 // pred_region
              _
            $region55: #{flash_roberta_layer.6} parent=39 // pred_fallthru
              _
          $region40: #{flash_roberta_layer.6} parent=35 // pred_fallthru
            _
          %356 = vnop
        $region36: #{flash_roberta_layer.6} parent=31 // pred_fallthru
          _
        // Predicated region
        $region56: #{flash_roberta_layer.6} parent=31 // pred_check
          %p357 = pneg %p84
        $region57: #{flash_roberta_layer.6} parent=31 // pred_check_branch
          %359 = sbr.rel (%p357) target = $region59
        $region58: #{flash_roberta_layer.6} parent=31 // pred_region
          %s360 = sand.u32 %s74, 1
          %s361 = sand.u32 %s74, 1
          %s362 = smul.addr %s361, 16
          %s363 = scalar_lea.vmem [#allocation7], %s362
          %s364 = smul.u32 2, %s24
          %s365 = smul.addr %s364, 4
          %s366 = sadd.s32 2, %s365
          %s367 = smul.addr %s22, 8
          %s368 = sadd.s32 %s366, %s367
          %s369 = smul.addr %s368, 8
          %s370 = scalar_lea.vmem %s1, %s369
          // Predicated region
          $region60: #{flash_roberta_layer.6} parent=58 // pred_check
            _
          $region61: #{flash_roberta_layer.6} parent=58 // pred_check_branch
            %372 = sbr.rel (0) target = $region63
          $region62: #{flash_roberta_layer.6} parent=58 // pred_region
            // Predicated region
            $region64: #{flash_roberta_layer.6} parent=62 // pred_check
              _
            $region65: #{flash_roberta_layer.6} parent=62 // pred_check_branch
              %374 = sbr.rel (0) target = $region67
            $region66: #{flash_roberta_layer.6} parent=62 // pred_region
              // Predicated region
              $region79: #{flash_roberta_layer.6} parent=66 // pred_check
                _
              $region80: #{flash_roberta_layer.6} parent=66 // pred_check_branch
                %392 = sbr.rel (0) target = $region82
              $region81: #{flash_roberta_layer.6} parent=66 // pred_region
                loop: start=0, step=1, limit=1
                $region83: #{flash_roberta_layer.6} parent=81 // loop_pre_header
                  _
                $region84: #{flash_roberta_layer.6} parent=81 // loop_header
                  %s394 = sphi 0, %s398
                  %p395 = scmp.ge.s32.totalorder %s394, 1
                  %s399 = sphi %s370, %s370
                  %s400 = sphi %s363, %s363
                $region85: #{flash_roberta_layer.6} parent=81 // loop_header_branch
                  %397 = sbr.rel (%p395) target = $region89
                $region86: #{flash_roberta_layer.6} parent=81 // loop_body
                  %v401 = vld [vmem:[%s399] sm:$0xff]
                  %402 = vst [vmem:[%s400] sm:$0xff] %v401
                  %v403 = vld [vmem:[%s399 + $0x20] sm:$0xff]
                  %404 = vst [vmem:[%s400 + $0x8] sm:$0xff] %v403
                $region87: #{flash_roberta_layer.6} parent=81 // loop_footer
                  %s398 = sadd.s32 1, %s394
                $region88: #{flash_roberta_layer.6} parent=81 // loop_footer_branch
                  %393 = sbr.rel target = $region84
                $region89: #{flash_roberta_layer.6} parent=81 // loop_exit
                  _
              $region82: #{flash_roberta_layer.6} parent=66 // pred_fallthru
                _
              // Predicated region
              $region90: #{flash_roberta_layer.6} parent=66 // pred_check
                _
              $region91: #{flash_roberta_layer.6} parent=66 // pred_check_branch
                %406 = sbr.rel target = $region93
              $region92: #{flash_roberta_layer.6} parent=66 // pred_region
                _
              $region93: #{flash_roberta_layer.6} parent=66 // pred_fallthru
                _
            $region67: #{flash_roberta_layer.6} parent=62 // pred_fallthru
              _
            // Predicated region
            $region68: #{flash_roberta_layer.6} parent=62 // pred_check
              _
            $region69: #{flash_roberta_layer.6} parent=62 // pred_check_branch
              %376 = sbr.rel target = $region71
            $region70: #{flash_roberta_layer.6} parent=62 // pred_region
              %s378 = ssub.s32 256, 1
              loop: start=0, step=1, limit=1
              $region72: #{flash_roberta_layer.6} parent=70 // loop_pre_header
                _
              $region73: #{flash_roberta_layer.6} parent=70 // loop_header
                %s380 = sphi 0, %s384
                %p381 = scmp.ge.s32.totalorder %s380, 1
                %s385 = sphi %s370, %s370
                %s386 = sphi %s363, %s363
              $region74: #{flash_roberta_layer.6} parent=70 // loop_header_branch
                %383 = sbr.rel (%p381) target = $region78
              $region75: #{flash_roberta_layer.6} parent=70 // loop_body
                %v387 = vld [vmem:[%s385] sm:%s378]
                %388 = vst [vmem:[%s386] sm:%s378] %v387
                %v389 = vld [vmem:[%s385 + $0x20] sm:%s378]
                %390 = vst [vmem:[%s386 + $0x8] sm:%s378] %v389
              $region76: #{flash_roberta_layer.6} parent=70 // loop_footer
                %s384 = sadd.s32 1, %s380
              $region77: #{flash_roberta_layer.6} parent=70 // loop_footer_branch
                %379 = sbr.rel target = $region73
              $region78: #{flash_roberta_layer.6} parent=70 // loop_exit
                _
            $region71: #{flash_roberta_layer.6} parent=62 // pred_fallthru
              _
          $region63: #{flash_roberta_layer.6} parent=58 // pred_fallthru
            _
          %407 = vnop
        $region59: #{flash_roberta_layer.6} parent=31 // pred_fallthru
          _
        // Predicated region
        $region94: #{flash_roberta_layer.6} parent=31 // pred_check
          %p408 = pneg %p112
        $region95: #{flash_roberta_layer.6} parent=31 // pred_check_branch
          %410 = sbr.rel (%p408) target = $region97
        $region96: #{flash_roberta_layer.6} parent=31 // pred_region
          %s411 = sand.u32 %s102, 1
          %s412 = sand.u32 %s102, 1
          %s413 = smul.addr %s412, 16
          %s414 = scalar_lea.vmem [#allocation8], %s413
          %s415 = smul.u32 2, %s24
          %s416 = smul.addr %s415, 4
          %s417 = sadd.s32 3, %s416
          %s418 = smul.addr %s22, 8
          %s419 = sadd.s32 %s417, %s418
          %s420 = smul.addr %s419, 8
          %s421 = scalar_lea.vmem %s2, %s420
          // Predicated region
          $region98: #{flash_roberta_layer.6} parent=96 // pred_check
            _
          $region99: #{flash_roberta_layer.6} parent=96 // pred_check_branch
            %423 = sbr.rel (0) target = $region101
          $region100: #{flash_roberta_layer.6} parent=96 // pred_region
            // Predicated region
            $region102: #{flash_roberta_layer.6} parent=100 // pred_check
              _
            $region103: #{flash_roberta_layer.6} parent=100 // pred_check_branch
              %425 = sbr.rel (0) target = $region105
            $region104: #{flash_roberta_layer.6} parent=100 // pred_region
              // Predicated region
              $region117: #{flash_roberta_layer.6} parent=104 // pred_check
                _
              $region118: #{flash_roberta_layer.6} parent=104 // pred_check_branch
                %443 = sbr.rel (0) target = $region120
              $region119: #{flash_roberta_layer.6} parent=104 // pred_region
                loop: start=0, step=1, limit=1
                $region121: #{flash_roberta_layer.6} parent=119 // loop_pre_header
                  _
                $region122: #{flash_roberta_layer.6} parent=119 // loop_header
                  %s445 = sphi 0, %s449
                  %p446 = scmp.ge.s32.totalorder %s445, 1
                  %s450 = sphi %s421, %s421
                  %s451 = sphi %s414, %s414
                $region123: #{flash_roberta_layer.6} parent=119 // loop_header_branch
                  %448 = sbr.rel (%p446) target = $region127
                $region124: #{flash_roberta_layer.6} parent=119 // loop_body
                  %v452 = vld [vmem:[%s450] sm:$0xff]
                  %453 = vst [vmem:[%s451] sm:$0xff] %v452
                  %v454 = vld [vmem:[%s450 + $0x20] sm:$0xff]
                  %455 = vst [vmem:[%s451 + $0x8] sm:$0xff] %v454
                $region125: #{flash_roberta_layer.6} parent=119 // loop_footer
                  %s449 = sadd.s32 1, %s445
                $region126: #{flash_roberta_layer.6} parent=119 // loop_footer_branch
                  %444 = sbr.rel target = $region122
                $region127: #{flash_roberta_layer.6} parent=119 // loop_exit
                  _
              $region120: #{flash_roberta_layer.6} parent=104 // pred_fallthru
                _
              // Predicated region
              $region128: #{flash_roberta_layer.6} parent=104 // pred_check
                _
              $region129: #{flash_roberta_layer.6} parent=104 // pred_check_branch
                %457 = sbr.rel target = $region131
              $region130: #{flash_roberta_layer.6} parent=104 // pred_region
                _
              $region131: #{flash_roberta_layer.6} parent=104 // pred_fallthru
                _
            $region105: #{flash_roberta_layer.6} parent=100 // pred_fallthru
              _
            // Predicated region
            $region106: #{flash_roberta_layer.6} parent=100 // pred_check
              _
            $region107: #{flash_roberta_layer.6} parent=100 // pred_check_branch
              %427 = sbr.rel target = $region109
            $region108: #{flash_roberta_layer.6} parent=100 // pred_region
              %s429 = ssub.s32 256, 1
              loop: start=0, step=1, limit=1
              $region110: #{flash_roberta_layer.6} parent=108 // loop_pre_header
                _
              $region111: #{flash_roberta_layer.6} parent=108 // loop_header
                %s431 = sphi 0, %s435
                %p432 = scmp.ge.s32.totalorder %s431, 1
                %s436 = sphi %s421, %s421
                %s437 = sphi %s414, %s414
              $region112: #{flash_roberta_layer.6} parent=108 // loop_header_branch
                %434 = sbr.rel (%p432) target = $region116
              $region113: #{flash_roberta_layer.6} parent=108 // loop_body
                %v438 = vld [vmem:[%s436] sm:%s429]
                %439 = vst [vmem:[%s437] sm:%s429] %v438
                %v440 = vld [vmem:[%s436 + $0x20] sm:%s429]
                %441 = vst [vmem:[%s437 + $0x8] sm:%s429] %v440
              $region114: #{flash_roberta_layer.6} parent=108 // loop_footer
                %s435 = sadd.s32 1, %s431
              $region115: #{flash_roberta_layer.6} parent=108 // loop_footer_branch
                %430 = sbr.rel target = $region111
              $region116: #{flash_roberta_layer.6} parent=108 // loop_exit
                _
            $region109: #{flash_roberta_layer.6} parent=100 // pred_fallthru
              _
          $region101: #{flash_roberta_layer.6} parent=96 // pred_fallthru
            _
          %458 = vnop
        $region97: #{flash_roberta_layer.6} parent=31 // pred_fallthru
          _
      $region32: #{flash_roberta_layer.6} parent=5 // pred_fallthru
        _
      %p459 = scmp.le.s32.totalorder 1, %s15
      %p460 = scmp.lt.s32.totalorder %s15, 3
      %p461 = pnand %p459, %p460
      %p462 = pneg %p461
      // Predicated region
      $region132: #{flash_roberta_layer.6} parent=5 // pred_check
        _
      $region133: #{flash_roberta_layer.6} parent=5 // pred_check_branch
        %464 = sbr.rel (%p461) target = $region135
      $region134: #{flash_roberta_layer.6} parent=5 // pred_region
        %s465 = ssub.s32 %s15, 1
        %s466 = sand.u32 %s49, 1
        %s467 = sand.u32 %s49, 1
        %s468 = smul.addr %s467, 32
        %s469 = scalar_lea.vmem [#allocation6], %s468
        // Predicated region
        $region136: #{flash_roberta_layer.6} parent=134 // pred_check
          %p470 = pneg %p62
        $region137: #{flash_roberta_layer.6} parent=134 // pred_check_branch
          %472 = sbr.rel (%p470) target = $region139
        $region138: #{flash_roberta_layer.6} parent=134 // pred_region
          _
        $region139: #{flash_roberta_layer.6} parent=134 // pred_fallthru
          _
        %s473 = sand.u32 %s77, 1
        %s474 = sand.u32 %s77, 1
        %s475 = smul.addr %s474, 16
        %s476 = scalar_lea.vmem [#allocation7], %s475
        // Predicated region
        $region140: #{flash_roberta_layer.6} parent=134 // pred_check
          %p477 = pneg %p90
        $region141: #{flash_roberta_layer.6} parent=134 // pred_check_branch
          %479 = sbr.rel (%p477) target = $region143
        $region142: #{flash_roberta_layer.6} parent=134 // pred_region
          _
        $region143: #{flash_roberta_layer.6} parent=134 // pred_fallthru
          _
        %s480 = sand.u32 %s105, 1
        %s481 = sand.u32 %s105, 1
        %s482 = smul.addr %s481, 16
        %s483 = scalar_lea.vmem [#allocation8], %s482
        // Predicated region
        $region144: #{flash_roberta_layer.6} parent=134 // pred_check
          %p484 = pneg %p118
        $region145: #{flash_roberta_layer.6} parent=134 // pred_check_branch
          %486 = sbr.rel (%p484) target = $region147
        $region146: #{flash_roberta_layer.6} parent=134 // pred_region
          _
        $region147: #{flash_roberta_layer.6} parent=134 // pred_fallthru
          _
        // Predicated region
        $region148: #{flash_roberta_layer.6} parent=134 // pred_check
          %p487 = pneg %p170
        $region149: #{flash_roberta_layer.6} parent=134 // pred_check_branch
          %489 = sbr.rel (%p487) target = $region151
        $region150: #{flash_roberta_layer.6} parent=134 // pred_region
          %491 = dma.done [#allocation10], 256
        $region151: #{flash_roberta_layer.6} parent=134 // pred_fallthru
          _
        // Predicated region
        $region152: #{flash_roberta_layer.6} parent=134 // pred_check
          %p492 = pneg %p222
        $region153: #{flash_roberta_layer.6} parent=134 // pred_check_branch
          %494 = sbr.rel (%p492) target = $region155
        $region154: #{flash_roberta_layer.6} parent=134 // pred_region
          %496 = dma.done [#allocation12], 256
        $region155: #{flash_roberta_layer.6} parent=134 // pred_fallthru
          _
        %s497 = sand.u32 %s49, 1
        %s498 = sand.u32 %s49, 1
        %s499 = smul.addr %s498, 32
        %s500 = scalar_lea.vmem [#allocation6], %s499
        %p501 = pneg %p62
        %p502 = pneg %p59
        %s503 = sand.u32 %s77, 1
        %s504 = sand.u32 %s77, 1
        %s505 = smul.addr %s504, 16
        %s506 = scalar_lea.vmem [#allocation7], %s505
        %p507 = pneg %p90
        %p508 = pneg %p87
        %s509 = sand.u32 %s105, 1
        %s510 = sand.u32 %s105, 1
        %s511 = smul.addr %s510, 16
        %s512 = scalar_lea.vmem [#allocation8], %s511
        %p513 = pneg %p118
        %p514 = pneg %p115
        %s515 = smul.u32 2, %s26
        %p516 = scmp.lt.s32.totalorder %s515, 1
        %s517 = scalar_select %p516, %s515, 1
        %s518 = smul.addr %s517, 8
        %s519 = scalar_lea.vmem %s3, %s518
        %p520 = pneg %p144
        %p521 = pneg %p141
        %p522 = pneg %p170
        %p523 = pneg %p167
        %s524 = smul.u32 2, %s27
        %p525 = scmp.lt.s32.totalorder %s524, 1
        %s526 = scalar_select %p525, %s524, 1
        %s527 = smul.addr %s526, 8
        %s528 = scalar_lea.vmem %s5, %s527
        %p529 = pneg %p196
        %p530 = pneg %p193
        %p531 = pneg %p222
        %p532 = pneg %p219
        %p533 = pneg %p250
        %p534 = pneg %p247
        %s535 = smul.u32 2, %s26
        %p536 = scmp.lt.s32.totalorder %s25, 1
        %s537 = scalar_select %p536, %s25, 1
        %p538 = scmp.lt.s32.totalorder %s535, 1
        %s539 = scalar_select %p538, %s535, 1
        %s540 = smul.addr %s539, 2
        %s541 = smul.addr %s537, 4
        %s542 = sadd.s32 %s540, %s541
        %s543 = smul.addr %s542, 8
        %s544 = scalar_lea.vmem %s7, %s543
        %s545 = smul.u32 2, %s26
        %s546 = smul.u32 2, %s27
        %s547 = smul.u32 2, %s27
        %s548 = smul.u32 2, %s26
        %p549 = scmp.lt.s32.totalorder %s548, 1
        %s550 = scalar_select %p549, %s548, 1
        %s551 = smul.addr %s550, 8
        %s552 = scalar_lea.vmem %s3, %s551
        %s553 = smul.u32 2, %s26
        %s554 = smul.u32 2, %s26
        %s555 = smul.u32 2, %s27
        %p556 = scmp.lt.s32.totalorder %s555, 1
        %s557 = scalar_select %p556, %s555, 1
        %s558 = smul.addr %s557, 8
        %s559 = scalar_lea.vmem %s5, %s558
        %s560 = smul.u32 2, %s27
        %s561 = smul.u32 2, %s27
        %s562 = smul.u32 2, %s26
        %p563 = scmp.lt.s32.totalorder %s25, 1
        %s564 = scalar_select %p563, %s25, 1
        %p565 = scmp.lt.s32.totalorder %s562, 1
        %s566 = scalar_select %p565, %s562, 1
        %s567 = smul.addr %s566, 2
        %s568 = smul.addr %s564, 4
        %s569 = sadd.s32 %s567, %s568
        %s570 = smul.addr %s569, 8
        %s571 = scalar_lea.vmem %s7, %s570
        %s572 = smul.u32 2, %s26
        %p574 = scmp.eq.s32.totalorder %s27, 0
        // Predicated region
        $region156: #{flash_roberta_layer.6} parent=134 // pred_check
          %p575 = pneg %p574
        $region157: #{flash_roberta_layer.6} parent=134 // pred_check_branch
          %577 = sbr.rel (%p575) target = $region159
        $region158: #{flash_roberta_layer.6} parent=134 // pred_region
          %vm578 = vcmask 7168
          %579 = vst.msk [vmem:[#allocation3] sm:$0xff] %vm578, -inf
          %580 = vst.msk [vmem:[#allocation3 + $0x8] sm:$0xff] %vm578, -inf
          %581 = vst.msk [vmem:[#allocation3 + $0x10] sm:$0xff] %vm578, -inf
          %582 = vst.msk [vmem:[#allocation3 + $0x18] sm:$0xff] %vm578, -inf
          %583 = vst.msk [vmem:[#allocation3 + $0x20] sm:$0xff] %vm578, -inf
          %584 = vst.msk [vmem:[#allocation3 + $0x28] sm:$0xff] %vm578, -inf
          %585 = vst.msk [vmem:[#allocation3 + $0x30] sm:$0xff] %vm578, -inf
          %586 = vst.msk [vmem:[#allocation3 + $0x38] sm:$0xff] %vm578, -inf
          %587 = vst.msk [vmem:[#allocation4] sm:$0xff] %vm578, 0.0
          %588 = vst.msk [vmem:[#allocation4 + $0x8] sm:$0xff] %vm578, 0.0
          %589 = vst.msk [vmem:[#allocation4 + $0x10] sm:$0xff] %vm578, 0.0
          %590 = vst.msk [vmem:[#allocation4 + $0x18] sm:$0xff] %vm578, 0.0
          %591 = vst.msk [vmem:[#allocation4 + $0x20] sm:$0xff] %vm578, 0.0
          %592 = vst.msk [vmem:[#allocation4 + $0x28] sm:$0xff] %vm578, 0.0
          %593 = vst.msk [vmem:[#allocation4 + $0x30] sm:$0xff] %vm578, 0.0
          %594 = vst.msk [vmem:[#allocation4 + $0x38] sm:$0xff] %vm578, 0.0
          %vm595 = vcmask 523264
          %596 = vst.msk [vmem:[#allocation5] sm:$0xff] %vm595, 0.0
          %597 = vst.msk [vmem:[#allocation5 + $0x8] sm:$0xff] %vm595, 0.0
          %598 = vst.msk [vmem:[#allocation5 + $0x10] sm:$0xff] %vm595, 0.0
          %599 = vst.msk [vmem:[#allocation5 + $0x18] sm:$0xff] %vm595, 0.0
          %600 = vst.msk [vmem:[#allocation5 + $0x20] sm:$0xff] %vm595, 0.0
          %601 = vst.msk [vmem:[#allocation5 + $0x28] sm:$0xff] %vm595, 0.0
          %602 = vst.msk [vmem:[#allocation5 + $0x30] sm:$0xff] %vm595, 0.0
          %603 = vst.msk [vmem:[#allocation5 + $0x38] sm:$0xff] %vm595, 0.0
          %v604 = vld [vmem:[%s552] sm:$0xff]
          %v605 = vld [vmem:[%s552 + $0x8] sm:$0xff]
          %v606 = vld [vmem:[#allocation9] sm:$0xff]
          %v607 = vld [vmem:[#allocation9 + $0x8] sm:$0xff]
          %v608 = vld [vmem:[%s469] sm:$0xff]
          %v609 = vld [vmem:[%s469 + $0x8] sm:$0xff]
          %v610 = vld [vmem:[%s469 + $0x10] sm:$0xff]
          %v611 = vld [vmem:[%s469 + $0x18] sm:$0xff]
          %v612 = vmul.f32 %v608, %v604
          %v613 = vmul.f32 %v610, %v605
          %616 = vrot.lane.b32.xlu0 %v608, 96
          %v617 = vpop.permute.xlu0 %616
          %618 = vrot.lane.b32.xlu0 %v610, 96
          %v619 = vpop.permute.xlu0 %618
          %622 = vrot.lane.b32.xlu0 %v608, 32
          %v623 = vpop.permute.xlu0 %622
          %624 = vrot.lane.b32.xlu0 %v610, 32
          %v625 = vpop.permute.xlu0 %624
          %vm628 = vcmask 261120
          %v629 = vsel %vm628, %v617, %v623
          %v630 = vsel %vm628, %v619, %v625
          %v631 = vmul.f32 %v629, %v606
          %v632 = vmul.f32 %v630, %v607
          %v633 = vadd.f32 %v612, %v631
          %v634 = vadd.f32 %v613, %v632
          %v635 = vmul.f32 %v633, 0.125
          %v636 = vmul.f32 %v634, 0.125
          %v637 = vpack.c.bf16 %v635, %v635
          %v638 = vpack.c.bf16 %v636, %v636
          %vm639 = vcmask 519168
          %640 = vst.msk [vmem:[#allocation2] sm:$0xf] %vm639, %v637
          %641 = vst.msk [vmem:[#allocation2 + $0x4] sm:$0xf] %vm639, %v638
          %644 = vrot.lane.b32.xlu0 %v604, 64
          %v645 = vpop.permute.xlu0 %644
          %646 = vrot.lane.b32.xlu0 %v605, 64
          %v647 = vpop.permute.xlu0 %646
          %v650 = vmul.f32 %v608, %v645
          %v651 = vmul.f32 %v610, %v647
          %v652 = vsel %vm628, %v623, %v617
          %v653 = vsel %vm628, %v625, %v619
          %v654 = vmul.f32 %v652, %v606
          %v655 = vmul.f32 %v653, %v607
          %658 = vrot.lane.b32.xlu0 %v654, 64
          %v659 = vpop.permute.xlu0 %658
          %660 = vrot.lane.b32.xlu0 %v655, 64
          %v661 = vpop.permute.xlu0 %660
          %v664 = vadd.f32 %v650, %v659
          %v665 = vadd.f32 %v651, %v661
          %v666 = vmul.f32 %v664, 0.125
          %v667 = vmul.f32 %v665, 0.125
          %v668 = vpack.c.bf16 %v666, %v666
          %v669 = vpack.c.bf16 %v667, %v667
          %672 = vrot.lane.b32.xlu0 %v668, 64
          %v673 = vpop.permute.xlu0 %672
          %674 = vrot.lane.b32.xlu0 %v669, 64
          %v675 = vpop.permute.xlu0 %674
          %678 = vst.msk [vmem:[#allocation2 + $0x8] sm:$0xf] %vm639, %v673
          %679 = vst.msk [vmem:[#allocation2 + $0xc] sm:$0xf] %vm639, %v675
          %v680 = vmul.f32 %v609, %v604
          %v681 = vmul.f32 %v611, %v605
          %684 = vrot.lane.b32.xlu0 %v609, 96
          %v685 = vpop.permute.xlu0 %684
          %686 = vrot.lane.b32.xlu0 %v611, 96
          %v687 = vpop.permute.xlu0 %686
          %690 = vrot.lane.b32.xlu0 %v609, 32
          %v691 = vpop.permute.xlu0 %690
          %692 = vrot.lane.b32.xlu0 %v611, 32
          %v693 = vpop.permute.xlu0 %692
          %v696 = vsel %vm628, %v685, %v691
          %v697 = vsel %vm628, %v687, %v693
          %v698 = vmul.f32 %v696, %v606
          %v699 = vmul.f32 %v697, %v607
          %v700 = vadd.f32 %v680, %v698
          %v701 = vadd.f32 %v681, %v699
          %v702 = vmul.f32 %v700, 0.125
          %v703 = vmul.f32 %v701, 0.125
          %v704 = vpack.c.bf16 %v702, %v702
          %v705 = vpack.c.bf16 %v703, %v703
          %s706 = scalar_lea.vmem [#allocation2], 16
          %707 = vst.msk [vmem:[%s706] sm:$0xf] %vm639, %v704
          %708 = vst.msk [vmem:[%s706 + $0x4] sm:$0xf] %vm639, %v705
          %v709 = vmul.f32 %v609, %v645
          %v710 = vmul.f32 %v611, %v647
          %v711 = vsel %vm628, %v691, %v685
          %v712 = vsel %vm628, %v693, %v687
          %v713 = vmul.f32 %v711, %v606
          %v714 = vmul.f32 %v712, %v607
          %717 = vrot.lane.b32.xlu0 %v713, 64
          %v718 = vpop.permute.xlu0 %717
          %719 = vrot.lane.b32.xlu0 %v714, 64
          %v720 = vpop.permute.xlu0 %719
          %v723 = vadd.f32 %v709, %v718
          %v724 = vadd.f32 %v710, %v720
          %v725 = vmul.f32 %v723, 0.125
          %v726 = vmul.f32 %v724, 0.125
          %v727 = vpack.c.bf16 %v725, %v725
          %v728 = vpack.c.bf16 %v726, %v726
          %731 = vrot.lane.b32.xlu0 %v727, 64
          %v732 = vpop.permute.xlu0 %731
          %733 = vrot.lane.b32.xlu0 %v728, 64
          %v734 = vpop.permute.xlu0 %733
          %737 = vst.msk [vmem:[%s706 + $0x8] sm:$0xf] %vm639, %v732
          %738 = vst.msk [vmem:[%s706 + $0xc] sm:$0xf] %vm639, %v734
        $region159: #{flash_roberta_layer.6} parent=134 // pred_fallthru
          _
        %v739 = vld [vmem:[%s559] sm:$0xff]
        %v740 = vld [vmem:[%s559 + $0x8] sm:$0xff]
        %v741 = vld [vmem:[#allocation11] sm:$0xff]
        %v742 = vld [vmem:[#allocation11 + $0x8] sm:$0xff]
        %v743 = vld [vmem:[%s476] sm:$0xff]
        %v744 = vld [vmem:[%s476 + $0x8] sm:$0xff]
        %v745 = vld [vmem:[%s483] sm:$0xff]
        %v746 = vld [vmem:[%s483 + $0x8] sm:$0xff]
        %v747 = vmul.f32 %v743, %v739
        %v748 = vmul.f32 %v744, %v740
        %751 = vrot.lane.b32.xlu0 %v743, 96
        %v752 = vpop.permute.xlu0 %751
        %753 = vrot.lane.b32.xlu0 %v744, 96
        %v754 = vpop.permute.xlu0 %753
        %757 = vrot.lane.b32.xlu0 %v743, 32
        %v758 = vpop.permute.xlu0 %757
        %759 = vrot.lane.b32.xlu0 %v744, 32
        %v760 = vpop.permute.xlu0 %759
        %vm763 = vcmask 261120
        %v764 = vsel %vm763, %v752, %v758
        %v765 = vsel %vm763, %v754, %v760
        %v766 = vmul.f32 %v764, %v741
        %v767 = vmul.f32 %v765, %v742
        %v768 = vadd.f32 %v747, %v766
        %v769 = vadd.f32 %v748, %v767
        %v770 = vpack.c.bf16 %v769, %v768
        %v771 = vpack.c.bf16 %v746, %v745
        %v772 = vld [vmem:[#allocation2] sm:$0xf]
        %v773 = vld [vmem:[#allocation2 + $0x4] sm:$0xf]
        %v774 = vld [vmem:[#allocation2 + $0x8] sm:$0xf]
        %v775 = vld [vmem:[#allocation2 + $0xc] sm:$0xf]
        %v780 = vunpack.c.l.b16 %v772
        %v781 = vunpack.c.l.b16 %v773
        %v782 = vunpack.c.l.b16 %v774
        %v783 = vunpack.c.l.b16 %v775
        %v784 = vpack.c.b16 %v781, %v780
        %v785 = vpack.c.b16 %v783, %v782
        %vm786 = vcmask 523264
        %v788 = vsel %vm786, %v784, 0
        %v791 = vsel %vm786, %v785, 0
        %v794 = vsel %vm786, %v770, 0
        %796 = vmatpush.bf16.xpose.msra.mxu0 0
        %797 = vmatpush.bf16.xpose.msra.mxu0 0
        %798 = vmatpush.bf16.xpose.msra.mxu0 0
        %799 = vmatpush.bf16.xpose.msra.mxu0 0
        %800 = vmatpush.bf16.xpose.msra.mxu0 0
        %801 = vmatpush.bf16.xpose.msra.mxu0 0
        %802 = vmatpush.bf16.xpose.msra.mxu0 0
        %803 = vmatpush.bf16.xpose.msra.mxu0 %v794
        %804 = vmatmul.bf16.gmra.mxu0 %v788
        %v805 = vpop.f32.mrf.mxu0
        %v806 = vadd.f32 0.0, %v805
        %v807 = vpop.f32.mrf.mxu0
        %v808 = vadd.f32 0.0, %v807
        %809 = vmatmul.bf16.gmra.mxu0 %v791
        %v810 = vpop.f32.mrf.mxu0
        %v811 = vadd.f32 0.0, %v810
        %v812 = vpop.f32.mrf.mxu0
        %v813 = vadd.f32 0.0, %v812
        %814 = vdwg.mxu0
        %v815 = vld [vmem:[#allocation3] sm:$0xff]
        %v816 = vld [vmem:[#allocation3 + $0x8] sm:$0xff]
        %v817 = vld [vmem:[#allocation3 + $0x10] sm:$0xff]
        %v818 = vld [vmem:[#allocation3 + $0x18] sm:$0xff]
        %vm819 = vcmask 130048
        %v820 = vsel %vm819, %v806, -inf
        %821 = vmax.xlane.f32.xlu0 %v820
        %v822 = vpop.xlane.xlu0 %821
        %v823 = vsel %vm819, %v808, -inf
        %824 = vmax.xlane.f32.xlu0 %v823
        %v825 = vpop.xlane.xlu0 %824
        %v826 = vsel %vm819, %v811, -inf
        %827 = vmax.xlane.f32.xlu0 %v826
        %v828 = vpop.xlane.xlu0 %827
        %v829 = vsel %vm819, %v813, -inf
        %830 = vmax.xlane.f32.xlu0 %v829
        %v831 = vpop.xlane.xlu0 %830
        %v832 = vmax.f32 %v815, %v822
        %v833 = vmax.f32 %v816, %v825
        %v834 = vmax.f32 %v817, %v828
        %v835 = vmax.f32 %v818, %v831
        %v836 = vsub.f32 %v815, %v832
        %v837 = vsub.f32 %v816, %v833
        %v838 = vsub.f32 %v817, %v834
        %v839 = vsub.f32 %v818, %v835
        %v840 = vmul.f32 %v836, 1.442695
        %v841 = vpow.pop %v840
        %v842 = vmul.f32 %v837, 1.442695
        %v843 = vpow.pop %v842
        %v844 = vmul.f32 %v838, 1.442695
        %v845 = vpow.pop %v844
        %v846 = vmul.f32 %v839, 1.442695
        %v847 = vpow.pop %v846
        %849 = vset.pattern.permute.xlu0 0
        %850 = vperm.xlu0 %849, %v832
        %v851 = vpop.permute.xlu0 %850
        %854 = vset.pattern.permute.xlu0 0
        %855 = vperm.xlu0 %854, %v833
        %v856 = vpop.permute.xlu0 %855
        %859 = vset.pattern.permute.xlu0 0
        %860 = vperm.xlu0 %859, %v834
        %v861 = vpop.permute.xlu0 %860
        %864 = vset.pattern.permute.xlu0 0
        %865 = vperm.xlu0 %864, %v835
        %v866 = vpop.permute.xlu0 %865
        %v868 = vsub.f32 %v806, %v851
        %v869 = vsub.f32 %v808, %v856
        %v870 = vsub.f32 %v811, %v861
        %v871 = vsub.f32 %v813, %v866
        %v872 = vmul.f32 %v868, 1.442695
        %v873 = vpow.pop %v872
        %v874 = vmul.f32 %v869, 1.442695
        %v875 = vpow.pop %v874
        %v876 = vmul.f32 %v870, 1.442695
        %v877 = vpow.pop %v876
        %v878 = vmul.f32 %v871, 1.442695
        %v879 = vpow.pop %v878
        %v880 = vld [vmem:[#allocation4] sm:$0xff]
        %v881 = vld [vmem:[#allocation4 + $0x8] sm:$0xff]
        %v882 = vld [vmem:[#allocation4 + $0x10] sm:$0xff]
        %v883 = vld [vmem:[#allocation4 + $0x18] sm:$0xff]
        %v884 = vmul.f32 %v841, %v880
        %v885 = vmul.f32 %v843, %v881
        %v886 = vmul.f32 %v845, %v882
        %v887 = vmul.f32 %v847, %v883
        %v888 = vsel %vm819, %v873, 0.0
        %889 = vadd.xlane.f32.xlu0 %v888
        %v890 = vpop.xlane.xlu0 %889
        %v891 = vsel %vm819, %v875, 0.0
        %892 = vadd.xlane.f32.xlu0 %v891
        %v893 = vpop.xlane.xlu0 %892
        %v894 = vsel %vm819, %v877, 0.0
        %895 = vadd.xlane.f32.xlu0 %v894
        %v896 = vpop.xlane.xlu0 %895
        %v897 = vsel %vm819, %v879, 0.0
        %898 = vadd.xlane.f32.xlu0 %v897
        %v899 = vpop.xlane.xlu0 %898
        %v900 = vadd.f32 %v884, %v890
        %v901 = vadd.f32 %v885, %v893
        %v902 = vadd.f32 %v886, %v896
        %v903 = vadd.f32 %v887, %v899
        %vm904 = vcmask 7168
        %905 = vst.msk [vmem:[#allocation4] sm:$0xff] %vm904, %v900
        %906 = vst.msk [vmem:[#allocation4 + $0x8] sm:$0xff] %vm904, %v901
        %907 = vst.msk [vmem:[#allocation4 + $0x10] sm:$0xff] %vm904, %v902
        %908 = vst.msk [vmem:[#allocation4 + $0x18] sm:$0xff] %vm904, %v903
        %v909 = vld [vmem:[#allocation5] sm:$0xff]
        %v910 = vld [vmem:[#allocation5 + $0x8] sm:$0xff]
        %v911 = vld [vmem:[#allocation5 + $0x10] sm:$0xff]
        %v912 = vld [vmem:[#allocation5 + $0x18] sm:$0xff]
        %914 = vset.pattern.permute.xlu0 0
        %915 = vperm.xlu0 %914, %v841
        %v916 = vpop.permute.xlu0 %915
        %919 = vset.pattern.permute.xlu0 0
        %920 = vperm.xlu0 %919, %v843
        %v921 = vpop.permute.xlu0 %920
        %924 = vset.pattern.permute.xlu0 0
        %925 = vperm.xlu0 %924, %v845
        %v926 = vpop.permute.xlu0 %925
        %929 = vset.pattern.permute.xlu0 0
        %930 = vperm.xlu0 %929, %v847
        %v931 = vpop.permute.xlu0 %930
        %v933 = vmul.f32 %v916, %v909
        %v934 = vmul.f32 %v921, %v910
        %v935 = vmul.f32 %v926, %v911
        %v936 = vmul.f32 %v931, %v912
        %v937 = vpack.c.bf16 %v875, %v873
        %v938 = vpack.c.bf16 %v879, %v877
        %v940 = vsel %vm819, %v937, 0
        %v943 = vsel %vm819, %v938, 0
        %945 = vmatpush.bf16.msra.mxu0 0
        %946 = vmatpush.bf16.msra.mxu0 0
        %947 = vmatpush.bf16.msra.mxu0 0
        %948 = vmatpush.bf16.msra.mxu0 0
        %949 = vmatpush.bf16.msra.mxu0 0
        %950 = vmatpush.bf16.msra.mxu0 0
        %951 = vmatpush.bf16.msra.mxu0 0
        %952 = vmatpush.bf16.msra.mxu0 %v771
        %953 = vmatmul.bf16.gmra.mxu0 %v940
        %v954 = vpop.f32.mrf.mxu0
        %v955 = vadd.f32 0.0, %v954
        %v956 = vpop.f32.mrf.mxu0
        %v957 = vadd.f32 0.0, %v956
        %958 = vmatmul.bf16.gmra.mxu0 %v943
        %v959 = vpop.f32.mrf.mxu0
        %v960 = vadd.f32 0.0, %v959
        %v961 = vpop.f32.mrf.mxu0
        %v962 = vadd.f32 0.0, %v961
        %963 = vdwg.mxu0
        %v964 = vadd.f32 %v933, %v955
        %v965 = vadd.f32 %v934, %v957
        %v966 = vadd.f32 %v935, %v960
        %v967 = vadd.f32 %v936, %v962
        %968 = vst.msk [vmem:[#allocation5] sm:$0xff] %vm786, %v964
        %969 = vst.msk [vmem:[#allocation5 + $0x8] sm:$0xff] %vm786, %v965
        %970 = vst.msk [vmem:[#allocation5 + $0x10] sm:$0xff] %vm786, %v966
        %971 = vst.msk [vmem:[#allocation5 + $0x18] sm:$0xff] %vm786, %v967
        %972 = vst.msk [vmem:[#allocation3] sm:$0xff] %vm904, %v832
        %973 = vst.msk [vmem:[#allocation3 + $0x8] sm:$0xff] %vm904, %v833
        %974 = vst.msk [vmem:[#allocation3 + $0x10] sm:$0xff] %vm904, %v834
        %975 = vst.msk [vmem:[#allocation3 + $0x18] sm:$0xff] %vm904, %v835
        %978 = vrot.lane.b32.xlu0 %v739, 64
        %v979 = vpop.permute.xlu0 %978
        %980 = vrot.lane.b32.xlu0 %v740, 64
        %v981 = vpop.permute.xlu0 %980
        %v984 = vmul.f32 %v743, %v979
        %v985 = vmul.f32 %v744, %v981
        %v986 = vsel %vm763, %v758, %v752
        %v987 = vsel %vm763, %v760, %v754
        %v988 = vmul.f32 %v986, %v741
        %v989 = vmul.f32 %v987, %v742
        %992 = vrot.lane.b32.xlu0 %v988, 64
        %v993 = vpop.permute.xlu0 %992
        %994 = vrot.lane.b32.xlu0 %v989, 64
        %v995 = vpop.permute.xlu0 %994
        %v998 = vadd.f32 %v984, %v993
        %v999 = vadd.f32 %v985, %v995
        %v1000 = vpack.c.bf16 %v999, %v998
        %s1001 = scalar_lea.vmem [#allocation2], 16
        %v1002 = vld [vmem:[%s1001] sm:$0xf]
        %v1003 = vld [vmem:[%s1001 + $0x4] sm:$0xf]
        %v1004 = vld [vmem:[%s1001 + $0x8] sm:$0xf]
        %v1005 = vld [vmem:[%s1001 + $0xc] sm:$0xf]
        %v1010 = vunpack.c.l.b16 %v1002
        %v1011 = vunpack.c.l.b16 %v1003
        %v1012 = vunpack.c.l.b16 %v1004
        %v1013 = vunpack.c.l.b16 %v1005
        %v1014 = vpack.c.b16 %v1011, %v1010
        %v1015 = vpack.c.b16 %v1013, %v1012
        %1017 = vrot.lane.b32.xlu0 %v1000, 64
        %v1018 = vpop.permute.xlu0 %1017
        %v1020 = vsel %vm786, %v1014, 0
        %v1023 = vsel %vm786, %v1015, 0
        %v1026 = vsel %vm786, %v1018, 0
        %1028 = vmatpush.bf16.xpose.msra.mxu0 0
        %1029 = vmatpush.bf16.xpose.msra.mxu0 0
        %1030 = vmatpush.bf16.xpose.msra.mxu0 0
        %1031 = vmatpush.bf16.xpose.msra.mxu0 0
        %1032 = vmatpush.bf16.xpose.msra.mxu0 0
        %1033 = vmatpush.bf16.xpose.msra.mxu0 0
        %1034 = vmatpush.bf16.xpose.msra.mxu0 0
        %1035 = vmatpush.bf16.xpose.msra.mxu0 %v1026
        %1036 = vmatmul.bf16.gmra.mxu0 %v1020
        %v1037 = vpop.f32.mrf.mxu0
        %v1038 = vadd.f32 0.0, %v1037
        %v1039 = vpop.f32.mrf.mxu0
        %v1040 = vadd.f32 0.0, %v1039
        %1041 = vmatmul.bf16.gmra.mxu0 %v1023
        %v1042 = vpop.f32.mrf.mxu0
        %v1043 = vadd.f32 0.0, %v1042
        %v1044 = vpop.f32.mrf.mxu0
        %v1045 = vadd.f32 0.0, %v1044
        %1046 = vdwg.mxu0
        %s1047 = scalar_lea.vmem [#allocation3], 32
        %v1048 = vld [vmem:[%s1047] sm:$0xff]
        %v1049 = vld [vmem:[%s1047 + $0x8] sm:$0xff]
        %v1050 = vld [vmem:[%s1047 + $0x10] sm:$0xff]
        %v1051 = vld [vmem:[%s1047 + $0x18] sm:$0xff]
        %v1052 = vsel %vm819, %v1038, -inf
        %1053 = vmax.xlane.f32.xlu0 %v1052
        %v1054 = vpop.xlane.xlu0 %1053
        %v1055 = vsel %vm819, %v1040, -inf
        %1056 = vmax.xlane.f32.xlu0 %v1055
        %v1057 = vpop.xlane.xlu0 %1056
        %v1058 = vsel %vm819, %v1043, -inf
        %1059 = vmax.xlane.f32.xlu0 %v1058
        %v1060 = vpop.xlane.xlu0 %1059
        %v1061 = vsel %vm819, %v1045, -inf
        %1062 = vmax.xlane.f32.xlu0 %v1061
        %v1063 = vpop.xlane.xlu0 %1062
        %v1064 = vmax.f32 %v1048, %v1054
        %v1065 = vmax.f32 %v1049, %v1057
        %v1066 = vmax.f32 %v1050, %v1060
        %v1067 = vmax.f32 %v1051, %v1063
        %v1068 = vsub.f32 %v1048, %v1064
        %v1069 = vsub.f32 %v1049, %v1065
        %v1070 = vsub.f32 %v1050, %v1066
        %v1071 = vsub.f32 %v1051, %v1067
        %v1072 = vmul.f32 %v1068, 1.442695
        %v1073 = vpow.pop %v1072
        %v1074 = vmul.f32 %v1069, 1.442695
        %v1075 = vpow.pop %v1074
        %v1076 = vmul.f32 %v1070, 1.442695
        %v1077 = vpow.pop %v1076
        %v1078 = vmul.f32 %v1071, 1.442695
        %v1079 = vpow.pop %v1078
        %1081 = vset.pattern.permute.xlu0 0
        %1082 = vperm.xlu0 %1081, %v1064
        %v1083 = vpop.permute.xlu0 %1082
        %1086 = vset.pattern.permute.xlu0 0
        %1087 = vperm.xlu0 %1086, %v1065
        %v1088 = vpop.permute.xlu0 %1087
        %1091 = vset.pattern.permute.xlu0 0
        %1092 = vperm.xlu0 %1091, %v1066
        %v1093 = vpop.permute.xlu0 %1092
        %1096 = vset.pattern.permute.xlu0 0
        %1097 = vperm.xlu0 %1096, %v1067
        %v1098 = vpop.permute.xlu0 %1097
        %v1100 = vsub.f32 %v1038, %v1083
        %v1101 = vsub.f32 %v1040, %v1088
        %v1102 = vsub.f32 %v1043, %v1093
        %v1103 = vsub.f32 %v1045, %v1098
        %v1104 = vmul.f32 %v1100, 1.442695
        %v1105 = vpow.pop %v1104
        %v1106 = vmul.f32 %v1101, 1.442695
        %v1107 = vpow.pop %v1106
        %v1108 = vmul.f32 %v1102, 1.442695
        %v1109 = vpow.pop %v1108
        %v1110 = vmul.f32 %v1103, 1.442695
        %v1111 = vpow.pop %v1110
        %s1112 = scalar_lea.vmem [#allocation4], 32
        %v1113 = vld [vmem:[%s1112] sm:$0xff]
        %v1114 = vld [vmem:[%s1112 + $0x8] sm:$0xff]
        %v1115 = vld [vmem:[%s1112 + $0x10] sm:$0xff]
        %v1116 = vld [vmem:[%s1112 + $0x18] sm:$0xff]
        %v1117 = vmul.f32 %v1073, %v1113
        %v1118 = vmul.f32 %v1075, %v1114
        %v1119 = vmul.f32 %v1077, %v1115
        %v1120 = vmul.f32 %v1079, %v1116
        %v1121 = vsel %vm819, %v1105, 0.0
        %1122 = vadd.xlane.f32.xlu0 %v1121
        %v1123 = vpop.xlane.xlu0 %1122
        %v1124 = vsel %vm819, %v1107, 0.0
        %1125 = vadd.xlane.f32.xlu0 %v1124
        %v1126 = vpop.xlane.xlu0 %1125
        %v1127 = vsel %vm819, %v1109, 0.0
        %1128 = vadd.xlane.f32.xlu0 %v1127
        %v1129 = vpop.xlane.xlu0 %1128
        %v1130 = vsel %vm819, %v1111, 0.0
        %1131 = vadd.xlane.f32.xlu0 %v1130
        %v1132 = vpop.xlane.xlu0 %1131
        %v1133 = vadd.f32 %v1117, %v1123
        %v1134 = vadd.f32 %v1118, %v1126
        %v1135 = vadd.f32 %v1119, %v1129
        %v1136 = vadd.f32 %v1120, %v1132
        %1137 = vst.msk [vmem:[%s1112] sm:$0xff] %vm904, %v1133
        %1138 = vst.msk [vmem:[%s1112 + $0x8] sm:$0xff] %vm904, %v1134
        %1139 = vst.msk [vmem:[%s1112 + $0x10] sm:$0xff] %vm904, %v1135
        %1140 = vst.msk [vmem:[%s1112 + $0x18] sm:$0xff] %vm904, %v1136
        %s1141 = scalar_lea.vmem [#allocation5], 32
        %v1142 = vld [vmem:[%s1141] sm:$0xff]
        %v1143 = vld [vmem:[%s1141 + $0x8] sm:$0xff]
        %v1144 = vld [vmem:[%s1141 + $0x10] sm:$0xff]
        %v1145 = vld [vmem:[%s1141 + $0x18] sm:$0xff]
        %1147 = vset.pattern.permute.xlu0 0
        %1148 = vperm.xlu0 %1147, %v1073
        %v1149 = vpop.permute.xlu0 %1148
        %1152 = vset.pattern.permute.xlu0 0
        %1153 = vperm.xlu0 %1152, %v1075
        %v1154 = vpop.permute.xlu0 %1153
        %1157 = vset.pattern.permute.xlu0 0
        %1158 = vperm.xlu0 %1157, %v1077
        %v1159 = vpop.permute.xlu0 %1158
        %1162 = vset.pattern.permute.xlu0 0
        %1163 = vperm.xlu0 %1162, %v1079
        %v1164 = vpop.permute.xlu0 %1163
        %v1166 = vmul.f32 %v1149, %v1142
        %v1167 = vmul.f32 %v1154, %v1143
        %v1168 = vmul.f32 %v1159, %v1144
        %v1169 = vmul.f32 %v1164, %v1145
        %v1170 = vpack.c.bf16 %v1107, %v1105
        %v1171 = vpack.c.bf16 %v1111, %v1109
        %1173 = vrot.lane.b32.xlu0 %v771, 64
        %v1174 = vpop.permute.xlu0 %1173
        %v1177 = vsel %vm819, %v1170, 0
        %v1180 = vsel %vm819, %v1171, 0
        %1182 = vmatpush.bf16.msra.mxu0 0
        %1183 = vmatpush.bf16.msra.mxu0 0
        %1184 = vmatpush.bf16.msra.mxu0 0
        %1185 = vmatpush.bf16.msra.mxu0 0
        %1186 = vmatpush.bf16.msra.mxu0 0
        %1187 = vmatpush.bf16.msra.mxu0 0
        %1188 = vmatpush.bf16.msra.mxu0 0
        %1189 = vmatpush.bf16.msra.mxu0 %v1174
        %1190 = vmatmul.bf16.gmra.mxu0 %v1177
        %v1191 = vpop.f32.mrf.mxu0
        %v1192 = vadd.f32 0.0, %v1191
        %v1193 = vpop.f32.mrf.mxu0
        %v1194 = vadd.f32 0.0, %v1193
        %1195 = vmatmul.bf16.gmra.mxu0 %v1180
        %v1196 = vpop.f32.mrf.mxu0
        %v1197 = vadd.f32 0.0, %v1196
        %v1198 = vpop.f32.mrf.mxu0
        %v1199 = vadd.f32 0.0, %v1198
        %1200 = vdwg.mxu0
        %v1201 = vadd.f32 %v1166, %v1192
        %v1202 = vadd.f32 %v1167, %v1194
        %v1203 = vadd.f32 %v1168, %v1197
        %v1204 = vadd.f32 %v1169, %v1199
        %1205 = vst.msk [vmem:[%s1141] sm:$0xff] %vm786, %v1201
        %1206 = vst.msk [vmem:[%s1141 + $0x8] sm:$0xff] %vm786, %v1202
        %1207 = vst.msk [vmem:[%s1141 + $0x10] sm:$0xff] %vm786, %v1203
        %1208 = vst.msk [vmem:[%s1141 + $0x18] sm:$0xff] %vm786, %v1204
        %1209 = vst.msk [vmem:[%s1047] sm:$0xff] %vm904, %v1064
        %1210 = vst.msk [vmem:[%s1047 + $0x8] sm:$0xff] %vm904, %v1065
        %1211 = vst.msk [vmem:[%s1047 + $0x10] sm:$0xff] %vm904, %v1066
        %1212 = vst.msk [vmem:[%s1047 + $0x18] sm:$0xff] %vm904, %v1067
        // Predicated region
        $region160: #{flash_roberta_layer.6} parent=134 // pred_check
          %p1213 = pneg %p574
        $region161: #{flash_roberta_layer.6} parent=134 // pred_check_branch
          %1215 = sbr.rel (%p1213) target = $region163
        $region162: #{flash_roberta_layer.6} parent=134 // pred_region
          %v1216 = vld [vmem:[#allocation5] sm:$0xff]
          %v1217 = vld [vmem:[#allocation5 + $0x8] sm:$0xff]
          %v1218 = vld [vmem:[#allocation5 + $0x10] sm:$0xff]
          %v1219 = vld [vmem:[#allocation5 + $0x18] sm:$0xff]
          %v1220 = vld [vmem:[#allocation4] sm:$0xff]
          %v1221 = vld [vmem:[#allocation4 + $0x8] sm:$0xff]
          %v1222 = vld [vmem:[#allocation4 + $0x10] sm:$0xff]
          %v1223 = vld [vmem:[#allocation4 + $0x18] sm:$0xff]
          %v1224 = vrcp.pop %v1220
          %v1225 = vmul.f32 %v1220, %v1224
          %v1226 = vsub.f32 1.0, %v1225
          %v1227 = vmul.f32 %v1224, %v1226
          %v1228 = vadd.f32 %v1224, %v1227
          %vm1229 = vweird.f32 %v1220
          %vm1230 = vweird.f32 %v1224
          %vm1231 = vmor %vm1229, %vm1230
          %v1232 = vsel %vm1231, %v1224, %v1228
          %v1233 = vand.u32 2147483647, %v1220
          %vm1234 = vcmp.eq.f32.partialorder %v1233, 8.507059e+37
          %v1235 = vand.u32 %v1220, 2147483648
          %v1236 = vor.u32 1.1754944e-38, %v1235
          %v1237 = vsel %vm1234, %v1236, %v1232
          %v1238 = vrcp.pop %v1221
          %v1239 = vmul.f32 %v1221, %v1238
          %v1240 = vsub.f32 1.0, %v1239
          %v1241 = vmul.f32 %v1238, %v1240
          %v1242 = vadd.f32 %v1238, %v1241
          %vm1243 = vweird.f32 %v1221
          %vm1244 = vweird.f32 %v1238
          %vm1245 = vmor %vm1243, %vm1244
          %v1246 = vsel %vm1245, %v1238, %v1242
          %v1247 = vand.u32 2147483647, %v1221
          %vm1248 = vcmp.eq.f32.partialorder %v1247, 8.507059e+37
          %v1249 = vand.u32 %v1221, 2147483648
          %v1250 = vor.u32 1.1754944e-38, %v1249
          %v1251 = vsel %vm1248, %v1250, %v1246
          %v1252 = vrcp.pop %v1222
          %v1253 = vmul.f32 %v1222, %v1252
          %v1254 = vsub.f32 1.0, %v1253
          %v1255 = vmul.f32 %v1252, %v1254
          %v1256 = vadd.f32 %v1252, %v1255
          %vm1257 = vweird.f32 %v1222
          %vm1258 = vweird.f32 %v1252
          %vm1259 = vmor %vm1257, %vm1258
          %v1260 = vsel %vm1259, %v1252, %v1256
          %v1261 = vand.u32 2147483647, %v1222
          %vm1262 = vcmp.eq.f32.partialorder %v1261, 8.507059e+37
          %v1263 = vand.u32 %v1222, 2147483648
          %v1264 = vor.u32 1.1754944e-38, %v1263
          %v1265 = vsel %vm1262, %v1264, %v1260
          %v1266 = vrcp.pop %v1223
          %v1267 = vmul.f32 %v1223, %v1266
          %v1268 = vsub.f32 1.0, %v1267
          %v1269 = vmul.f32 %v1266, %v1268
          %v1270 = vadd.f32 %v1266, %v1269
          %vm1271 = vweird.f32 %v1223
          %vm1272 = vweird.f32 %v1266
          %vm1273 = vmor %vm1271, %vm1272
          %v1274 = vsel %vm1273, %v1266, %v1270
          %v1275 = vand.u32 2147483647, %v1223
          %vm1276 = vcmp.eq.f32.partialorder %v1275, 8.507059e+37
          %v1277 = vand.u32 %v1223, 2147483648
          %v1278 = vor.u32 1.1754944e-38, %v1277
          %v1279 = vsel %vm1276, %v1278, %v1274
          %1281 = vset.pattern.permute.xlu0 0
          %1282 = vperm.xlu0 %1281, %v1237
          %v1283 = vpop.permute.xlu0 %1282
          %1286 = vset.pattern.permute.xlu0 0
          %1287 = vperm.xlu0 %1286, %v1251
          %v1288 = vpop.permute.xlu0 %1287
          %1291 = vset.pattern.permute.xlu0 0
          %1292 = vperm.xlu0 %1291, %v1265
          %v1293 = vpop.permute.xlu0 %1292
          %1296 = vset.pattern.permute.xlu0 0
          %1297 = vperm.xlu0 %1296, %v1279
          %v1298 = vpop.permute.xlu0 %1297
          %v1300 = vmul.f32 %v1216, %v1283
          %v1301 = vmul.f32 %v1217, %v1288
          %v1302 = vmul.f32 %v1218, %v1293
          %v1303 = vmul.f32 %v1219, %v1298
          %v1304 = vld [vmem:[%s1141] sm:$0xff]
          %v1305 = vld [vmem:[%s1141 + $0x8] sm:$0xff]
          %v1306 = vld [vmem:[%s1141 + $0x10] sm:$0xff]
          %v1307 = vld [vmem:[%s1141 + $0x18] sm:$0xff]
          %v1308 = vld [vmem:[%s1112] sm:$0xff]
          %v1309 = vld [vmem:[%s1112 + $0x8] sm:$0xff]
          %v1310 = vld [vmem:[%s1112 + $0x10] sm:$0xff]
          %v1311 = vld [vmem:[%s1112 + $0x18] sm:$0xff]
          %v1312 = vrcp.pop %v1308
          %v1313 = vmul.f32 %v1308, %v1312
          %v1314 = vsub.f32 1.0, %v1313
          %v1315 = vmul.f32 %v1312, %v1314
          %v1316 = vadd.f32 %v1312, %v1315
          %vm1317 = vweird.f32 %v1308
          %vm1318 = vweird.f32 %v1312
          %vm1319 = vmor %vm1317, %vm1318
          %v1320 = vsel %vm1319, %v1312, %v1316
          %v1321 = vand.u32 2147483647, %v1308
          %vm1322 = vcmp.eq.f32.partialorder %v1321, 8.507059e+37
          %v1323 = vand.u32 %v1308, 2147483648
          %v1324 = vor.u32 1.1754944e-38, %v1323
          %v1325 = vsel %vm1322, %v1324, %v1320
          %v1326 = vrcp.pop %v1309
          %v1327 = vmul.f32 %v1309, %v1326
          %v1328 = vsub.f32 1.0, %v1327
          %v1329 = vmul.f32 %v1326, %v1328
          %v1330 = vadd.f32 %v1326, %v1329
          %vm1331 = vweird.f32 %v1309
          %vm1332 = vweird.f32 %v1326
          %vm1333 = vmor %vm1331, %vm1332
          %v1334 = vsel %vm1333, %v1326, %v1330
          %v1335 = vand.u32 2147483647, %v1309
          %vm1336 = vcmp.eq.f32.partialorder %v1335, 8.507059e+37
          %v1337 = vand.u32 %v1309, 2147483648
          %v1338 = vor.u32 1.1754944e-38, %v1337
          %v1339 = vsel %vm1336, %v1338, %v1334
          %v1340 = vrcp.pop %v1310
          %v1341 = vmul.f32 %v1310, %v1340
          %v1342 = vsub.f32 1.0, %v1341
          %v1343 = vmul.f32 %v1340, %v1342
          %v1344 = vadd.f32 %v1340, %v1343
          %vm1345 = vweird.f32 %v1310
          %vm1346 = vweird.f32 %v1340
          %vm1347 = vmor %vm1345, %vm1346
          %v1348 = vsel %vm1347, %v1340, %v1344
          %v1349 = vand.u32 2147483647, %v1310
          %vm1350 = vcmp.eq.f32.partialorder %v1349, 8.507059e+37
          %v1351 = vand.u32 %v1310, 2147483648
          %v1352 = vor.u32 1.1754944e-38, %v1351
          %v1353 = vsel %vm1350, %v1352, %v1348
          %v1354 = vrcp.pop %v1311
          %v1355 = vmul.f32 %v1311, %v1354
          %v1356 = vsub.f32 1.0, %v1355
          %v1357 = vmul.f32 %v1354, %v1356
          %v1358 = vadd.f32 %v1354, %v1357
          %vm1359 = vweird.f32 %v1311
          %vm1360 = vweird.f32 %v1354
          %vm1361 = vmor %vm1359, %vm1360
          %v1362 = vsel %vm1361, %v1354, %v1358
          %v1363 = vand.u32 2147483647, %v1311
          %vm1364 = vcmp.eq.f32.partialorder %v1363, 8.507059e+37
          %v1365 = vand.u32 %v1311, 2147483648
          %v1366 = vor.u32 1.1754944e-38, %v1365
          %v1367 = vsel %vm1364, %v1366, %v1362
          %1369 = vset.pattern.permute.xlu0 0
          %1370 = vperm.xlu0 %1369, %v1325
          %v1371 = vpop.permute.xlu0 %1370
          %1374 = vset.pattern.permute.xlu0 0
          %1375 = vperm.xlu0 %1374, %v1339
          %v1376 = vpop.permute.xlu0 %1375
          %1379 = vset.pattern.permute.xlu0 0
          %1380 = vperm.xlu0 %1379, %v1353
          %v1381 = vpop.permute.xlu0 %1380
          %1384 = vset.pattern.permute.xlu0 0
          %1385 = vperm.xlu0 %1384, %v1367
          %v1386 = vpop.permute.xlu0 %1385
          %v1388 = vmul.f32 %v1304, %v1371
          %v1389 = vmul.f32 %v1305, %v1376
          %v1390 = vmul.f32 %v1306, %v1381
          %v1391 = vmul.f32 %v1307, %v1386
          %1394 = vrot.lane.b32.xlu0 %v1302, 64
          %v1395 = vpop.permute.xlu0 %1394
          %1396 = vrot.lane.b32.xlu0 %v1303, 64
          %v1397 = vpop.permute.xlu0 %1396
          %1402 = vrot.lane.b32.xlu0 %v1390, 64
          %v1403 = vpop.permute.xlu0 %1402
          %1404 = vrot.lane.b32.xlu0 %v1391, 64
          %v1405 = vpop.permute.xlu0 %1404
          %v1408 = vsel %vm786, %v1300, %v1395
          %v1409 = vsel %vm786, %v1301, %v1397
          %v1410 = vsel %vm786, %v1388, %v1403
          %v1411 = vsel %vm786, %v1389, %v1405
          %1412 = vst [vmem:[%s571] sm:$0xff] %v1408
          %1413 = vst [vmem:[%s571 + $0x8] sm:$0xff] %v1410
          %1414 = vst [vmem:[%s571 + $0x10] sm:$0xff] %v1409
          %1415 = vst [vmem:[%s571 + $0x18] sm:$0xff] %v1411
        $region163: #{flash_roberta_layer.6} parent=134 // pred_fallthru
          _
        %s1416 = smul.u32 2, %s26
        %p1417 = scmp.lt.s32.totalorder %s25, 1
        %s1418 = scalar_select %p1417, %s25, 1
        %p1419 = scmp.lt.s32.totalorder %s1416, 1
        %s1420 = scalar_select %p1419, %s1416, 1
        %s1421 = smul.addr %s1420, 2
        %s1422 = smul.addr %s1418, 4
        %s1423 = sadd.s32 %s1421, %s1422
        %s1424 = smul.addr %s1423, 8
        %s1425 = scalar_lea.vmem %s7, %s1424
        // Predicated region
        $region164: #{flash_roberta_layer.6} parent=134 // pred_check
          %p1426 = pneg %p247
        $region165: #{flash_roberta_layer.6} parent=134 // pred_check_branch
          %1428 = sbr.rel (%p1426) target = $region167
        $region166: #{flash_roberta_layer.6} parent=134 // pred_region
          %s1429 = smul.u32 2, %s26
        $region167: #{flash_roberta_layer.6} parent=134 // pred_fallthru
          _
      $region135: #{flash_roberta_layer.6} parent=5 // pred_fallthru
        _
      %p1430 = scmp.le.s32.totalorder 2, %s15
      // Predicated region
      $region168: #{flash_roberta_layer.6} parent=5 // pred_check
        %p1431 = pneg %p1430
      $region169: #{flash_roberta_layer.6} parent=5 // pred_check_branch
        %1433 = sbr.rel (%p1431) target = $region171
      $region170: #{flash_roberta_layer.6} parent=5 // pred_region
        %s1434 = ssub.s32 %s15, 2
        // Predicated region
        $region172: #{flash_roberta_layer.6} parent=170 // pred_check
          %p1435 = pneg %p253
        $region173: #{flash_roberta_layer.6} parent=170 // pred_check_branch
          %1437 = sbr.rel (%p1435) target = $region175
        $region174: #{flash_roberta_layer.6} parent=170 // pred_region
          %s1438 = smul.u32 2, %s29
          %p1439 = scmp.lt.s32.totalorder %s28, 1
          %s1440 = scalar_select %p1439, %s28, 1
          %p1441 = scmp.lt.s32.totalorder %s1438, 1
          %s1442 = scalar_select %p1441, %s1438, 1
          %s1443 = smul.addr %s1442, 2
          %s1444 = smul.addr %s1440, 4
          %s1445 = sadd.s32 %s1443, %s1444
          %s1446 = smul.addr %s1445, 8
          %s1447 = scalar_lea.vmem %s7, %s1446
        $region175: #{flash_roberta_layer.6} parent=170 // pred_fallthru
          _
      $region171: #{flash_roberta_layer.6} parent=5 // pred_fallthru
        _
    $region6: #{flash_roberta_layer.6} parent=1 // loop_footer
      %s19 = sadd.s32 1, %s15
    $region7: #{flash_roberta_layer.6} parent=1 // loop_footer_branch
      %14 = sbr.rel target = $region3
    $region8: #{flash_roberta_layer.6} parent=1 // loop_exit
      _
    %1448 = vsyncpa [#allocation10], 1
    %s1449 = scalar_lea.sflag [#allocation10], 1
    %1450 = vsyncpa %s1449, 1
    %1451 = vsyncpa [#allocation12], 1

// kernel: flash_roberta_layer.9
$region0: #{flash_roberta_layer.9}
  #allocation0 [shape = 'u32[]', space=smem, size = 0x4, offset = 0x4, fixed_abs, tag = 'smem constant byte address 0x4 - core index']
  #allocation1 [shape = 'u32[72,128]{1,0:T(1,128)}', space=vmem, size = 0x9000, scoped, tag = 'internal scratch']
  #allocation2 [shape = 'f32[32,256]{1,0:T(8,128)}', space=vmem, size = 0x8000, scoped, tag = 'scratch operand']
  %s0 = inlined_call_operand.vmem [shape: f32[32,512], index: 0, kind: input, shape index: {}]
  %s1 = inlined_call_operand.hbm [shape: bf16[512,256], index: 1, kind: input, shape index: {}]
  %s2 = inlined_call_operand.hbm [shape: f32[1,256], index: 2, kind: input, shape index: {}]
  %s3 = inlined_call_operand.vmem [shape: f32[32,256], index: 3, kind: input, shape index: {}]
  %s4 = inlined_call_operand.hbm [shape: f32[1,256], index: 4, kind: input, shape index: {}]
  %s5 = inlined_call_operand.hbm [shape: f32[1,256], index: 5, kind: input, shape index: {}]
  %s6 = inlined_call_operand.hbm [shape: f32[32,256], index: 6, kind: output, shape index: {}]
  %s7 = sld [smem:[#allocation0]]
  $region58: #{flash_roberta_layer.9} parent=0
    _
  %s9 = ssub.s32 1, %s7
  %s10 = scalar_select 0, %s9, %s7
  $region1: #{flash_roberta_layer.9} parent=0
    #allocation3 [shape = 'u8[262144]{0}', space=vmem, size = 0x40000, scoped, tag = 'input window, operand 1, single buffered']
    #allocation4 [shape = 's32[1]{0}', space=sflag, size = 0x4, scoped, tag = 'scoped memory for flash_roberta_layer.9']
    #allocation5 [shape = 's32[1]{0}', space=sflag, size = 0x4, scoped, tag = 'scoped memory for flash_roberta_layer.9']
    #allocation6 [shape = 'u8[1024]{0}', space=vmem, size = 0x400, scoped, tag = 'input window, operand 2, single buffered']
    #allocation7 [shape = 's32[1]{0}', space=sflag, size = 0x4, scoped, tag = 'scoped memory for flash_roberta_layer.9']
    #allocation8 [shape = 'u8[1024]{0}', space=vmem, size = 0x400, scoped, tag = 'input window, operand 4, single buffered']
    #allocation9 [shape = 'u8[1024]{0}', space=vmem, size = 0x400, scoped, tag = 'input window, operand 5, single buffered']
    #allocation10 [shape = 's32[1]{0}', space=sflag, size = 0x4, scoped, tag = 'scoped memory for flash_roberta_layer.9']
    #allocation11 [shape = 'u8[32768]{0}', space=vmem, size = 0x8000, scoped, tag = 'output window, operand 0, single buffered']
    %11 = vsyncpa [#allocation4], 0
    %12 = vsyncpa [#allocation7], 0
    %13 = vsyncpa [#allocation10], 0
    %14 = vsyncpa [#allocation5], 0
    // Predicated region
    $region2: #{flash_roberta_layer.9} parent=1 // pred_check
      _
    $region3: #{flash_roberta_layer.9} parent=1 // pred_check_branch
      %16 = sbr.rel (0) target = $region5
    $region4: #{flash_roberta_layer.9} parent=1 // pred_region
      _
    $region5: #{flash_roberta_layer.9} parent=1 // pred_fallthru
      _
    // Predicated region
    $region6: #{flash_roberta_layer.9} parent=1 // pred_check
      _
    $region7: #{flash_roberta_layer.9} parent=1 // pred_check_branch
      %18 = sbr.rel (0) target = $region9
    $region8: #{flash_roberta_layer.9} parent=1 // pred_region
      %20 = vsyncadd [#allocation4], 0
      %s21 = sshll.u32 %s1, 4
      %s22 = int_to_ptr.hbm [resolvable:$true] %s21
      %s23 = sshll.u32 [#allocation3], 4
      %s24 = int_to_ptr.vmem [resolvable:$true] %s23
      %29 = dma.hbm_to_vmem [thread:$0]  %s22, 8192, %s24, [#allocation4], 128, 128, 8
    $region9: #{flash_roberta_layer.9} parent=1 // pred_fallthru
      _
    // Predicated region
    $region10: #{flash_roberta_layer.9} parent=1 // pred_check
      _
    $region11: #{flash_roberta_layer.9} parent=1 // pred_check_branch
      %31 = sbr.rel (0) target = $region13
    $region12: #{flash_roberta_layer.9} parent=1 // pred_region
      %33 = vsyncadd [#allocation7], 0
      %s35 = sshll.u32 %s2, 4
      %s36 = int_to_ptr.hbm [resolvable:$true] %s35
      %s37 = sshll.u32 [#allocation6], 4
      %s38 = int_to_ptr.vmem [resolvable:$true] %s37
      %40 = dma.hbm_to_vmem [thread:$0]  %s36, 32, %s38, [#allocation7]
    $region13: #{flash_roberta_layer.9} parent=1 // pred_fallthru
      _
    // Predicated region
    $region14: #{flash_roberta_layer.9} parent=1 // pred_check
      _
    $region15: #{flash_roberta_layer.9} parent=1 // pred_check_branch
      %42 = sbr.rel (0) target = $region17
    $region16: #{flash_roberta_layer.9} parent=1 // pred_region
      _
    $region17: #{flash_roberta_layer.9} parent=1 // pred_fallthru
      _
    // Predicated region
    $region18: #{flash_roberta_layer.9} parent=1 // pred_check
      _
    $region19: #{flash_roberta_layer.9} parent=1 // pred_check_branch
      %44 = sbr.rel (0) target = $region21
    $region20: #{flash_roberta_layer.9} parent=1 // pred_region
      %46 = vsyncadd [#allocation7], 0
      %s48 = sshll.u32 %s4, 4
      %s49 = int_to_ptr.hbm [resolvable:$true] %s48
      %s50 = sshll.u32 [#allocation8], 4
      %s51 = int_to_ptr.vmem [resolvable:$true] %s50
      %53 = dma.hbm_to_vmem [thread:$0]  %s49, 32, %s51, [#allocation7]
    $region21: #{flash_roberta_layer.9} parent=1 // pred_fallthru
      _
    // Predicated region
    $region22: #{flash_roberta_layer.9} parent=1 // pred_check
      _
    $region23: #{flash_roberta_layer.9} parent=1 // pred_check_branch
      %55 = sbr.rel (0) target = $region25
    $region24: #{flash_roberta_layer.9} parent=1 // pred_region
      %57 = vsyncadd [#allocation10], 0
      %s59 = sshll.u32 %s5, 4
      %s60 = int_to_ptr.hbm [resolvable:$true] %s59
      %s61 = sshll.u32 [#allocation9], 4
      %s62 = int_to_ptr.vmem [resolvable:$true] %s61
      %64 = dma.hbm_to_vmem [thread:$0]  %s60, 32, %s62, [#allocation10]
    $region25: #{flash_roberta_layer.9} parent=1 // pred_fallthru
      _
    // Predicated region
    $region26: #{flash_roberta_layer.9} parent=1 // pred_check
      _
    $region27: #{flash_roberta_layer.9} parent=1 // pred_check_branch
      %66 = sbr.rel (0) target = $region29
    $region28: #{flash_roberta_layer.9} parent=1 // pred_region
      %68 = dma.done [#allocation4], 8192
    $region29: #{flash_roberta_layer.9} parent=1 // pred_fallthru
      _
    // Predicated region
    $region30: #{flash_roberta_layer.9} parent=1 // pred_check
      _
    $region31: #{flash_roberta_layer.9} parent=1 // pred_check_branch
      %70 = sbr.rel (0) target = $region33
    $region32: #{flash_roberta_layer.9} parent=1 // pred_region
      %72 = dma.done [#allocation7], 32
    $region33: #{flash_roberta_layer.9} parent=1 // pred_fallthru
      _
    // Predicated region
    $region34: #{flash_roberta_layer.9} parent=1 // pred_check
      _
    $region35: #{flash_roberta_layer.9} parent=1 // pred_check_branch
      %74 = sbr.rel (0) target = $region37
    $region36: #{flash_roberta_layer.9} parent=1 // pred_region
      %76 = dma.done [#allocation7], 32
    $region37: #{flash_roberta_layer.9} parent=1 // pred_fallthru
      _
    // Predicated region
    $region38: #{flash_roberta_layer.9} parent=1 // pred_check
      _
    $region39: #{flash_roberta_layer.9} parent=1 // pred_check_branch
      %78 = sbr.rel (0) target = $region41
    $region40: #{flash_roberta_layer.9} parent=1 // pred_region
      %80 = dma.done [#allocation10], 32
    $region41: #{flash_roberta_layer.9} parent=1 // pred_fallthru
      _
    %p81 = scmp.eq.s32.totalorder 0, 0
    // Predicated region
    $region42: #{flash_roberta_layer.9} parent=1 // pred_check
      %p82 = pneg %p81
    $region43: #{flash_roberta_layer.9} parent=1 // pred_check_branch
      %84 = sbr.rel (%p82) target = $region45
    $region44: #{flash_roberta_layer.9} parent=1 // pred_region
      %85 = vst [vmem:[#allocation2] sm:$0xff] 0.0
      %86 = vst [vmem:[#allocation2 + $0x8] sm:$0xff] 0.0
      %87 = vst [vmem:[#allocation2 + $0x10] sm:$0xff] 0.0
      %88 = vst [vmem:[#allocation2 + $0x18] sm:$0xff] 0.0
      %89 = vst [vmem:[#allocation2 + $0x20] sm:$0xff] 0.0
      %90 = vst [vmem:[#allocation2 + $0x28] sm:$0xff] 0.0
      %91 = vst [vmem:[#allocation2 + $0x30] sm:$0xff] 0.0
      %92 = vst [vmem:[#allocation2 + $0x38] sm:$0xff] 0.0
    $region45: #{flash_roberta_layer.9} parent=1 // pred_fallthru
      _
    %v93 = vld [vmem:[#allocation2] sm:$0xff]
    %v94 = vld [vmem:[#allocation2 + $0x8] sm:$0xff]
    %v95 = vld [vmem:[#allocation2 + $0x10] sm:$0xff]
    %v96 = vld [vmem:[#allocation2 + $0x18] sm:$0xff]
    %v97 = vld [vmem:[#allocation2 + $0x20] sm:$0xff]
    %v98 = vld [vmem:[#allocation2 + $0x28] sm:$0xff]
    %v99 = vld [vmem:[#allocation2 + $0x30] sm:$0xff]
    %v100 = vld [vmem:[#allocation2 + $0x38] sm:$0xff]
    %v101 = vld [vmem:[%s0] sm:$0xff]
    %v102 = vld [vmem:[%s0 + $0x8] sm:$0xff]
    %v103 = vld [vmem:[%s0 + $0x10] sm:$0xff]
    %v104 = vld [vmem:[%s0 + $0x18] sm:$0xff]
    %v105 = vld [vmem:[%s0 + $0x20] sm:$0xff]
    %v106 = vld [vmem:[%s0 + $0x28] sm:$0xff]
    %v107 = vld [vmem:[%s0 + $0x30] sm:$0xff]
    %v108 = vld [vmem:[%s0 + $0x38] sm:$0xff]
    %v109 = vld [vmem:[%s0 + $0x40] sm:$0xff]
    %v110 = vld [vmem:[%s0 + $0x48] sm:$0xff]
    %v111 = vld [vmem:[%s0 + $0x50] sm:$0xff]
    %v112 = vld [vmem:[%s0 + $0x58] sm:$0xff]
    %v113 = vld [vmem:[%s0 + $0x60] sm:$0xff]
    %v114 = vld [vmem:[%s0 + $0x68] sm:$0xff]
    %v115 = vld [vmem:[%s0 + $0x70] sm:$0xff]
    %v116 = vld [vmem:[%s0 + $0x78] sm:$0xff]
    %v117 = vpack.c.bf16 %v105, %v101
    %v118 = vpack.c.bf16 %v106, %v102
    %v119 = vpack.c.bf16 %v107, %v103
    %v120 = vpack.c.bf16 %v108, %v104
    %v121 = vpack.c.bf16 %v113, %v109
    %v122 = vpack.c.bf16 %v114, %v110
    %v123 = vpack.c.bf16 %v115, %v111
    %v124 = vpack.c.bf16 %v116, %v112
    %v125 = vld [vmem:[#allocation3] sm:$0xff]
    %v126 = vld [vmem:[#allocation3 + $0x8] sm:$0xff]
    %v127 = vld [vmem:[#allocation3 + $0x10] sm:$0xff]
    %v128 = vld [vmem:[#allocation3 + $0x18] sm:$0xff]
    %v129 = vld [vmem:[#allocation3 + $0x20] sm:$0xff]
    %v130 = vld [vmem:[#allocation3 + $0x28] sm:$0xff]
    %v131 = vld [vmem:[#allocation3 + $0x30] sm:$0xff]
    %v132 = vld [vmem:[#allocation3 + $0x38] sm:$0xff]
    %v133 = vld [vmem:[#allocation3 + $0x40] sm:$0xff]
    %v134 = vld [vmem:[#allocation3 + $0x48] sm:$0xff]
    %v135 = vld [vmem:[#allocation3 + $0x50] sm:$0xff]
    %v136 = vld [vmem:[#allocation3 + $0x58] sm:$0xff]
    %v137 = vld [vmem:[#allocation3 + $0x60] sm:$0xff]
    %v138 = vld [vmem:[#allocation3 + $0x68] sm:$0xff]
    %v139 = vld [vmem:[#allocation3 + $0x70] sm:$0xff]
    %v140 = vld [vmem:[#allocation3 + $0x78] sm:$0xff]
    %v141 = vld [vmem:[#allocation3 + $0x80] sm:$0xff]
    %v142 = vld [vmem:[#allocation3 + $0x88] sm:$0xff]
    %v143 = vld [vmem:[#allocation3 + $0x90] sm:$0xff]
    %v144 = vld [vmem:[#allocation3 + $0x98] sm:$0xff]
    %v145 = vld [vmem:[#allocation3 + $0xa0] sm:$0xff]
    %v146 = vld [vmem:[#allocation3 + $0xa8] sm:$0xff]
    %v147 = vld [vmem:[#allocation3 + $0xb0] sm:$0xff]
    %v148 = vld [vmem:[#allocation3 + $0xb8] sm:$0xff]
    %v149 = vld [vmem:[#allocation3 + $0xc0] sm:$0xff]
    %v150 = vld [vmem:[#allocation3 + $0xc8] sm:$0xff]
    %v151 = vld [vmem:[#allocation3 + $0xd0] sm:$0xff]
    %v152 = vld [vmem:[#allocation3 + $0xd8] sm:$0xff]
    %v153 = vld [vmem:[#allocation3 + $0xe0] sm:$0xff]
    %v154 = vld [vmem:[#allocation3 + $0xe8] sm:$0xff]
    %v155 = vld [vmem:[#allocation3 + $0xf0] sm:$0xff]
    %v156 = vld [vmem:[#allocation3 + $0xf8] sm:$0xff]
    %v157 = vld [vmem:[#allocation3 + $0x100] sm:$0xff]
    %v158 = vld [vmem:[#allocation3 + $0x108] sm:$0xff]
    %v159 = vld [vmem:[#allocation3 + $0x110] sm:$0xff]
    %v160 = vld [vmem:[#allocation3 + $0x118] sm:$0xff]
    %v161 = vld [vmem:[#allocation3 + $0x120] sm:$0xff]
    %v162 = vld [vmem:[#allocation3 + $0x128] sm:$0xff]
    %v163 = vld [vmem:[#allocation3 + $0x130] sm:$0xff]
    %v164 = vld [vmem:[#allocation3 + $0x138] sm:$0xff]
    %v165 = vld [vmem:[#allocation3 + $0x140] sm:$0xff]
    %v166 = vld [vmem:[#allocation3 + $0x148] sm:$0xff]
    %v167 = vld [vmem:[#allocation3 + $0x150] sm:$0xff]
    %v168 = vld [vmem:[#allocation3 + $0x158] sm:$0xff]
    %v169 = vld [vmem:[#allocation3 + $0x160] sm:$0xff]
    %v170 = vld [vmem:[#allocation3 + $0x168] sm:$0xff]
    %v171 = vld [vmem:[#allocation3 + $0x170] sm:$0xff]
    %v172 = vld [vmem:[#allocation3 + $0x178] sm:$0xff]
    %v173 = vld [vmem:[#allocation3 + $0x180] sm:$0xff]
    %v174 = vld [vmem:[#allocation3 + $0x188] sm:$0xff]
    %v175 = vld [vmem:[#allocation3 + $0x190] sm:$0xff]
    %v176 = vld [vmem:[#allocation3 + $0x198] sm:$0xff]
    %v177 = vld [vmem:[#allocation3 + $0x1a0] sm:$0xff]
    %v178 = vld [vmem:[#allocation3 + $0x1a8] sm:$0xff]
    %v179 = vld [vmem:[#allocation3 + $0x1b0] sm:$0xff]
    %v180 = vld [vmem:[#allocation3 + $0x1b8] sm:$0xff]
    %v181 = vld [vmem:[#allocation3 + $0x1c0] sm:$0xff]
    %v182 = vld [vmem:[#allocation3 + $0x1c8] sm:$0xff]
    %v183 = vld [vmem:[#allocation3 + $0x1d0] sm:$0xff]
    %v184 = vld [vmem:[#allocation3 + $0x1d8] sm:$0xff]
    %v185 = vld [vmem:[#allocation3 + $0x1e0] sm:$0xff]
    %v186 = vld [vmem:[#allocation3 + $0x1e8] sm:$0xff]
    %v187 = vld [vmem:[#allocation3 + $0x1f0] sm:$0xff]
    %v188 = vld [vmem:[#allocation3 + $0x1f8] sm:$0xff]
    %v253 = vunpack.c.l.b16 %v125
    %v254 = vunpack.c.h.b16 %v125
    %v255 = vunpack.c.l.b16 %v126
    %v256 = vunpack.c.h.b16 %v126
    %v257 = vunpack.c.l.b16 %v127
    %v258 = vunpack.c.h.b16 %v127
    %v259 = vunpack.c.l.b16 %v128
    %v260 = vunpack.c.h.b16 %v128
    %v261 = vunpack.c.l.b16 %v129
    %v262 = vunpack.c.h.b16 %v129
    %v263 = vunpack.c.l.b16 %v130
    %v264 = vunpack.c.h.b16 %v130
    %v265 = vunpack.c.l.b16 %v131
    %v266 = vunpack.c.h.b16 %v131
    %v267 = vunpack.c.l.b16 %v132
    %v268 = vunpack.c.h.b16 %v132
    %v269 = vunpack.c.l.b16 %v133
    %v270 = vunpack.c.h.b16 %v133
    %v271 = vunpack.c.l.b16 %v134
    %v272 = vunpack.c.h.b16 %v134
    %v273 = vunpack.c.l.b16 %v135
    %v274 = vunpack.c.h.b16 %v135
    %v275 = vunpack.c.l.b16 %v136
    %v276 = vunpack.c.h.b16 %v136
    %v277 = vunpack.c.l.b16 %v137
    %v278 = vunpack.c.h.b16 %v137
    %v279 = vunpack.c.l.b16 %v138
    %v280 = vunpack.c.h.b16 %v138
    %v281 = vunpack.c.l.b16 %v139
    %v282 = vunpack.c.h.b16 %v139
    %v283 = vunpack.c.l.b16 %v140
    %v284 = vunpack.c.h.b16 %v140
    %v285 = vunpack.c.l.b16 %v141
    %v286 = vunpack.c.h.b16 %v141
    %v287 = vunpack.c.l.b16 %v142
    %v288 = vunpack.c.h.b16 %v142
    %v289 = vunpack.c.l.b16 %v143
    %v290 = vunpack.c.h.b16 %v143
    %v291 = vunpack.c.l.b16 %v144
    %v292 = vunpack.c.h.b16 %v144
    %v293 = vunpack.c.l.b16 %v145
    %v294 = vunpack.c.h.b16 %v145
    %v295 = vunpack.c.l.b16 %v146
    %v296 = vunpack.c.h.b16 %v146
    %v297 = vunpack.c.l.b16 %v147
    %v298 = vunpack.c.h.b16 %v147
    %v299 = vunpack.c.l.b16 %v148
    %v300 = vunpack.c.h.b16 %v148
    %v301 = vunpack.c.l.b16 %v149
    %v302 = vunpack.c.h.b16 %v149
    %v303 = vunpack.c.l.b16 %v150
    %v304 = vunpack.c.h.b16 %v150
    %v305 = vunpack.c.l.b16 %v151
    %v306 = vunpack.c.h.b16 %v151
    %v307 = vunpack.c.l.b16 %v152
    %v308 = vunpack.c.h.b16 %v152
    %v309 = vunpack.c.l.b16 %v153
    %v310 = vunpack.c.h.b16 %v153
    %v311 = vunpack.c.l.b16 %v154
    %v312 = vunpack.c.h.b16 %v154
    %v313 = vunpack.c.l.b16 %v155
    %v314 = vunpack.c.h.b16 %v155
    %v315 = vunpack.c.l.b16 %v156
    %v316 = vunpack.c.h.b16 %v156
    %v317 = vunpack.c.l.b16 %v157
    %v318 = vunpack.c.h.b16 %v157
    %v319 = vunpack.c.l.b16 %v158
    %v320 = vunpack.c.h.b16 %v158
    %v321 = vunpack.c.l.b16 %v159
    %v322 = vunpack.c.h.b16 %v159
    %v323 = vunpack.c.l.b16 %v160
    %v324 = vunpack.c.h.b16 %v160
    %v325 = vunpack.c.l.b16 %v161
    %v326 = vunpack.c.h.b16 %v161
    %v327 = vunpack.c.l.b16 %v162
    %v328 = vunpack.c.h.b16 %v162
    %v329 = vunpack.c.l.b16 %v163
    %v330 = vunpack.c.h.b16 %v163
    %v331 = vunpack.c.l.b16 %v164
    %v332 = vunpack.c.h.b16 %v164
    %v333 = vunpack.c.l.b16 %v165
    %v334 = vunpack.c.h.b16 %v165
    %v335 = vunpack.c.l.b16 %v166
    %v336 = vunpack.c.h.b16 %v166
    %v337 = vunpack.c.l.b16 %v167
    %v338 = vunpack.c.h.b16 %v167
    %v339 = vunpack.c.l.b16 %v168
    %v340 = vunpack.c.h.b16 %v168
    %v341 = vunpack.c.l.b16 %v169
    %v342 = vunpack.c.h.b16 %v169
    %v343 = vunpack.c.l.b16 %v170
    %v344 = vunpack.c.h.b16 %v170
    %v345 = vunpack.c.l.b16 %v171
    %v346 = vunpack.c.h.b16 %v171
    %v347 = vunpack.c.l.b16 %v172
    %v348 = vunpack.c.h.b16 %v172
    %v349 = vunpack.c.l.b16 %v173
    %v350 = vunpack.c.h.b16 %v173
    %v351 = vunpack.c.l.b16 %v174
    %v352 = vunpack.c.h.b16 %v174
    %v353 = vunpack.c.l.b16 %v175
    %v354 = vunpack.c.h.b16 %v175
    %v355 = vunpack.c.l.b16 %v176
    %v356 = vunpack.c.h.b16 %v176
    %v357 = vunpack.c.l.b16 %v177
    %v358 = vunpack.c.h.b16 %v177
    %v359 = vunpack.c.l.b16 %v178
    %v360 = vunpack.c.h.b16 %v178
    %v361 = vunpack.c.l.b16 %v179
    %v362 = vunpack.c.h.b16 %v179
    %v363 = vunpack.c.l.b16 %v180
    %v364 = vunpack.c.h.b16 %v180
    %v365 = vunpack.c.l.b16 %v181
    %v366 = vunpack.c.h.b16 %v181
    %v367 = vunpack.c.l.b16 %v182
    %v368 = vunpack.c.h.b16 %v182
    %v369 = vunpack.c.l.b16 %v183
    %v370 = vunpack.c.h.b16 %v183
    %v371 = vunpack.c.l.b16 %v184
    %v372 = vunpack.c.h.b16 %v184
    %v373 = vunpack.c.l.b16 %v185
    %v374 = vunpack.c.h.b16 %v185
    %v375 = vunpack.c.l.b16 %v186
    %v376 = vunpack.c.h.b16 %v186
    %v377 = vunpack.c.l.b16 %v187
    %v378 = vunpack.c.h.b16 %v187
    %v379 = vunpack.c.l.b16 %v188
    %v380 = vunpack.c.h.b16 %v188
    %v381 = vpack.c.b16 %v255, %v253
    %v382 = vpack.c.b16 %v256, %v254
    %v383 = vpack.c.b16 %v259, %v257
    %v384 = vpack.c.b16 %v260, %v258
    %v385 = vpack.c.b16 %v263, %v261
    %v386 = vpack.c.b16 %v264, %v262
    %v387 = vpack.c.b16 %v267, %v265
    %v388 = vpack.c.b16 %v268, %v266
    %v389 = vpack.c.b16 %v271, %v269
    %v390 = vpack.c.b16 %v272, %v270
    %v391 = vpack.c.b16 %v275, %v273
    %v392 = vpack.c.b16 %v276, %v274
    %v393 = vpack.c.b16 %v279, %v277
    %v394 = vpack.c.b16 %v280, %v278
    %v395 = vpack.c.b16 %v283, %v281
    %v396 = vpack.c.b16 %v284, %v282
    %v397 = vpack.c.b16 %v287, %v285
    %v398 = vpack.c.b16 %v288, %v286
    %v399 = vpack.c.b16 %v291, %v289
    %v400 = vpack.c.b16 %v292, %v290
    %v401 = vpack.c.b16 %v295, %v293
    %v402 = vpack.c.b16 %v296, %v294
    %v403 = vpack.c.b16 %v299, %v297
    %v404 = vpack.c.b16 %v300, %v298
    %v405 = vpack.c.b16 %v303, %v301
    %v406 = vpack.c.b16 %v304, %v302
    %v407 = vpack.c.b16 %v307, %v305
    %v408 = vpack.c.b16 %v308, %v306
    %v409 = vpack.c.b16 %v311, %v309
    %v410 = vpack.c.b16 %v312, %v310
    %v411 = vpack.c.b16 %v315, %v313
    %v412 = vpack.c.b16 %v316, %v314
    %v413 = vpack.c.b16 %v319, %v317
    %v414 = vpack.c.b16 %v320, %v318
    %v415 = vpack.c.b16 %v323, %v321
    %v416 = vpack.c.b16 %v324, %v322
    %v417 = vpack.c.b16 %v327, %v325
    %v418 = vpack.c.b16 %v328, %v326
    %v419 = vpack.c.b16 %v331, %v329
    %v420 = vpack.c.b16 %v332, %v330
    %v421 = vpack.c.b16 %v335, %v333
    %v422 = vpack.c.b16 %v336, %v334
    %v423 = vpack.c.b16 %v339, %v337
    %v424 = vpack.c.b16 %v340, %v338
    %v425 = vpack.c.b16 %v343, %v341
    %v426 = vpack.c.b16 %v344, %v342
    %v427 = vpack.c.b16 %v347, %v345
    %v428 = vpack.c.b16 %v348, %v346
    %v429 = vpack.c.b16 %v351, %v349
    %v430 = vpack.c.b16 %v352, %v350
    %v431 = vpack.c.b16 %v355, %v353
    %v432 = vpack.c.b16 %v356, %v354
    %v433 = vpack.c.b16 %v359, %v357
    %v434 = vpack.c.b16 %v360, %v358
    %v435 = vpack.c.b16 %v363, %v361
    %v436 = vpack.c.b16 %v364, %v362
    %v437 = vpack.c.b16 %v367, %v365
    %v438 = vpack.c.b16 %v368, %v366
    %v439 = vpack.c.b16 %v371, %v369
    %v440 = vpack.c.b16 %v372, %v370
    %v441 = vpack.c.b16 %v375, %v373
    %v442 = vpack.c.b16 %v376, %v374
    %v443 = vpack.c.b16 %v379, %v377
    %v444 = vpack.c.b16 %v380, %v378
    %509 = vmatpush.bf16.msra.mxu0 %v395
    %510 = vmatpush.bf16.msra.mxu0 %v393
    %511 = vmatpush.bf16.msra.mxu0 %v391
    %512 = vmatpush.bf16.msra.mxu0 %v389
    %513 = vmatpush.bf16.msra.mxu0 %v387
    %514 = vmatpush.bf16.msra.mxu0 %v385
    %515 = vmatpush.bf16.msra.mxu0 %v383
    %516 = vmatpush.bf16.msra.mxu0 %v381
    %517 = vmatmul.bf16.gmra.mxu0 %v117
    %v518 = vpop.f32.mrf.mxu0
    %v519 = vadd.f32 0.0, %v518
    %v520 = vpop.f32.mrf.mxu0
    %v521 = vadd.f32 0.0, %v520
    %522 = vmatmul.bf16.gmra.mxu0 %v121
    %v523 = vpop.f32.mrf.mxu0
    %v524 = vadd.f32 0.0, %v523
    %v525 = vpop.f32.mrf.mxu0
    %v526 = vadd.f32 0.0, %v525
    %527 = vdwg.mxu0
    %528 = vmatpush.bf16.msra.mxu0 %v411
    %529 = vmatpush.bf16.msra.mxu0 %v409
    %530 = vmatpush.bf16.msra.mxu0 %v407
    %531 = vmatpush.bf16.msra.mxu0 %v405
    %532 = vmatpush.bf16.msra.mxu0 %v403
    %533 = vmatpush.bf16.msra.mxu0 %v401
    %534 = vmatpush.bf16.msra.mxu0 %v399
    %535 = vmatpush.bf16.msra.mxu0 %v397
    %536 = vmatmul.bf16.gmra.mxu0 %v118
    %v537 = vpop.f32.mrf.mxu0
    %v538 = vadd.f32 %v519, %v537
    %v539 = vpop.f32.mrf.mxu0
    %v540 = vadd.f32 %v521, %v539
    %541 = vmatmul.bf16.gmra.mxu0 %v122
    %v542 = vpop.f32.mrf.mxu0
    %v543 = vadd.f32 %v524, %v542
    %v544 = vpop.f32.mrf.mxu0
    %v545 = vadd.f32 %v526, %v544
    %546 = vdwg.mxu0
    %547 = vmatpush.bf16.msra.mxu0 %v427
    %548 = vmatpush.bf16.msra.mxu0 %v425
    %549 = vmatpush.bf16.msra.mxu0 %v423
    %550 = vmatpush.bf16.msra.mxu0 %v421
    %551 = vmatpush.bf16.msra.mxu0 %v419
    %552 = vmatpush.bf16.msra.mxu0 %v417
    %553 = vmatpush.bf16.msra.mxu0 %v415
    %554 = vmatpush.bf16.msra.mxu0 %v413
    %555 = vmatmul.bf16.gmra.mxu0 %v119
    %v556 = vpop.f32.mrf.mxu0
    %v557 = vadd.f32 %v538, %v556
    %v558 = vpop.f32.mrf.mxu0
    %v559 = vadd.f32 %v540, %v558
    %560 = vmatmul.bf16.gmra.mxu0 %v123
    %v561 = vpop.f32.mrf.mxu0
    %v562 = vadd.f32 %v543, %v561
    %v563 = vpop.f32.mrf.mxu0
    %v564 = vadd.f32 %v545, %v563
    %565 = vdwg.mxu0
    %566 = vmatpush.bf16.msra.mxu0 %v443
    %567 = vmatpush.bf16.msra.mxu0 %v441
    %568 = vmatpush.bf16.msra.mxu0 %v439
    %569 = vmatpush.bf16.msra.mxu0 %v437
    %570 = vmatpush.bf16.msra.mxu0 %v435
    %571 = vmatpush.bf16.msra.mxu0 %v433
    %572 = vmatpush.bf16.msra.mxu0 %v431
    %573 = vmatpush.bf16.msra.mxu0 %v429
    %574 = vmatmul.bf16.gmra.mxu0 %v120
    %v575 = vpop.f32.mrf.mxu0
    %v576 = vadd.f32 %v557, %v575
    %v577 = vpop.f32.mrf.mxu0
    %v578 = vadd.f32 %v559, %v577
    %579 = vmatmul.bf16.gmra.mxu0 %v124
    %v580 = vpop.f32.mrf.mxu0
    %v581 = vadd.f32 %v562, %v580
    %v582 = vpop.f32.mrf.mxu0
    %v583 = vadd.f32 %v564, %v582
    %584 = vdwg.mxu0
    %585 = vmatpush.bf16.msra.mxu0 %v396
    %586 = vmatpush.bf16.msra.mxu0 %v394
    %587 = vmatpush.bf16.msra.mxu0 %v392
    %588 = vmatpush.bf16.msra.mxu0 %v390
    %589 = vmatpush.bf16.msra.mxu0 %v388
    %590 = vmatpush.bf16.msra.mxu0 %v386
    %591 = vmatpush.bf16.msra.mxu0 %v384
    %592 = vmatpush.bf16.msra.mxu0 %v382
    %593 = vmatmul.bf16.gmra.mxu0 %v117
    %v594 = vpop.f32.mrf.mxu0
    %v595 = vadd.f32 0.0, %v594
    %v596 = vpop.f32.mrf.mxu0
    %v597 = vadd.f32 0.0, %v596
    %598 = vmatmul.bf16.gmra.mxu0 %v121
    %v599 = vpop.f32.mrf.mxu0
    %v600 = vadd.f32 0.0, %v599
    %v601 = vpop.f32.mrf.mxu0
    %v602 = vadd.f32 0.0, %v601
    %603 = vdwg.mxu0
    %604 = vmatpush.bf16.msra.mxu0 %v412
    %605 = vmatpush.bf16.msra.mxu0 %v410
    %606 = vmatpush.bf16.msra.mxu0 %v408
    %607 = vmatpush.bf16.msra.mxu0 %v406
    %608 = vmatpush.bf16.msra.mxu0 %v404
    %609 = vmatpush.bf16.msra.mxu0 %v402
    %610 = vmatpush.bf16.msra.mxu0 %v400
    %611 = vmatpush.bf16.msra.mxu0 %v398
    %612 = vmatmul.bf16.gmra.mxu0 %v118
    %v613 = vpop.f32.mrf.mxu0
    %v614 = vadd.f32 %v595, %v613
    %v615 = vpop.f32.mrf.mxu0
    %v616 = vadd.f32 %v597, %v615
    %617 = vmatmul.bf16.gmra.mxu0 %v122
    %v618 = vpop.f32.mrf.mxu0
    %v619 = vadd.f32 %v600, %v618
    %v620 = vpop.f32.mrf.mxu0
    %v621 = vadd.f32 %v602, %v620
    %622 = vdwg.mxu0
    %623 = vmatpush.bf16.msra.mxu0 %v428
    %624 = vmatpush.bf16.msra.mxu0 %v426
    %625 = vmatpush.bf16.msra.mxu0 %v424
    %626 = vmatpush.bf16.msra.mxu0 %v422
    %627 = vmatpush.bf16.msra.mxu0 %v420
    %628 = vmatpush.bf16.msra.mxu0 %v418
    %629 = vmatpush.bf16.msra.mxu0 %v416
    %630 = vmatpush.bf16.msra.mxu0 %v414
    %631 = vmatmul.bf16.gmra.mxu0 %v119
    %v632 = vpop.f32.mrf.mxu0
    %v633 = vadd.f32 %v614, %v632
    %v634 = vpop.f32.mrf.mxu0
    %v635 = vadd.f32 %v616, %v634
    %636 = vmatmul.bf16.gmra.mxu0 %v123
    %v637 = vpop.f32.mrf.mxu0
    %v638 = vadd.f32 %v619, %v637
    %v639 = vpop.f32.mrf.mxu0
    %v640 = vadd.f32 %v621, %v639
    %641 = vdwg.mxu0
    %642 = vmatpush.bf16.msra.mxu0 %v444
    %643 = vmatpush.bf16.msra.mxu0 %v442
    %644 = vmatpush.bf16.msra.mxu0 %v440
    %645 = vmatpush.bf16.msra.mxu0 %v438
    %646 = vmatpush.bf16.msra.mxu0 %v436
    %647 = vmatpush.bf16.msra.mxu0 %v434
    %648 = vmatpush.bf16.msra.mxu0 %v432
    %649 = vmatpush.bf16.msra.mxu0 %v430
    %650 = vmatmul.bf16.gmra.mxu0 %v120
    %v651 = vpop.f32.mrf.mxu0
    %v652 = vadd.f32 %v633, %v651
    %v653 = vpop.f32.mrf.mxu0
    %v654 = vadd.f32 %v635, %v653
    %655 = vmatmul.bf16.gmra.mxu0 %v124
    %v656 = vpop.f32.mrf.mxu0
    %v657 = vadd.f32 %v638, %v656
    %v658 = vpop.f32.mrf.mxu0
    %v659 = vadd.f32 %v640, %v658
    %660 = vdwg.mxu0
    %v661 = vadd.f32 %v93, %v576
    %v662 = vadd.f32 %v94, %v652
    %v663 = vadd.f32 %v95, %v578
    %v664 = vadd.f32 %v96, %v654
    %v665 = vadd.f32 %v97, %v581
    %v666 = vadd.f32 %v98, %v657
    %v667 = vadd.f32 %v99, %v583
    %v668 = vadd.f32 %v100, %v659
    %669 = vst [vmem:[#allocation2] sm:$0xff] %v661
    %670 = vst [vmem:[#allocation2 + $0x8] sm:$0xff] %v662
    %671 = vst [vmem:[#allocation2 + $0x10] sm:$0xff] %v663
    %672 = vst [vmem:[#allocation2 + $0x18] sm:$0xff] %v664
    %673 = vst [vmem:[#allocation2 + $0x20] sm:$0xff] %v665
    %674 = vst [vmem:[#allocation2 + $0x28] sm:$0xff] %v666
    %675 = vst [vmem:[#allocation2 + $0x30] sm:$0xff] %v667
    %676 = vst [vmem:[#allocation2 + $0x38] sm:$0xff] %v668
    // Predicated region
    $region46: #{flash_roberta_layer.9} parent=1 // pred_check
      %p677 = pneg %p81
    $region47: #{flash_roberta_layer.9} parent=1 // pred_check_branch
      %679 = sbr.rel (%p677) target = $region49
    $region48: #{flash_roberta_layer.9} parent=1 // pred_region
      %v680 = vld [vmem:[#allocation2] sm:$0xff]
      %v681 = vld [vmem:[#allocation2 + $0x8] sm:$0xff]
      %v682 = vld [vmem:[#allocation2 + $0x10] sm:$0xff]
      %v683 = vld [vmem:[#allocation2 + $0x18] sm:$0xff]
      %v684 = vld [vmem:[#allocation2 + $0x20] sm:$0xff]
      %v685 = vld [vmem:[#allocation2 + $0x28] sm:$0xff]
      %v686 = vld [vmem:[#allocation2 + $0x30] sm:$0xff]
      %v687 = vld [vmem:[#allocation2 + $0x38] sm:$0xff]
      %v688 = vld [vmem:[#allocation6] sm:$0x3]
      %v690 = vperm.slane %v688, 0
      %v691 = vperm.slane %v688, 1
      %v694 = vadd.f32 %v680, %v690
      %v695 = vadd.f32 %v681, %v691
      %v696 = vadd.f32 %v682, %v690
      %v697 = vadd.f32 %v683, %v691
      %v698 = vadd.f32 %v684, %v690
      %v699 = vadd.f32 %v685, %v691
      %v700 = vadd.f32 %v686, %v690
      %v701 = vadd.f32 %v687, %v691
      %v702 = vld [vmem:[%s3] sm:$0xff]
      %v703 = vld [vmem:[%s3 + $0x8] sm:$0xff]
      %v704 = vld [vmem:[%s3 + $0x10] sm:$0xff]
      %v705 = vld [vmem:[%s3 + $0x18] sm:$0xff]
      %v706 = vld [vmem:[%s3 + $0x20] sm:$0xff]
      %v707 = vld [vmem:[%s3 + $0x28] sm:$0xff]
      %v708 = vld [vmem:[%s3 + $0x30] sm:$0xff]
      %v709 = vld [vmem:[%s3 + $0x38] sm:$0xff]
      %v710 = vadd.f32 %v694, %v702
      %v711 = vadd.f32 %v695, %v703
      %v712 = vadd.f32 %v696, %v704
      %v713 = vadd.f32 %v697, %v705
      %v714 = vadd.f32 %v698, %v706
      %v715 = vadd.f32 %v699, %v707
      %v716 = vadd.f32 %v700, %v708
      %v717 = vadd.f32 %v701, %v709
      %v718 = vadd.f32 %v710, %v711
      %719 = vadd.xlane.f32.xlu0 %v718
      %v720 = vpop.xlane.xlu0 %719
      %v721 = vadd.f32 %v712, %v713
      %722 = vadd.xlane.f32.xlu0 %v721
      %v723 = vpop.xlane.xlu0 %722
      %v724 = vadd.f32 %v714, %v715
      %725 = vadd.xlane.f32.xlu0 %v724
      %v726 = vpop.xlane.xlu0 %725
      %v727 = vadd.f32 %v716, %v717
      %728 = vadd.xlane.f32.xlu0 %v727
      %v729 = vpop.xlane.xlu0 %728
      %v730 = vrcp.pop 256.0
      %v731 = vmul.f32 256.0, %v730
      %v732 = vsub.f32 1.0, %v731
      %v733 = vmul.f32 %v730, %v732
      %v734 = vadd.f32 %v730, %v733
      %vm735 = vweird.f32 %v730
      %v736 = vsel %vm735, %v730, %v734
      %v737 = vmul.f32 %v720, %v736
      %v738 = vmul.f32 %v723, %v736
      %v739 = vmul.f32 %v726, %v736
      %v740 = vmul.f32 %v729, %v736
      %v741 = vsub.f32 %v710, %v737
      %v742 = vsub.f32 %v711, %v737
      %v743 = vsub.f32 %v712, %v738
      %v744 = vsub.f32 %v713, %v738
      %v745 = vsub.f32 %v714, %v739
      %v746 = vsub.f32 %v715, %v739
      %v747 = vsub.f32 %v716, %v740
      %v748 = vsub.f32 %v717, %v740
      %v749 = vmul.f32 %v741, %v741
      %v750 = vmul.f32 %v742, %v742
      %v751 = vmul.f32 %v743, %v743
      %v752 = vmul.f32 %v744, %v744
      %v753 = vmul.f32 %v745, %v745
      %v754 = vmul.f32 %v746, %v746
      %v755 = vmul.f32 %v747, %v747
      %v756 = vmul.f32 %v748, %v748
      %v757 = vadd.f32 %v749, %v750
      %758 = vadd.xlane.f32.xlu0 %v757
      %v759 = vpop.xlane.xlu0 %758
      %v760 = vadd.f32 %v751, %v752
      %761 = vadd.xlane.f32.xlu0 %v760
      %v762 = vpop.xlane.xlu0 %761
      %v763 = vadd.f32 %v753, %v754
      %764 = vadd.xlane.f32.xlu0 %v763
      %v765 = vpop.xlane.xlu0 %764
      %v766 = vadd.f32 %v755, %v756
      %767 = vadd.xlane.f32.xlu0 %v766
      %v768 = vpop.xlane.xlu0 %767
      %v769 = vmul.f32 %v759, %v736
      %v770 = vmul.f32 %v762, %v736
      %v771 = vmul.f32 %v765, %v736
      %v772 = vmul.f32 %v768, %v736
      %v773 = vadd.f32 %v769, 1e-05
      %v774 = vadd.f32 %v770, 1e-05
      %v775 = vadd.f32 %v771, 1e-05
      %v776 = vadd.f32 %v772, 1e-05
      %v777 = vrsqrt.pop %v773
      %v778 = vmul.f32 %v777, %v773
      %v779 = vmul.f32 %v778, %v777
      %v780 = vmul.f32 0.5, %v779
      %v781 = vsub.f32 1.5, %v780
      %v782 = vmul.f32 %v777, %v781
      %vm783 = vweird.f32 %v773
      %vm784 = vweird.f32 %v777
      %vm785 = vmor %vm783, %vm784
      %v786 = vsel %vm785, %v777, %v782
      %v787 = vrsqrt.pop %v774
      %v788 = vmul.f32 %v787, %v774
      %v789 = vmul.f32 %v788, %v787
      %v790 = vmul.f32 0.5, %v789
      %v791 = vsub.f32 1.5, %v790
      %v792 = vmul.f32 %v787, %v791
      %vm793 = vweird.f32 %v774
      %vm794 = vweird.f32 %v787
      %vm795 = vmor %vm793, %vm794
      %v796 = vsel %vm795, %v787, %v792
      %v797 = vrsqrt.pop %v775
      %v798 = vmul.f32 %v797, %v775
      %v799 = vmul.f32 %v798, %v797
      %v800 = vmul.f32 0.5, %v799
      %v801 = vsub.f32 1.5, %v800
      %v802 = vmul.f32 %v797, %v801
      %vm803 = vweird.f32 %v775
      %vm804 = vweird.f32 %v797
      %vm805 = vmor %vm803, %vm804
      %v806 = vsel %vm805, %v797, %v802
      %v807 = vrsqrt.pop %v776
      %v808 = vmul.f32 %v807, %v776
      %v809 = vmul.f32 %v808, %v807
      %v810 = vmul.f32 0.5, %v809
      %v811 = vsub.f32 1.5, %v810
      %v812 = vmul.f32 %v807, %v811
      %vm813 = vweird.f32 %v776
      %vm814 = vweird.f32 %v807
      %vm815 = vmor %vm813, %vm814
      %v816 = vsel %vm815, %v807, %v812
      %v817 = vmul.f32 %v741, %v786
      %v818 = vmul.f32 %v742, %v786
      %v819 = vmul.f32 %v743, %v796
      %v820 = vmul.f32 %v744, %v796
      %v821 = vmul.f32 %v745, %v806
      %v822 = vmul.f32 %v746, %v806
      %v823 = vmul.f32 %v747, %v816
      %v824 = vmul.f32 %v748, %v816
      %v825 = vld [vmem:[#allocation8] sm:$0x3]
      %v827 = vperm.slane %v825, 0
      %v828 = vperm.slane %v825, 1
      %v831 = vmul.f32 %v817, %v827
      %v832 = vmul.f32 %v818, %v828
      %v833 = vmul.f32 %v819, %v827
      %v834 = vmul.f32 %v820, %v828
      %v835 = vmul.f32 %v821, %v827
      %v836 = vmul.f32 %v822, %v828
      %v837 = vmul.f32 %v823, %v827
      %v838 = vmul.f32 %v824, %v828
      %v839 = vld [vmem:[#allocation9] sm:$0x3]
      %v841 = vperm.slane %v839, 0
      %v842 = vperm.slane %v839, 1
      %v845 = vadd.f32 %v831, %v841
      %v846 = vadd.f32 %v832, %v842
      %v847 = vadd.f32 %v833, %v841
      %v848 = vadd.f32 %v834, %v842
      %v849 = vadd.f32 %v835, %v841
      %v850 = vadd.f32 %v836, %v842
      %v851 = vadd.f32 %v837, %v841
      %v852 = vadd.f32 %v838, %v842
      %853 = vst [vmem:[#allocation11] sm:$0xff] %v845
      %854 = vst [vmem:[#allocation11 + $0x8] sm:$0xff] %v846
      %855 = vst [vmem:[#allocation11 + $0x10] sm:$0xff] %v847
      %856 = vst [vmem:[#allocation11 + $0x18] sm:$0xff] %v848
      %857 = vst [vmem:[#allocation11 + $0x20] sm:$0xff] %v849
      %858 = vst [vmem:[#allocation11 + $0x28] sm:$0xff] %v850
      %859 = vst [vmem:[#allocation11 + $0x30] sm:$0xff] %v851
      %860 = vst [vmem:[#allocation11 + $0x38] sm:$0xff] %v852
    $region49: #{flash_roberta_layer.9} parent=1 // pred_fallthru
      _
    // Predicated region
    $region50: #{flash_roberta_layer.9} parent=1 // pred_check
      _
    $region51: #{flash_roberta_layer.9} parent=1 // pred_check_branch
      %862 = sbr.rel (0) target = $region53
    $region52: #{flash_roberta_layer.9} parent=1 // pred_region
      %864 = vsyncadd [#allocation5], 0
      %s865 = sshll.u32 [#allocation11], 4
      %s866 = int_to_ptr.vmem [resolvable:$true] %s865
      %s867 = sshll.u32 %s6, 4
      %s868 = int_to_ptr.hbm [resolvable:$true] %s867
      %873 = dma.vmem_to_hbm [thread:$0]  %s866, 1024, %s868, [#allocation5], 256, 256, 16
    $region53: #{flash_roberta_layer.9} parent=1 // pred_fallthru
      _
    // Predicated region
    $region54: #{flash_roberta_layer.9} parent=1 // pred_check
      _
    $region55: #{flash_roberta_layer.9} parent=1 // pred_check_branch
      %875 = sbr.rel (0) target = $region57
    $region56: #{flash_roberta_layer.9} parent=1 // pred_region
      %877 = dma.done [#allocation5], 1024
    $region57: #{flash_roberta_layer.9} parent=1 // pred_fallthru
      _
    %878 = vsyncpa [#allocation4], 1
    %879 = vsyncpa [#allocation7], 1
    %880 = vsyncpa [#allocation10], 1
    %881 = vsyncpa [#allocation5], 1

</llo_original>
